<compile_context>
chip_gen: v6e
topology: v6e:2x2x1
jax: 0.10.0
libtpu: 0.0.40
codegen_flags: <defaults>
</compile_context>

<pallas_src>
import functools
from typing import NamedTuple

import numpy as np
import jax
import jax.numpy as jnp
from jax.experimental import pallas as pl
from jax.experimental.pallas import tpu as pltpu

_LANE = 128
_SUBLANE = 8


def _round_up(n, m):
    return ((n + m - 1) // m) * m


class _TpuGen(NamedTuple):
    vmem_budget: int      # scoped-VMEM budget handed to the compiler
    mxu_256: bool         # 256x256 MXU (v6e/v7x) vs 128x128 (v5e and older)
    multi_core: bool      # >1 TensorCore per chip -> want >= 2 parallel grid steps
    default_tile_b: int


def _tpu_generation() -> _TpuGen:
    try:
        kind = jax.devices()[0].device_kind.lower()
    except Exception:                      # no device info at trace time
        kind = ""
    if "v7" in kind:
        return _TpuGen(56 << 20, True, True, 256)      # 64 MiB VMEM/TC, 2 TC/chip
    if "v6" in kind:
        return _TpuGen(104 << 20, True, False, 512)    # 128 MiB VMEM, 1 TC
    if "v5p" in kind:
        return _TpuGen(104 << 20, False, True, 512)
    if "v5" in kind:                                   # v5e / v5 lite
        return _TpuGen(104 << 20, False, False, 512)
    if "v4" in kind:
        return _TpuGen(104 << 20, False, True, 512)
    if "v3" in kind or "v2" in kind:
        return _TpuGen(12 << 20, False, True, 256)
    return _TpuGen(48 << 20, True, True, 256)          # unknown: conservative


# --------------------------------------------------------------------------- #
# Kernels
# --------------------------------------------------------------------------- #
def _resident_kernel(num_layers, compute_dtype,
                     x_ref, wi_ref, bi_ref,
                     w1_ref, b1_ref, w2_ref, b2_ref,
                     bno_s_ref, bno_b_ref, wo_ref, bo_ref,
                     out_ref):
    """All weights VMEM-resident; 1-D batch grid; layer loop unrolled in-kernel."""
    h = jnp.dot(x_ref[...].astype(compute_dtype), wi_ref[...],
                preferred_element_type=jnp.float32) + bi_ref[...]
    for l in range(num_layers):
        # Hidden block = dot -> ReLU -> dot -> residual (BN folded into W1/b1,
        # Dropout is identity in eval mode).
        y = jnp.dot(h.astype(compute_dtype), w1_ref[l],
                    preferred_element_type=jnp.float32) + b1_ref[l]
        y = jnp.maximum(y, 0.0)
        y = jnp.dot(y.astype(compute_dtype), w2_ref[l],
                    preferred_element_type=jnp.float32) + b2_ref[l]
        h = h + y
    z = jnp.maximum(h * bno_s_ref[...] + bno_b_ref[...], 0.0)
    out_ref[...] = (jnp.dot(z.astype(compute_dtype), wo_ref[...],
                            preferred_element_type=jnp.float32)
                    + bo_ref[...]).astype(out_ref.dtype)


def _streamed_kernel(num_layers, compute_dtype,
                     x_ref, wi_ref, bi_ref,
                     w1_ref, b1_ref, w2_ref, b2_ref,
                     bno_s_ref, bno_b_ref, wo_ref, bo_ref,
                     out_ref, h_ref):
    """Per-layer weight streaming: grid=(batch_tiles, L), h carried in VMEM scratch."""
    l = pl.program_id(1)

    @pl.when(l == 0)
    def _():
        h_ref[...] = (jnp.dot(x_ref[...].astype(compute_dtype), wi_ref[...],
                              preferred_element_type=jnp.float32) + bi_ref[...])

    h = h_ref[...]
    y = jnp.dot(h.astype(compute_dtype), w1_ref[0],
                preferred_element_type=jnp.float32) + b1_ref[0]
    y = jnp.maximum(y, 0.0)
    y = jnp.dot(y.astype(compute_dtype), w2_ref[0],
                preferred_element_type=jnp.float32) + b2_ref[0]
    h_ref[...] = h + y

    @pl.when(l == num_layers - 1)
    def _():
        z = jnp.maximum(h_ref[...] * bno_s_ref[...] + bno_b_ref[...], 0.0)
        out_ref[...] = (jnp.dot(z.astype(compute_dtype), wo_ref[...],
                                preferred_element_type=jnp.float32)
                        + bo_ref[...]).astype(out_ref.dtype)


# --------------------------------------------------------------------------- #
# Wrapper
# --------------------------------------------------------------------------- #
def resnet_forward(x, params, *, tile_b=None, weights_dtype=jnp.bfloat16,
                   force_stream=False):
    """Fused ResNet forward.  x: (B, input_size) float32."""
    B, Din = x.shape
    H = params["wi"].shape[1]
    Dout = params["wo"].shape[1]
    L = params["w1"].shape[0]
    assert L >= 1, "at least one hidden block is required"
    f32 = jnp.float32
    gen = _tpu_generation()

    wbytes = np.dtype(weights_dtype).itemsize
    cast_inputs = (wbytes < 4)
    act_dtype = weights_dtype if cast_inputs else f32
    xbytes = np.dtype(act_dtype).itemsize

    # ---- lane padding: 256-multiples for H/Dout only on 256-wide MXUs & dims>128
    hid_mult = 256 if (gen.mxu_256 and H > _LANE) else _LANE
    out_mult = 256 if (gen.mxu_256 and Dout > _LANE) else _LANE
    Din_p = _round_up(Din, _LANE)
    Hp = _round_up(H, hid_mult)
    Dout_p = _round_up(Dout, out_mult)

    # ---- batch tile: generation default, clamped; >=2 grid steps on multi-TC chips
    if tile_b is None:
        tile_b = gen.default_tile_b
    tile_b = max(_SUBLANE, min(int(tile_b), _round_up(B, _SUBLANE)))
    tile_b = _round_up(tile_b, _SUBLANE)
    if gen.multi_core and B > _SUBLANE:
        tile_b = min(tile_b, _round_up(pl.cdiv(B, 2), _SUBLANE))

    # ---- VMEM footprint models (conservative: 2 pipeline buffers per operand,
    #      plus the live (tile_b, Hp) intermediates of the in-kernel layer loop)
    def resident_bytes(tb):
        weights = (Din_p * Hp + 2 * L * Hp * Hp + Hp * Dout_p) * wbytes
        vectors = (Hp * (2 * L + 3) + Dout_p) * 4
        resident = 2 * (weights + vectors)
        io = 2 * tb * (Din_p * xbytes + Dout_p * 4)
        live = tb * Hp * (3 * 4 + 2 * wbytes)
        return resident + io + live

    def streamed_bytes(tb):
        layer = 2 * 2 * (Hp * Hp * wbytes + Hp * 4)           # w1+w2 (+biases) x2 buffers
        const = 2 * ((Din_p * Hp + Hp * Dout_p) * wbytes + (3 * Hp + Dout_p) * 4)
        io = 2 * tb * (Din_p * xbytes + Dout_p * 4)
        live = tb * Hp * (4 * 4 + 2 * wbytes)                 # h scratch + temporaries
        return layer + const + io + live

    use_streamed = force_stream or (resident_bytes(tile_b) > gen.vmem_budget)
    if use_streamed:
        while tile_b > _SUBLANE and streamed_bytes(tile_b) > gen.vmem_budget:
            tile_b = _round_up(tile_b // 2, _SUBLANE)
    Bp = _round_up(B, tile_b)

    # ---- fold eval-mode BatchNorm ----
    eps = 1e-5
    bn_scale = params["bn_gamma"] / jnp.sqrt(params["bn_var"] + eps)         # (L,H)
    bn_shift = params["bn_beta"] - params["bn_mean"] * bn_scale              # (L,H)
    # (h*s + t) @ W1 + b1 == h @ (s[:,None]*W1) + (t @ W1 + b1)
    w1_f = params["w1"] * bn_scale[:, :, None]                               # (L,H,H)
    b1_f = params["b1"] + jnp.einsum("lh,lho->lo", bn_shift, params["w1"])   # (L,H)
    # Output-path BN cannot be folded (ReLU sits between BN and the Linear).
    bno_scale = params["bno_gamma"] / jnp.sqrt(params["bno_var"] + eps)
    bno_shift = params["bno_beta"] - params["bno_mean"] * bno_scale

    def pad2(a, r, c):   # zero-pad last two dims to (r, c)
        return jnp.pad(a, [(0, 0)] * (a.ndim - 2)
                       + [(0, r - a.shape[-2]), (0, c - a.shape[-1])])

    def pad_last(a, c):  # zero-pad last dim to c
        return jnp.pad(a, [(0, 0)] * (a.ndim - 1) + [(0, c - a.shape[-1])])

    # Zero padding is semantics-preserving: padded hidden features stay exactly 0
    # through every Linear/ReLU/BN/residual step; padded batch rows and output
    # columns are sliced off at the end.
    args = dict(
        x=pad2(x.astype(act_dtype), Bp, Din_p),
        wi=pad2(params["wi"].astype(weights_dtype), Din_p, Hp),
        bi=pad_last(params["bi"].astype(f32)[None, :], Hp),
        w1=pad2(w1_f.astype(weights_dtype), Hp, Hp),
        b1=pad_last(b1_f.astype(f32)[:, None, :], Hp),
        w2=pad2(params["w2"].astype(weights_dtype), Hp, Hp),
        b2=pad_last(params["b2"].astype(f32)[:, None, :], Hp),
        bno_s=pad_last(bno_scale.astype(f32)[None, :], Hp),
        bno_b=pad_last(bno_shift.astype(f32)[None, :], Hp),
        wo=pad2(params["wo"].astype(weights_dtype), Hp, Dout_p),
        bo=pad_last(params["bo"].astype(f32)[None, :], Dout_p),
    )
    order = ("wi", "bi", "w1", "b1", "w2", "b2", "bno_s", "bno_b", "wo", "bo")

    # ---- weight-resident path (1-D batch grid) ----
    def build_resident(single_buffer_weights):
        def const_spec(shape):
            nd = len(shape)
            idx = lambda i, _nd=nd: (0,) * _nd
            if single_buffer_weights:
                # Grid-invariant operand: single VMEM buffer (no ping-pong).
                return pl.BlockSpec(shape, idx, pipeline_mode=pl.Buffered(1))
            return pl.BlockSpec(shape, idx)

        in_specs = [pl.BlockSpec((tile_b, Din_p), lambda i: (i, 0))]
        in_specs += [const_spec(args[k].shape) for k in order]
        kernel = functools.partial(_resident_kernel, L, weights_dtype)
        return pl.pallas_call(
            kernel,
            out_shape=jax.ShapeDtypeStruct((Bp, Dout_p), jnp.float32),
            grid_spec=pltpu.PrefetchScalarGridSpec(
                num_scalar_prefetch=0,
                grid=(Bp // tile_b,),
                in_specs=in_specs,
                out_specs=pl.BlockSpec((tile_b, Dout_p), lambda i: (i, 0)),
            ),
            compiler_params=pltpu.CompilerParams(
                dimension_semantics=("parallel",),
                vmem_limit_bytes=int(gen.vmem_budget),
            ),
        )(args["x"], *(args[k] for k in order))

    # ---- per-layer streaming path (2-D grid: batch tiles x layers) ----
    def build_streamed():
        def const_spec(shape):
            nd = len(shape)
            return pl.BlockSpec(shape, lambda i, l, _nd=nd: (0,) * _nd)

        in_specs = [
            pl.BlockSpec((tile_b, Din_p), lambda i, l: (i, 0)),      # x
            const_spec(args["wi"].shape),
            const_spec(args["bi"].shape),
            pl.BlockSpec((1, Hp, Hp), lambda i, l: (l, 0, 0)),       # w1[l]
            pl.BlockSpec((1, 1, Hp), lambda i, l: (l, 0, 0)),        # b1[l]
            pl.BlockSpec((1, Hp, Hp), lambda i, l: (l, 0, 0)),       # w2[l]
            pl.BlockSpec((1, 1, Hp), lambda i, l: (l, 0, 0)),        # b2[l]
            const_spec(args["bno_s"].shape),
            const_spec(args["bno_b"].shape),
            const_spec(args["wo"].shape),
            const_spec(args["bo"].shape),
        ]
        kernel = functools.partial(_streamed_kernel, L, weights_dtype)
        return pl.pallas_call(
            kernel,
            out_shape=jax.ShapeDtypeStruct((Bp, Dout_p), jnp.float32),
            grid_spec=pltpu.PrefetchScalarGridSpec(
                num_scalar_prefetch=0,
                grid=(Bp // tile_b, L),
                in_specs=in_specs,
                out_specs=pl.BlockSpec((tile_b, Dout_p), lambda i, l: (i, 0)),
                scratch_shapes=[pltpu.VMEM((tile_b, Hp), jnp.float32)],
            ),
            compiler_params=pltpu.CompilerParams(
                dimension_semantics=("parallel", "arbitrary"),
                vmem_limit_bytes=int(gen.vmem_budget),
            ),
        )(args["x"], *(args[k] for k in order))

    if use_streamed:
        out = build_streamed()
    else:
        try:
            out = build_resident(True)
        except Exception:
            # pipeline_mode=pl.Buffered(1) may be unsupported at the pallas_call
            # level on some builds.  Retry with default double-buffered weights —
            # the resident/streamed decision above already budgeted 2 buffers per
            # weight operand, so this cannot silently exceed the VMEM budget.  If
            # the plain build fails too, the failure is genuine and re-raised.
            out = build_resident(False)

    return out[:B, :Dout]


# --------------------------------------------------------------------------- #
# Parameters + reference
# --------------------------------------------------------------------------- #
def init_params(key, input_size, output_size, num_hidden_layers, hidden_size):
    """Deterministic synthetic parameter init (shapes follow the nn.Module)."""
    ks = jax.random.split(key, 12)
    H, L = hidden_size, num_hidden_layers
    s = 0.1
    return dict(
        wi=s * jax.random.normal(ks[0], (input_size, H), jnp.float32),
        bi=s * jax.random.normal(ks[1], (H,), jnp.float32),
        bn_gamma=1.0 + 0.05 * jax.random.normal(ks[2], (L, H), jnp.float32),
        bn_beta=0.05 * jax.random.normal(ks[3], (L, H), jnp.float32),
        bn_mean=0.05 * jax.random.normal(ks[4], (L, H), jnp.float32),
        bn_var=jnp.abs(1.0 + 0.05 * jax.random.normal(ks[5], (L, H), jnp.float32)),
        w1=s * jax.random.normal(ks[6], (L, H, H), jnp.float32),
        b1=s * jax.random.normal(ks[7], (L, H), jnp.float32),
        w2=s * jax.random.normal(ks[8], (L, H, H), jnp.float32),
        b2=s * jax.random.normal(ks[9], (L, H), jnp.float32),
        bno_gamma=jnp.ones((H,), jnp.float32),
        bno_beta=jnp.zeros((H,), jnp.float32),
        bno_mean=jnp.zeros((H,), jnp.float32),
        bno_var=jnp.ones((H,), jnp.float32),
        wo=s * jax.random.normal(ks[10], (H, output_size), jnp.float32),
        bo=s * jax.random.normal(ks[11], (output_size,), jnp.float32),
    )


def _reference(x, params):
    """Plain-JAX f32 reference (mirrors the PyTorch module in eval mode)."""
    eps = 1e-5
    h = x @ params["wi"] + params["bi"]
    L = params["w1"].shape[0]
    for l in range(L):
        scale = params["bn_gamma"][l] / jnp.sqrt(params["bn_var"][l] + eps)
        shift = params["bn_beta"][l] - params["bn_mean"][l] * scale
        y = h * scale + shift
        y = jnp.maximum(y @ params["w1"][l] + params["b1"][l], 0.0)
        y = y @ params["w2"][l] + params["b2"][l]
        h = h + y
    scale = params["bno_gamma"] / jnp.sqrt(params["bno_var"] + eps)
    shift = params["bno_beta"] - params["bno_mean"] * scale
    z = jnp.maximum(h * scale + shift, 0.0)
    return z @ params["wo"] + params["bo"]


if __name__ == "__main__":
    input_size, output_size = 16, 8
    num_hidden_layers, hidden_size = 3, 32
    batch = 16

    key = jax.random.PRNGKey(0)
    kx, kp = jax.random.split(key)
    x = jax.random.normal(kx, (batch, input_size), jnp.float32)
    params = init_params(kp, input_size, output_size, num_hidden_layers, hidden_size)

    ref = _reference(x, params)

    # 1) f32 weights, weight-resident path: tight check vs the plain-JAX reference.
    out_f32 = jax.block_until_ready(
        resnet_forward(x, params, weights_dtype=jnp.float32))
    assert out_f32.shape == (batch, output_size)
    assert jnp.allclose(out_f32, ref, atol=1e-4, rtol=1e-4), "f32 resident mismatch"

    # 2) f32 weights, forced per-layer streaming path (the v7x large-model fallback).
    out_stream = jax.block_until_ready(
        resnet_forward(x, params, tile_b=8, weights_dtype=jnp.float32,
                       force_stream=True))
    assert out_stream.shape == (batch, output_size)
    assert jnp.allclose(out_stream, ref, atol=1e-4, rtol=1e-4), "streamed mismatch"

    # 3) bf16 weights + bf16 input DMA + multi-step batch grid (optimized config);
    #    tolerance scaled for bf16 MXU inputs with f32 accumulation.
    out_bf16 = jax.block_until_ready(
        resnet_forward(x, params, tile_b=8, weights_dtype=jnp.bfloat16))
    assert out_bf16.shape == (batch, output_size)
    assert jnp.allclose(out_bf16, ref, atol=3e-2, rtol=3e-2), "bf16 mismatch"

    print("KERNEL_OK")
</pallas_src>

<mosaic_0001>
module attributes {stable_mosaic.version = 11 : i64} {
  func.func @_resident_kernel(%arg0: i32, %arg1: memref<8x128xf32, #tpu.memory_space<vmem>>, %arg2: memref<128x128xf32, #tpu.memory_space<vmem>>, %arg3: memref<1x128xf32, #tpu.memory_space<vmem>>, %arg4: memref<3x128x128xf32, #tpu.memory_space<vmem>>, %arg5: memref<3x1x128xf32, #tpu.memory_space<vmem>>, %arg6: memref<3x128x128xf32, #tpu.memory_space<vmem>>, %arg7: memref<3x1x128xf32, #tpu.memory_space<vmem>>, %arg8: memref<1x128xf32, #tpu.memory_space<vmem>>, %arg9: memref<1x128xf32, #tpu.memory_space<vmem>>, %arg10: memref<128x128xf32, #tpu.memory_space<vmem>>, %arg11: memref<1x128xf32, #tpu.memory_space<vmem>>, %arg12: memref<8x128xf32, #tpu.memory_space<vmem>>) attributes {dimension_semantics = [#tpu.dimension_semantics<parallel>], iteration_bounds = array<i64: 2>, scalar_prefetch = 0 : i64, scratch_operands = 0 : i64, tpu.core_type = #tpu.core_type<tc>, window_params = [{transform_indices = @transform_0, window_bounds = array<i64: 8, 128>}, {pipeline_mode = #tpu.pipeline_mode<synchronous>, transform_indices = @transform_1, window_bounds = array<i64: 128, 128>}, {pipeline_mode = #tpu.pipeline_mode<synchronous>, transform_indices = @transform_2, window_bounds = array<i64: 1, 128>}, {pipeline_mode = #tpu.pipeline_mode<synchronous>, transform_indices = @transform_3, window_bounds = array<i64: 3, 128, 128>}, {pipeline_mode = #tpu.pipeline_mode<synchronous>, transform_indices = @transform_4, window_bounds = array<i64: 3, 1, 128>}, {pipeline_mode = #tpu.pipeline_mode<synchronous>, transform_indices = @transform_5, window_bounds = array<i64: 3, 128, 128>}, {pipeline_mode = #tpu.pipeline_mode<synchronous>, transform_indices = @transform_6, window_bounds = array<i64: 3, 1, 128>}, {pipeline_mode = #tpu.pipeline_mode<synchronous>, transform_indices = @transform_7, window_bounds = array<i64: 1, 128>}, {pipeline_mode = #tpu.pipeline_mode<synchronous>, transform_indices = @transform_8, window_bounds = array<i64: 1, 128>}, {pipeline_mode = #tpu.pipeline_mode<synchronous>, transform_indices = @transform_9, window_bounds = array<i64: 128, 128>}, {pipeline_mode = #tpu.pipeline_mode<synchronous>, transform_indices = @transform_10, window_bounds = array<i64: 1, 128>}, {transform_indices = @transform_11, window_bounds = array<i64: 8, 128>}]} {
    %c0 = arith.constant 0 : index
    %c0_0 = arith.constant 0 : index
    %0 = vector.load %arg1[%c0, %c0_0] : memref<8x128xf32, #tpu.memory_space<vmem>>, vector<8x128xf32>
    %c0_1 = arith.constant 0 : index
    %c0_2 = arith.constant 0 : index
    %1 = vector.load %arg2[%c0_1, %c0_2] : memref<128x128xf32, #tpu.memory_space<vmem>>, vector<128x128xf32>
    %cst = arith.constant dense<0.000000e+00> : vector<8x128xf32>
    %2 = tpu.matmul %0, %1, %cst {dimension_numbers = #tpu.dot_dimension_numbers<[1], [0], [0], [1], [0, 0, 1, 1], [], []>} : vector<8x128xf32>, vector<128x128xf32>, vector<8x128xf32> -> vector<8x128xf32>
    %c0_3 = arith.constant 0 : index
    %c0_4 = arith.constant 0 : index
    %3 = vector.load %arg3[%c0_3, %c0_4] : memref<1x128xf32, #tpu.memory_space<vmem>>, vector<1x128xf32>
    %4 = vector.broadcast %3 : vector<1x128xf32> to vector<8x128xf32>
    %5 = arith.addf %2, %4 : vector<8x128xf32>
    %c0_5 = arith.constant 0 : index
    %c0_6 = arith.constant 0 : index
    %c0_7 = arith.constant 0 : index
    %6 = vector.load %arg4[%c0_5, %c0_6, %c0_7] : memref<3x128x128xf32, #tpu.memory_space<vmem>>, vector<1x128x128xf32>
    %7 = vector.shape_cast %6 : vector<1x128x128xf32> to vector<128x128xf32>
    %cst_8 = arith.constant dense<0.000000e+00> : vector<8x128xf32>
    %8 = tpu.matmul %5, %7, %cst_8 {dimension_numbers = #tpu.dot_dimension_numbers<[1], [0], [0], [1], [0, 0, 1, 1], [], []>} : vector<8x128xf32>, vector<128x128xf32>, vector<8x128xf32> -> vector<8x128xf32>
    %c0_9 = arith.constant 0 : index
    %c0_10 = arith.constant 0 : index
    %c0_11 = arith.constant 0 : index
    %9 = vector.load %arg5[%c0_9, %c0_10, %c0_11] : memref<3x1x128xf32, #tpu.memory_space<vmem>>, vector<1x1x128xf32>
    %10 = vector.shape_cast %9 : vector<1x1x128xf32> to vector<1x128xf32>
    %11 = vector.broadcast %10 : vector<1x128xf32> to vector<8x128xf32>
    %12 = arith.addf %8, %11 : vector<8x128xf32>
    %cst_12 = arith.constant 0.000000e+00 : f32
    %13 = vector.broadcast %cst_12 : f32 to vector<8x128xf32>
    %14 = arith.maximumf %12, %13 : vector<8x128xf32>
    %c0_13 = arith.constant 0 : index
    %c0_14 = arith.constant 0 : index
    %c0_15 = arith.constant 0 : index
    %15 = vector.load %arg6[%c0_13, %c0_14, %c0_15] : memref<3x128x128xf32, #tpu.memory_space<vmem>>, vector<1x128x128xf32>
    %16 = vector.shape_cast %15 : vector<1x128x128xf32> to vector<128x128xf32>
    %cst_16 = arith.constant dense<0.000000e+00> : vector<8x128xf32>
    %17 = tpu.matmul %14, %16, %cst_16 {dimension_numbers = #tpu.dot_dimension_numbers<[1], [0], [0], [1], [0, 0, 1, 1], [], []>} : vector<8x128xf32>, vector<128x128xf32>, vector<8x128xf32> -> vector<8x128xf32>
    %c0_17 = arith.constant 0 : index
    %c0_18 = arith.constant 0 : index
    %c0_19 = arith.constant 0 : index
    %18 = vector.load %arg7[%c0_17, %c0_18, %c0_19] : memref<3x1x128xf32, #tpu.memory_space<vmem>>, vector<1x1x128xf32>
    %19 = vector.shape_cast %18 : vector<1x1x128xf32> to vector<1x128xf32>
    %20 = vector.broadcast %19 : vector<1x128xf32> to vector<8x128xf32>
    %21 = arith.addf %17, %20 : vector<8x128xf32>
    %22 = arith.addf %5, %21 : vector<8x128xf32>
    %c1 = arith.constant 1 : index
    %c0_20 = arith.constant 0 : index
    %c0_21 = arith.constant 0 : index
    %23 = vector.load %arg4[%c1, %c0_20, %c0_21] : memref<3x128x128xf32, #tpu.memory_space<vmem>>, vector<1x128x128xf32>
    %24 = vector.shape_cast %23 : vector<1x128x128xf32> to vector<128x128xf32>
    %cst_22 = arith.constant dense<0.000000e+00> : vector<8x128xf32>
    %25 = tpu.matmul %22, %24, %cst_22 {dimension_numbers = #tpu.dot_dimension_numbers<[1], [0], [0], [1], [0, 0, 1, 1], [], []>} : vector<8x128xf32>, vector<128x128xf32>, vector<8x128xf32> -> vector<8x128xf32>
    %c1_23 = arith.constant 1 : index
    %c0_24 = arith.constant 0 : index
    %c0_25 = arith.constant 0 : index
    %26 = vector.load %arg5[%c1_23, %c0_24, %c0_25] : memref<3x1x128xf32, #tpu.memory_space<vmem>>, vector<1x1x128xf32>
    %27 = vector.shape_cast %26 : vector<1x1x128xf32> to vector<1x128xf32>
    %28 = vector.broadcast %27 : vector<1x128xf32> to vector<8x128xf32>
    %29 = arith.addf %25, %28 : vector<8x128xf32>
    %cst_26 = arith.constant 0.000000e+00 : f32
    %30 = vector.broadcast %cst_26 : f32 to vector<8x128xf32>
    %31 = arith.maximumf %29, %30 : vector<8x128xf32>
    %c1_27 = arith.constant 1 : index
    %c0_28 = arith.constant 0 : index
    %c0_29 = arith.constant 0 : index
    %32 = vector.load %arg6[%c1_27, %c0_28, %c0_29] : memref<3x128x128xf32, #tpu.memory_space<vmem>>, vector<1x128x128xf32>
    %33 = vector.shape_cast %32 : vector<1x128x128xf32> to vector<128x128xf32>
    %cst_30 = arith.constant dense<0.000000e+00> : vector<8x128xf32>
    %34 = tpu.matmul %31, %33, %cst_30 {dimension_numbers = #tpu.dot_dimension_numbers<[1], [0], [0], [1], [0, 0, 1, 1], [], []>} : vector<8x128xf32>, vector<128x128xf32>, vector<8x128xf32> -> vector<8x128xf32>
    %c1_31 = arith.constant 1 : index
    %c0_32 = arith.constant 0 : index
    %c0_33 = arith.constant 0 : index
    %35 = vector.load %arg7[%c1_31, %c0_32, %c0_33] : memref<3x1x128xf32, #tpu.memory_space<vmem>>, vector<1x1x128xf32>
    %36 = vector.shape_cast %35 : vector<1x1x128xf32> to vector<1x128xf32>
    %37 = vector.broadcast %36 : vector<1x128xf32> to vector<8x128xf32>
    %38 = arith.addf %34, %37 : vector<8x128xf32>
    %39 = arith.addf %22, %38 : vector<8x128xf32>
    %c2 = arith.constant 2 : index
    %c0_34 = arith.constant 0 : index
    %c0_35 = arith.constant 0 : index
    %40 = vector.load %arg4[%c2, %c0_34, %c0_35] : memref<3x128x128xf32, #tpu.memory_space<vmem>>, vector<1x128x128xf32>
    %41 = vector.shape_cast %40 : vector<1x128x128xf32> to vector<128x128xf32>
    %cst_36 = arith.constant dense<0.000000e+00> : vector<8x128xf32>
    %42 = tpu.matmul %39, %41, %cst_36 {dimension_numbers = #tpu.dot_dimension_numbers<[1], [0], [0], [1], [0, 0, 1, 1], [], []>} : vector<8x128xf32>, vector<128x128xf32>, vector<8x128xf32> -> vector<8x128xf32>
    %c2_37 = arith.constant 2 : index
    %c0_38 = arith.constant 0 : index
    %c0_39 = arith.constant 0 : index
    %43 = vector.load %arg5[%c2_37, %c0_38, %c0_39] : memref<3x1x128xf32, #tpu.memory_space<vmem>>, vector<1x1x128xf32>
    %44 = vector.shape_cast %43 : vector<1x1x128xf32> to vector<1x128xf32>
    %45 = vector.broadcast %44 : vector<1x128xf32> to vector<8x128xf32>
    %46 = arith.addf %42, %45 : vector<8x128xf32>
    %cst_40 = arith.constant 0.000000e+00 : f32
    %47 = vector.broadcast %cst_40 : f32 to vector<8x128xf32>
    %48 = arith.maximumf %46, %47 : vector<8x128xf32>
    %c2_41 = arith.constant 2 : index
    %c0_42 = arith.constant 0 : index
    %c0_43 = arith.constant 0 : index
    %49 = vector.load %arg6[%c2_41, %c0_42, %c0_43] : memref<3x128x128xf32, #tpu.memory_space<vmem>>, vector<1x128x128xf32>
    %50 = vector.shape_cast %49 : vector<1x128x128xf32> to vector<128x128xf32>
    %cst_44 = arith.constant dense<0.000000e+00> : vector<8x128xf32>
    %51 = tpu.matmul %48, %50, %cst_44 {dimension_numbers = #tpu.dot_dimension_numbers<[1], [0], [0], [1], [0, 0, 1, 1], [], []>} : vector<8x128xf32>, vector<128x128xf32>, vector<8x128xf32> -> vector<8x128xf32>
    %c2_45 = arith.constant 2 : index
    %c0_46 = arith.constant 0 : index
    %c0_47 = arith.constant 0 : index
    %52 = vector.load %arg7[%c2_45, %c0_46, %c0_47] : memref<3x1x128xf32, #tpu.memory_space<vmem>>, vector<1x1x128xf32>
    %53 = vector.shape_cast %52 : vector<1x1x128xf32> to vector<1x128xf32>
    %54 = vector.broadcast %53 : vector<1x128xf32> to vector<8x128xf32>
    %55 = arith.addf %51, %54 : vector<8x128xf32>
    %56 = arith.addf %39, %55 : vector<8x128xf32>
    %c0_48 = arith.constant 0 : index
    %c0_49 = arith.constant 0 : index
    %57 = vector.load %arg8[%c0_48, %c0_49] : memref<1x128xf32, #tpu.memory_space<vmem>>, vector<1x128xf32>
    %58 = vector.broadcast %57 : vector<1x128xf32> to vector<8x128xf32>
    %59 = arith.mulf %56, %58 : vector<8x128xf32>
    %c0_50 = arith.constant 0 : index
    %c0_51 = arith.constant 0 : index
    %60 = vector.load %arg9[%c0_50, %c0_51] : memref<1x128xf32, #tpu.memory_space<vmem>>, vector<1x128xf32>
    %61 = vector.broadcast %60 : vector<1x128xf32> to vector<8x128xf32>
    %62 = arith.addf %59, %61 : vector<8x128xf32>
    %cst_52 = arith.constant 0.000000e+00 : f32
    %63 = vector.broadcast %cst_52 : f32 to vector<8x128xf32>
    %64 = arith.maximumf %62, %63 : vector<8x128xf32>
    %c0_53 = arith.constant 0 : index
    %c0_54 = arith.constant 0 : index
    %65 = vector.load %arg10[%c0_53, %c0_54] : memref<128x128xf32, #tpu.memory_space<vmem>>, vector<128x128xf32>
    %cst_55 = arith.constant dense<0.000000e+00> : vector<8x128xf32>
    %66 = tpu.matmul %64, %65, %cst_55 {dimension_numbers = #tpu.dot_dimension_numbers<[1], [0], [0], [1], [0, 0, 1, 1], [], []>} : vector<8x128xf32>, vector<128x128xf32>, vector<8x128xf32> -> vector<8x128xf32>
    %c0_56 = arith.constant 0 : index
    %c0_57 = arith.constant 0 : index
    %67 = vector.load %arg11[%c0_56, %c0_57] : memref<1x128xf32, #tpu.memory_space<vmem>>, vector<1x128xf32>
    %68 = vector.broadcast %67 : vector<1x128xf32> to vector<8x128xf32>
    %69 = arith.addf %66, %68 : vector<8x128xf32>
    %c0_58 = arith.constant 0 : index
    %c0_59 = arith.constant 0 : index
    %70 = vector.load %arg12[%c0_58, %c0_59] : memref<8x128xf32, #tpu.memory_space<vmem>>, vector<8x128xf32>
    tpu.vector_store %arg12[%c0_58, %c0_59], %69 {strides = array<i32>} : memref<8x128xf32, #tpu.memory_space<vmem>>, vector<8x128xf32>,
    return
  }
  func.func @transform_0(%arg0: i32) -> (i32, i32) {
    %c0_i32 = arith.constant 0 : i32
    %c0_i32_0 = arith.constant 0 : i32
    return %arg0, %c0_i32 : i32, i32
  }
  func.func @transform_1(%arg0: i32) -> (i32, i32) {
    %c0_i32 = arith.constant 0 : i32
    %c0_i32_0 = arith.constant 0 : i32
    %c0_i32_1 = arith.constant 0 : i32
    return %c0_i32, %c0_i32_0 : i32, i32
  }
  func.func @transform_2(%arg0: i32) -> (i32, i32) {
    %c0_i32 = arith.constant 0 : i32
    %c0_i32_0 = arith.constant 0 : i32
    %c0_i32_1 = arith.constant 0 : i32
    return %c0_i32, %c0_i32_0 : i32, i32
  }
  func.func @transform_3(%arg0: i32) -> (i32, i32, i32) {
    %c0_i32 = arith.constant 0 : i32
    %c0_i32_0 = arith.constant 0 : i32
    %c0_i32_1 = arith.constant 0 : i32
    %c0_i32_2 = arith.constant 0 : i32
    return %c0_i32, %c0_i32_0, %c0_i32_1 : i32, i32, i32
  }
  func.func @transform_4(%arg0: i32) -> (i32, i32, i32) {
    %c0_i32 = arith.constant 0 : i32
    %c0_i32_0 = arith.constant 0 : i32
    %c0_i32_1 = arith.constant 0 : i32
    %c0_i32_2 = arith.constant 0 : i32
    return %c0_i32, %c0_i32_0, %c0_i32_1 : i32, i32, i32
  }
  func.func @transform_5(%arg0: i32) -> (i32, i32, i32) {
    %c0_i32 = arith.constant 0 : i32
    %c0_i32_0 = arith.constant 0 : i32
    %c0_i32_1 = arith.constant 0 : i32
    %c0_i32_2 = arith.constant 0 : i32
    return %c0_i32, %c0_i32_0, %c0_i32_1 : i32, i32, i32
  }
  func.func @transform_6(%arg0: i32) -> (i32, i32, i32) {
    %c0_i32 = arith.constant 0 : i32
    %c0_i32_0 = arith.constant 0 : i32
    %c0_i32_1 = arith.constant 0 : i32
    %c0_i32_2 = arith.constant 0 : i32
    return %c0_i32, %c0_i32_0, %c0_i32_1 : i32, i32, i32
  }
  func.func @transform_7(%arg0: i32) -> (i32, i32) {
    %c0_i32 = arith.constant 0 : i32
    %c0_i32_0 = arith.constant 0 : i32
    %c0_i32_1 = arith.constant 0 : i32
    return %c0_i32, %c0_i32_0 : i32, i32
  }
  func.func @transform_8(%arg0: i32) -> (i32, i32) {
    %c0_i32 = arith.constant 0 : i32
    %c0_i32_0 = arith.constant 0 : i32
    %c0_i32_1 = arith.constant 0 : i32
    return %c0_i32, %c0_i32_0 : i32, i32
  }
  func.func @transform_9(%arg0: i32) -> (i32, i32) {
    %c0_i32 = arith.constant 0 : i32
    %c0_i32_0 = arith.constant 0 : i32
    %c0_i32_1 = arith.constant 0 : i32
    return %c0_i32, %c0_i32_0 : i32, i32
  }
  func.func @transform_10(%arg0: i32) -> (i32, i32) {
    %c0_i32 = arith.constant 0 : i32
    %c0_i32_0 = arith.constant 0 : i32
    %c0_i32_1 = arith.constant 0 : i32
    return %c0_i32, %c0_i32_0 : i32, i32
  }
  func.func @transform_11(%arg0: i32) -> (i32, i32) {
    %c0_i32 = arith.constant 0 : i32
    %c0_i32_0 = arith.constant 0 : i32
    return %arg0, %c0_i32 : i32, i32
  }
}

module attributes {stable_mosaic.version = 11 : i64} {
  func.func @_resident_kernel(%arg0: i32, %arg1: memref<8x128xf32, #tpu.memory_space<vmem>>, %arg2: memref<128x128xf32, #tpu.memory_space<vmem>>, %arg3: memref<1x128xf32, #tpu.memory_space<vmem>>, %arg4: memref<3x128x128xf32, #tpu.memory_space<vmem>>, %arg5: memref<3x1x128xf32, #tpu.memory_space<vmem>>, %arg6: memref<3x128x128xf32, #tpu.memory_space<vmem>>, %arg7: memref<3x1x128xf32, #tpu.memory_space<vmem>>, %arg8: memref<1x128xf32, #tpu.memory_space<vmem>>, %arg9: memref<1x128xf32, #tpu.memory_space<vmem>>, %arg10: memref<128x128xf32, #tpu.memory_space<vmem>>, %arg11: memref<1x128xf32, #tpu.memory_space<vmem>>, %arg12: memref<8x128xf32, #tpu.memory_space<vmem>>) attributes {dimension_semantics = [#tpu.dimension_semantics<parallel>], iteration_bounds = array<i64: 2>, scalar_prefetch = 0 : i64, scratch_operands = 0 : i64, tpu.core_type = #tpu.core_type<tc>, window_params = [{transform_indices = @transform_0, window_bounds = array<i64: 8, 128>}, {pipeline_mode = #tpu.pipeline_mode<synchronous>, transform_indices = @transform_1, window_bounds = array<i64: 128, 128>}, {pipeline_mode = #tpu.pipeline_mode<synchronous>, transform_indices = @transform_2, window_bounds = array<i64: 1, 128>}, {pipeline_mode = #tpu.pipeline_mode<synchronous>, transform_indices = @transform_3, window_bounds = array<i64: 3, 128, 128>}, {pipeline_mode = #tpu.pipeline_mode<synchronous>, transform_indices = @transform_4, window_bounds = array<i64: 3, 1, 128>}, {pipeline_mode = #tpu.pipeline_mode<synchronous>, transform_indices = @transform_5, window_bounds = array<i64: 3, 128, 128>}, {pipeline_mode = #tpu.pipeline_mode<synchronous>, transform_indices = @transform_6, window_bounds = array<i64: 3, 1, 128>}, {pipeline_mode = #tpu.pipeline_mode<synchronous>, transform_indices = @transform_7, window_bounds = array<i64: 1, 128>}, {pipeline_mode = #tpu.pipeline_mode<synchronous>, transform_indices = @transform_8, window_bounds = array<i64: 1, 128>}, {pipeline_mode = #tpu.pipeline_mode<synchronous>, transform_indices = @transform_9, window_bounds = array<i64: 128, 128>}, {pipeline_mode = #tpu.pipeline_mode<synchronous>, transform_indices = @transform_10, window_bounds = array<i64: 1, 128>}, {transform_indices = @transform_11, window_bounds = array<i64: 8, 128>}]} {
    %c0 = arith.constant 0 : index
    %c0_0 = arith.constant 0 : index
    %0 = vector.load %arg1[%c0, %c0_0] : memref<8x128xf32, #tpu.memory_space<vmem>>, vector<8x128xf32>
    %c0_1 = arith.constant 0 : index
    %c0_2 = arith.constant 0 : index
    %1 = vector.load %arg2[%c0_1, %c0_2] : memref<128x128xf32, #tpu.memory_space<vmem>>, vector<128x128xf32>
    %cst = arith.constant dense<0.000000e+00> : vector<8x128xf32>
    %2 = tpu.matmul %0, %1, %cst {dimension_numbers = #tpu.dot_dimension_numbers<[1], [0], [0], [1], [0, 0, 1, 1], [], []>} : vector<8x128xf32>, vector<128x128xf32>, vector<8x128xf32> -> vector<8x128xf32>
    %c0_3 = arith.constant 0 : index
    %c0_4 = arith.constant 0 : index
    %3 = vector.load %arg3[%c0_3, %c0_4] : memref<1x128xf32, #tpu.memory_space<vmem>>, vector<1x128xf32>
    %4 = vector.broadcast %3 : vector<1x128xf32> to vector<8x128xf32>
    %5 = arith.addf %2, %4 : vector<8x128xf32>
    %c0_5 = arith.constant 0 : index
    %c0_6 = arith.constant 0 : index
    %c0_7 = arith.constant 0 : index
    %6 = vector.load %arg4[%c0_5, %c0_6, %c0_7] : memref<3x128x128xf32, #tpu.memory_space<vmem>>, vector<1x128x128xf32>
    %7 = vector.shape_cast %6 : vector<1x128x128xf32> to vector<128x128xf32>
    %cst_8 = arith.constant dense<0.000000e+00> : vector<8x128xf32>
    %8 = tpu.matmul %5, %7, %cst_8 {dimension_numbers = #tpu.dot_dimension_numbers<[1], [0], [0], [1], [0, 0, 1, 1], [], []>} : vector<8x128xf32>, vector<128x128xf32>, vector<8x128xf32> -> vector<8x128xf32>
    %c0_9 = arith.constant 0 : index
    %c0_10 = arith.constant 0 : index
    %c0_11 = arith.constant 0 : index
    %9 = vector.load %arg5[%c0_9, %c0_10, %c0_11] : memref<3x1x128xf32, #tpu.memory_space<vmem>>, vector<1x1x128xf32>
    %10 = vector.shape_cast %9 : vector<1x1x128xf32> to vector<1x128xf32>
    %11 = vector.broadcast %10 : vector<1x128xf32> to vector<8x128xf32>
    %12 = arith.addf %8, %11 : vector<8x128xf32>
    %cst_12 = arith.constant 0.000000e+00 : f32
    %13 = vector.broadcast %cst_12 : f32 to vector<8x128xf32>
    %14 = arith.maximumf %12, %13 : vector<8x128xf32>
    %c0_13 = arith.constant 0 : index
    %c0_14 = arith.constant 0 : index
    %c0_15 = arith.constant 0 : index
    %15 = vector.load %arg6[%c0_13, %c0_14, %c0_15] : memref<3x128x128xf32, #tpu.memory_space<vmem>>, vector<1x128x128xf32>
    %16 = vector.shape_cast %15 : vector<1x128x128xf32> to vector<128x128xf32>
    %cst_16 = arith.constant dense<0.000000e+00> : vector<8x128xf32>
    %17 = tpu.matmul %14, %16, %cst_16 {dimension_numbers = #tpu.dot_dimension_numbers<[1], [0], [0], [1], [0, 0, 1, 1], [], []>} : vector<8x128xf32>, vector<128x128xf32>, vector<8x128xf32> -> vector<8x128xf32>
    %c0_17 = arith.constant 0 : index
    %c0_18 = arith.constant 0 : index
    %c0_19 = arith.constant 0 : index
    %18 = vector.load %arg7[%c0_17, %c0_18, %c0_19] : memref<3x1x128xf32, #tpu.memory_space<vmem>>, vector<1x1x128xf32>
    %19 = vector.shape_cast %18 : vector<1x1x128xf32> to vector<1x128xf32>
    %20 = vector.broadcast %19 : vector<1x128xf32> to vector<8x128xf32>
    %21 = arith.addf %17, %20 : vector<8x128xf32>
    %22 = arith.addf %5, %21 : vector<8x128xf32>
    %c1 = arith.constant 1 : index
    %c0_20 = arith.constant 0 : index
    %c0_21 = arith.constant 0 : index
    %23 = vector.load %arg4[%c1, %c0_20, %c0_21] : memref<3x128x128xf32, #tpu.memory_space<vmem>>, vector<1x128x128xf32>
    %24 = vector.shape_cast %23 : vector<1x128x128xf32> to vector<128x128xf32>
    %cst_22 = arith.constant dense<0.000000e+00> : vector<8x128xf32>
    %25 = tpu.matmul %22, %24, %cst_22 {dimension_numbers = #tpu.dot_dimension_numbers<[1], [0], [0], [1], [0, 0, 1, 1], [], []>} : vector<8x128xf32>, vector<128x128xf32>, vector<8x128xf32> -> vector<8x128xf32>
    %c1_23 = arith.constant 1 : index
    %c0_24 = arith.constant 0 : index
    %c0_25 = arith.constant 0 : index
    %26 = vector.load %arg5[%c1_23, %c0_24, %c0_25] : memref<3x1x128xf32, #tpu.memory_space<vmem>>, vector<1x1x128xf32>
    %27 = vector.shape_cast %26 : vector<1x1x128xf32> to vector<1x128xf32>
    %28 = vector.broadcast %27 : vector<1x128xf32> to vector<8x128xf32>
    %29 = arith.addf %25, %28 : vector<8x128xf32>
    %cst_26 = arith.constant 0.000000e+00 : f32
    %30 = vector.broadcast %cst_26 : f32 to vector<8x128xf32>
    %31 = arith.maximumf %29, %30 : vector<8x128xf32>
    %c1_27 = arith.constant 1 : index
    %c0_28 = arith.constant 0 : index
    %c0_29 = arith.constant 0 : index
    %32 = vector.load %arg6[%c1_27, %c0_28, %c0_29] : memref<3x128x128xf32, #tpu.memory_space<vmem>>, vector<1x128x128xf32>
    %33 = vector.shape_cast %32 : vector<1x128x128xf32> to vector<128x128xf32>
    %cst_30 = arith.constant dense<0.000000e+00> : vector<8x128xf32>
    %34 = tpu.matmul %31, %33, %cst_30 {dimension_numbers = #tpu.dot_dimension_numbers<[1], [0], [0], [1], [0, 0, 1, 1], [], []>} : vector<8x128xf32>, vector<128x128xf32>, vector<8x128xf32> -> vector<8x128xf32>
    %c1_31 = arith.constant 1 : index
    %c0_32 = arith.constant 0 : index
    %c0_33 = arith.constant 0 : index
    %35 = vector.load %arg7[%c1_31, %c0_32, %c0_33] : memref<3x1x128xf32, #tpu.memory_space<vmem>>, vector<1x1x128xf32>
    %36 = vector.shape_cast %35 : vector<1x1x128xf32> to vector<1x128xf32>
    %37 = vector.broadcast %36 : vector<1x128xf32> to vector<8x128xf32>
    %38 = arith.addf %34, %37 : vector<8x128xf32>
    %39 = arith.addf %22, %38 : vector<8x128xf32>
    %c2 = arith.constant 2 : index
    %c0_34 = arith.constant 0 : index
    %c0_35 = arith.constant 0 : index
    %40 = vector.load %arg4[%c2, %c0_34, %c0_35] : memref<3x128x128xf32, #tpu.memory_space<vmem>>, vector<1x128x128xf32>
    %41 = vector.shape_cast %40 : vector<1x128x128xf32> to vector<128x128xf32>
    %cst_36 = arith.constant dense<0.000000e+00> : vector<8x128xf32>
    %42 = tpu.matmul %39, %41, %cst_36 {dimension_numbers = #tpu.dot_dimension_numbers<[1], [0], [0], [1], [0, 0, 1, 1], [], []>} : vector<8x128xf32>, vector<128x128xf32>, vector<8x128xf32> -> vector<8x128xf32>
    %c2_37 = arith.constant 2 : index
    %c0_38 = arith.constant 0 : index
    %c0_39 = arith.constant 0 : index
    %43 = vector.load %arg5[%c2_37, %c0_38, %c0_39] : memref<3x1x128xf32, #tpu.memory_space<vmem>>, vector<1x1x128xf32>
    %44 = vector.shape_cast %43 : vector<1x1x128xf32> to vector<1x128xf32>
    %45 = vector.broadcast %44 : vector<1x128xf32> to vector<8x128xf32>
    %46 = arith.addf %42, %45 : vector<8x128xf32>
    %cst_40 = arith.constant 0.000000e+00 : f32
    %47 = vector.broadcast %cst_40 : f32 to vector<8x128xf32>
    %48 = arith.maximumf %46, %47 : vector<8x128xf32>
    %c2_41 = arith.constant 2 : index
    %c0_42 = arith.constant 0 : index
    %c0_43 = arith.constant 0 : index
    %49 = vector.load %arg6[%c2_41, %c0_42, %c0_43] : memref<3x128x128xf32, #tpu.memory_space<vmem>>, vector<1x128x128xf32>
    %50 = vector.shape_cast %49 : vector<1x128x128xf32> to vector<128x128xf32>
    %cst_44 = arith.constant dense<0.000000e+00> : vector<8x128xf32>
    %51 = tpu.matmul %48, %50, %cst_44 {dimension_numbers = #tpu.dot_dimension_numbers<[1], [0], [0], [1], [0, 0, 1, 1], [], []>} : vector<8x128xf32>, vector<128x128xf32>, vector<8x128xf32> -> vector<8x128xf32>
    %c2_45 = arith.constant 2 : index
    %c0_46 = arith.constant 0 : index
    %c0_47 = arith.constant 0 : index
    %52 = vector.load %arg7[%c2_45, %c0_46, %c0_47] : memref<3x1x128xf32, #tpu.memory_space<vmem>>, vector<1x1x128xf32>
    %53 = vector.shape_cast %52 : vector<1x1x128xf32> to vector<1x128xf32>
    %54 = vector.broadcast %53 : vector<1x128xf32> to vector<8x128xf32>
    %55 = arith.addf %51, %54 : vector<8x128xf32>
    %56 = arith.addf %39, %55 : vector<8x128xf32>
    %c0_48 = arith.constant 0 : index
    %c0_49 = arith.constant 0 : index
    %57 = vector.load %arg8[%c0_48, %c0_49] : memref<1x128xf32, #tpu.memory_space<vmem>>, vector<1x128xf32>
    %58 = vector.broadcast %57 : vector<1x128xf32> to vector<8x128xf32>
    %59 = arith.mulf %56, %58 : vector<8x128xf32>
    %c0_50 = arith.constant 0 : index
    %c0_51 = arith.constant 0 : index
    %60 = vector.load %arg9[%c0_50, %c0_51] : memref<1x128xf32, #tpu.memory_space<vmem>>, vector<1x128xf32>
    %61 = vector.broadcast %60 : vector<1x128xf32> to vector<8x128xf32>
    %62 = arith.addf %59, %61 : vector<8x128xf32>
    %cst_52 = arith.constant 0.000000e+00 : f32
    %63 = vector.broadcast %cst_52 : f32 to vector<8x128xf32>
    %64 = arith.maximumf %62, %63 : vector<8x128xf32>
    %c0_53 = arith.constant 0 : index
    %c0_54 = arith.constant 0 : index
    %65 = vector.load %arg10[%c0_53, %c0_54] : memref<128x128xf32, #tpu.memory_space<vmem>>, vector<128x128xf32>
    %cst_55 = arith.constant dense<0.000000e+00> : vector<8x128xf32>
    %66 = tpu.matmul %64, %65, %cst_55 {dimension_numbers = #tpu.dot_dimension_numbers<[1], [0], [0], [1], [0, 0, 1, 1], [], []>} : vector<8x128xf32>, vector<128x128xf32>, vector<8x128xf32> -> vector<8x128xf32>
    %c0_56 = arith.constant 0 : index
    %c0_57 = arith.constant 0 : index
    %67 = vector.load %arg11[%c0_56, %c0_57] : memref<1x128xf32, #tpu.memory_space<vmem>>, vector<1x128xf32>
    %68 = vector.broadcast %67 : vector<1x128xf32> to vector<8x128xf32>
    %69 = arith.addf %66, %68 : vector<8x128xf32>
    %c0_58 = arith.constant 0 : index
    %c0_59 = arith.constant 0 : index
    %70 = vector.load %arg12[%c0_58, %c0_59] : memref<8x128xf32, #tpu.memory_space<vmem>>, vector<8x128xf32>
    tpu.vector_store %arg12[%c0_58, %c0_59], %69 {strides = array<i32>} : memref<8x128xf32, #tpu.memory_space<vmem>>, vector<8x128xf32>,
    return
  }
  func.func @transform_0(%arg0: i32) -> (i32, i32) {
    %c0_i32 = arith.constant 0 : i32
    %c0_i32_0 = arith.constant 0 : i32
    return %arg0, %c0_i32 : i32, i32
  }
  func.func @transform_1(%arg0: i32) -> (i32, i32) {
    %c0_i32 = arith.constant 0 : i32
    %c0_i32_0 = arith.constant 0 : i32
    %c0_i32_1 = arith.constant 0 : i32
    return %c0_i32, %c0_i32_0 : i32, i32
  }
  func.func @transform_2(%arg0: i32) -> (i32, i32) {
    %c0_i32 = arith.constant 0 : i32
    %c0_i32_0 = arith.constant 0 : i32
    %c0_i32_1 = arith.constant 0 : i32
    return %c0_i32, %c0_i32_0 : i32, i32
  }
  func.func @transform_3(%arg0: i32) -> (i32, i32, i32) {
    %c0_i32 = arith.constant 0 : i32
    %c0_i32_0 = arith.constant 0 : i32
    %c0_i32_1 = arith.constant 0 : i32
    %c0_i32_2 = arith.constant 0 : i32
    return %c0_i32, %c0_i32_0, %c0_i32_1 : i32, i32, i32
  }
  func.func @transform_4(%arg0: i32) -> (i32, i32, i32) {
    %c0_i32 = arith.constant 0 : i32
    %c0_i32_0 = arith.constant 0 : i32
    %c0_i32_1 = arith.constant 0 : i32
    %c0_i32_2 = arith.constant 0 : i32
    return %c0_i32, %c0_i32_0, %c0_i32_1 : i32, i32, i32
  }
  func.func @transform_5(%arg0: i32) -> (i32, i32, i32) {
    %c0_i32 = arith.constant 0 : i32
    %c0_i32_0 = arith.constant 0 : i32
    %c0_i32_1 = arith.constant 0 : i32
    %c0_i32_2 = arith.constant 0 : i32
    return %c0_i32, %c0_i32_0, %c0_i32_1 : i32, i32, i32
  }
  func.func @transform_6(%arg0: i32) -> (i32, i32, i32) {
    %c0_i32 = arith.constant 0 : i32
    %c0_i32_0 = arith.constant 0 : i32
    %c0_i32_1 = arith.constant 0 : i32
    %c0_i32_2 = arith.constant 0 : i32
    return %c0_i32, %c0_i32_0, %c0_i32_1 : i32, i32, i32
  }
  func.func @transform_7(%arg0: i32) -> (i32, i32) {
    %c0_i32 = arith.constant 0 : i32
    %c0_i32_0 = arith.constant 0 : i32
    %c0_i32_1 = arith.constant 0 : i32
    return %c0_i32, %c0_i32_0 : i32, i32
  }
  func.func @transform_8(%arg0: i32) -> (i32, i32) {
    %c0_i32 = arith.constant 0 : i32
    %c0_i32_0 = arith.constant 0 : i32
    %c0_i32_1 = arith.constant 0 : i32
    return %c0_i32, %c0_i32_0 : i32, i32
  }
  func.func @transform_9(%arg0: i32) -> (i32, i32) {
    %c0_i32 = arith.constant 0 : i32
    %c0_i32_0 = arith.constant 0 : i32
    %c0_i32_1 = arith.constant 0 : i32
    return %c0_i32, %c0_i32_0 : i32, i32
  }
  func.func @transform_10(%arg0: i32) -> (i32, i32) {
    %c0_i32 = arith.constant 0 : i32
    %c0_i32_0 = arith.constant 0 : i32
    %c0_i32_1 = arith.constant 0 : i32
    return %c0_i32, %c0_i32_0 : i32, i32
  }
  func.func @transform_11(%arg0: i32) -> (i32, i32) {
    %c0_i32 = arith.constant 0 : i32
    %c0_i32_0 = arith.constant 0 : i32
    return %arg0, %c0_i32 : i32, i32
  }
}

</mosaic_0001>

<llo_original>
// kernel: tpu_custom_call.1
$region0: #{tpu_custom_call.1}
  #allocation0 [shape = 'u32[]', space=smem, size = 0x4, offset = 0x4, fixed_abs, tag = 'smem constant byte address 0x4 - core index']
  #allocation1 [shape = 'u32[144,128]{1,0:T(1,128)}', space=vmem, size = 0x12000, scoped, tag = 'internal scratch']
  %s0 = inlined_call_operand.hbm [shape: f32[16,128], index: 0, kind: input, shape index: {}]
  %s1 = inlined_call_operand.hbm [shape: f32[128,128], index: 1, kind: input, shape index: {}]
  %s2 = inlined_call_operand.vmem [shape: f32[1,128], index: 2, kind: input, shape index: {}]
  %s3 = inlined_call_operand.hbm [shape: f32[3,128,128], index: 3, kind: input, shape index: {}]
  %s4 = inlined_call_operand.vmem [shape: f32[3,1,128], index: 4, kind: input, shape index: {}]
  %s5 = inlined_call_operand.hbm [shape: f32[3,128,128], index: 5, kind: input, shape index: {}]
  %s6 = inlined_call_operand.vmem [shape: f32[3,1,128], index: 6, kind: input, shape index: {}]
  %s7 = inlined_call_operand.vmem [shape: f32[1,128], index: 7, kind: input, shape index: {}]
  %s8 = inlined_call_operand.vmem [shape: f32[1,128], index: 8, kind: input, shape index: {}]
  %s9 = inlined_call_operand.hbm [shape: f32[128,128], index: 9, kind: input, shape index: {}]
  %s10 = inlined_call_operand.vmem [shape: f32[1,128], index: 10, kind: input, shape index: {}]
  %s11 = inlined_call_operand.hbm [shape: f32[16,128], index: 11, kind: output, shape index: {}]
  %s12 = sld [smem:[#allocation0]]
  $region97: #{tpu_custom_call.1} parent=0
    _
  %s14 = ssub.s32 1, %s12
  %s15 = scalar_select 0, %s14, %s12
  $region1: #{tpu_custom_call.1} parent=0
    #allocation2 [shape = 'u8[8192]{0}', space=vmem, size = 0x2000, scoped, tag = 'input window, operand 0']
    #allocation3 [shape = 's32[2]{0}', space=sflag, size = 0x8, scoped, tag = 'scoped memory for tpu_custom_call.1']
    #allocation4 [shape = 's32[2]{0}', space=sflag, size = 0x8, scoped, tag = 'scoped memory for tpu_custom_call.1']
    #allocation5 [shape = 'u8[65536]{0}', space=vmem, size = 0x10000, scoped, tag = 'input window, operand 1, single buffered']
    #allocation6 [shape = 's32[1]{0}', space=sflag, size = 0x4, scoped, tag = 'scoped memory for tpu_custom_call.1']
    #allocation7 [shape = 'u8[196608]{0}', space=vmem, size = 0x30000, scoped, tag = 'input window, operand 3, single buffered']
    #allocation8 [shape = 'u8[196608]{0}', space=vmem, size = 0x30000, scoped, tag = 'input window, operand 5, single buffered']
    #allocation9 [shape = 's32[1]{0}', space=sflag, size = 0x4, scoped, tag = 'scoped memory for tpu_custom_call.1']
    #allocation10 [shape = 'u8[65536]{0}', space=vmem, size = 0x10000, scoped, tag = 'input window, operand 9, single buffered']
    #allocation11 [shape = 'u8[8192]{0}', space=vmem, size = 0x2000, scoped, tag = 'output window, operand 0']
    %16 = vsyncpa [#allocation3], 0
    %s17 = scalar_lea.sflag [#allocation3], 1
    %18 = vsyncpa %s17, 0
    %19 = vsyncpa [#allocation6], 0
    %20 = vsyncpa [#allocation9], 0
    %21 = vsyncpa [#allocation4], 0
    %s22 = scalar_lea.sflag [#allocation4], 1
    %23 = vsyncpa %s22, 0
    loop: start=0, step=1, limit=4
    $region2: #{tpu_custom_call.1} parent=1 // loop_pre_header
      _
    $region3: #{tpu_custom_call.1} parent=1 // loop_header
      %s25 = sphi 0, %s29
      %p26 = scmp.ge.s32.totalorder %s25, 4
      %s35 = sphi 0, %s37
      %s38 = sphi 0, %s35
      %s39 = sphi 0, %s38
      %s55 = sphi 0, %s39
      %s59 = sphi 0, %s59
      %s61 = sphi 0, %s59
      %s62 = sphi 0, %s61
      %s76 = sphi 0, %s62
      %s80 = sphi 0, %s80
      %s82 = sphi 0, %s80
      %s83 = sphi 0, %s82
      %s97 = sphi 0, %s83
      %s101 = sphi 0, %s101
      %s103 = sphi 0, %s101
      %s104 = sphi 0, %s103
      %s118 = sphi 0, %s104
      %s122 = sphi 0, %s122
      %s124 = sphi 0, %s122
      %s125 = sphi 0, %s124
      %s139 = sphi 0, %s125
      %s143 = sphi 0, %s143
      %s145 = sphi 0, %s143
      %s146 = sphi 0, %s145
      %s160 = sphi 0, %s146
      %s164 = sphi 0, %s164
      %s166 = sphi 0, %s164
      %s167 = sphi 0, %s166
      %s181 = sphi 0, %s167
      %s185 = sphi 0, %s185
      %s187 = sphi 0, %s185
      %s188 = sphi 0, %s187
      %s202 = sphi 0, %s188
      %s206 = sphi 0, %s206
      %s208 = sphi 0, %s206
      %s209 = sphi 0, %s208
      %s223 = sphi 0, %s209
      %s227 = sphi 0, %s227
      %s229 = sphi 0, %s227
      %s230 = sphi 0, %s229
      %s244 = sphi 0, %s230
      %s248 = sphi 0, %s248
      %s250 = sphi 0, %s248
      %s251 = sphi 0, %s250
      %s265 = sphi 0, %s251
      %s271 = sphi 0, %s273
      %s274 = sphi 0, %s271
      %s275 = sphi 0, %s274
      %s291 = sphi 0, %s275
    $region4: #{tpu_custom_call.1} parent=1 // loop_header_branch
      %28 = sbr.rel (%p26) target = $region8
    $region5: #{tpu_custom_call.1} parent=1 // loop_body
      %s30 = ssub.s32 %s25, 1
      %s31 = ssub.s32 %s25, 2
      %s32 = sadd.s32 %s25, 1
      %s33 = ssub.s32 %s25, %s32
      %p34 = scmp.eq.s32.totalorder %s33, 0
      %s36 = sadd.s32 %s35, 1
      %s37 = scalar_select %p34, %s35, %s36
      %p40 = pneg %p34
      %p41 = scmp.eq.s32.totalorder %s25, 1
      %p42 = por %p40, %p41
      %p43 = scmp.ne.s32.totalorder %s35, %s38
      %p44 = scmp.eq.s32.totalorder %s25, 0
      %p45 = por %p43, %p44
      %p46 = scmp.ne.s32.totalorder %s35, %s38
      %p47 = scmp.eq.s32.totalorder %s30, 1
      %p48 = por %p46, %p47
      %p49 = scmp.ne.s32.totalorder %s38, %s39
      %p50 = scmp.eq.s32.totalorder %s30, 0
      %p51 = por %p49, %p50
      %p52 = scmp.ne.s32.totalorder %s38, %s39
      %p53 = scmp.eq.s32.totalorder %s31, 1
      %p54 = por %p52, %p53
      %p56 = scmp.ne.s32.totalorder %s39, %s55
      %p57 = scmp.eq.s32.totalorder %s31, 0
      %p58 = por %p56, %p57
      %s60 = sadd.s32 %s59, 1
      %p63 = scmp.eq.s32.totalorder %s25, 1
      %p64 = scmp.ne.s32.totalorder %s59, %s61
      %p65 = scmp.eq.s32.totalorder %s25, 0
      %p66 = por %p64, %p65
      %p67 = scmp.ne.s32.totalorder %s59, %s61
      %p68 = scmp.eq.s32.totalorder %s30, 1
      %p69 = por %p67, %p68
      %p70 = scmp.ne.s32.totalorder %s61, %s62
      %p71 = scmp.eq.s32.totalorder %s30, 0
      %p72 = por %p70, %p71
      %p73 = scmp.ne.s32.totalorder %s61, %s62
      %p74 = scmp.eq.s32.totalorder %s31, 1
      %p75 = por %p73, %p74
      %p77 = scmp.ne.s32.totalorder %s62, %s76
      %p78 = scmp.eq.s32.totalorder %s31, 0
      %p79 = por %p77, %p78
      %s81 = sadd.s32 %s80, 1
      %p84 = scmp.eq.s32.totalorder %s25, 1
      %p85 = scmp.ne.s32.totalorder %s80, %s82
      %p86 = scmp.eq.s32.totalorder %s25, 0
      %p87 = por %p85, %p86
      %p88 = scmp.ne.s32.totalorder %s80, %s82
      %p89 = scmp.eq.s32.totalorder %s30, 1
      %p90 = por %p88, %p89
      %p91 = scmp.ne.s32.totalorder %s82, %s83
      %p92 = scmp.eq.s32.totalorder %s30, 0
      %p93 = por %p91, %p92
      %p94 = scmp.ne.s32.totalorder %s82, %s83
      %p95 = scmp.eq.s32.totalorder %s31, 1
      %p96 = por %p94, %p95
      %p98 = scmp.ne.s32.totalorder %s83, %s97
      %p99 = scmp.eq.s32.totalorder %s31, 0
      %p100 = por %p98, %p99
      %s102 = sadd.s32 %s101, 1
      %p105 = scmp.eq.s32.totalorder %s25, 1
      %p106 = scmp.ne.s32.totalorder %s101, %s103
      %p107 = scmp.eq.s32.totalorder %s25, 0
      %p108 = por %p106, %p107
      %p109 = scmp.ne.s32.totalorder %s101, %s103
      %p110 = scmp.eq.s32.totalorder %s30, 1
      %p111 = por %p109, %p110
      %p112 = scmp.ne.s32.totalorder %s103, %s104
      %p113 = scmp.eq.s32.totalorder %s30, 0
      %p114 = por %p112, %p113
      %p115 = scmp.ne.s32.totalorder %s103, %s104
      %p116 = scmp.eq.s32.totalorder %s31, 1
      %p117 = por %p115, %p116
      %p119 = scmp.ne.s32.totalorder %s104, %s118
      %p120 = scmp.eq.s32.totalorder %s31, 0
      %p121 = por %p119, %p120
      %s123 = sadd.s32 %s122, 1
      %p126 = scmp.eq.s32.totalorder %s25, 1
      %p127 = scmp.ne.s32.totalorder %s122, %s124
      %p128 = scmp.eq.s32.totalorder %s25, 0
      %p129 = por %p127, %p128
      %p130 = scmp.ne.s32.totalorder %s122, %s124
      %p131 = scmp.eq.s32.totalorder %s30, 1
      %p132 = por %p130, %p131
      %p133 = scmp.ne.s32.totalorder %s124, %s125
      %p134 = scmp.eq.s32.totalorder %s30, 0
      %p135 = por %p133, %p134
      %p136 = scmp.ne.s32.totalorder %s124, %s125
      %p137 = scmp.eq.s32.totalorder %s31, 1
      %p138 = por %p136, %p137
      %p140 = scmp.ne.s32.totalorder %s125, %s139
      %p141 = scmp.eq.s32.totalorder %s31, 0
      %p142 = por %p140, %p141
      %s144 = sadd.s32 %s143, 1
      %p147 = scmp.eq.s32.totalorder %s25, 1
      %p148 = scmp.ne.s32.totalorder %s143, %s145
      %p149 = scmp.eq.s32.totalorder %s25, 0
      %p150 = por %p148, %p149
      %p151 = scmp.ne.s32.totalorder %s143, %s145
      %p152 = scmp.eq.s32.totalorder %s30, 1
      %p153 = por %p151, %p152
      %p154 = scmp.ne.s32.totalorder %s145, %s146
      %p155 = scmp.eq.s32.totalorder %s30, 0
      %p156 = por %p154, %p155
      %p157 = scmp.ne.s32.totalorder %s145, %s146
      %p158 = scmp.eq.s32.totalorder %s31, 1
      %p159 = por %p157, %p158
      %p161 = scmp.ne.s32.totalorder %s146, %s160
      %p162 = scmp.eq.s32.totalorder %s31, 0
      %p163 = por %p161, %p162
      %s165 = sadd.s32 %s164, 1
      %p168 = scmp.eq.s32.totalorder %s25, 1
      %p169 = scmp.ne.s32.totalorder %s164, %s166
      %p170 = scmp.eq.s32.totalorder %s25, 0
      %p171 = por %p169, %p170
      %p172 = scmp.ne.s32.totalorder %s164, %s166
      %p173 = scmp.eq.s32.totalorder %s30, 1
      %p174 = por %p172, %p173
      %p175 = scmp.ne.s32.totalorder %s166, %s167
      %p176 = scmp.eq.s32.totalorder %s30, 0
      %p177 = por %p175, %p176
      %p178 = scmp.ne.s32.totalorder %s166, %s167
      %p179 = scmp.eq.s32.totalorder %s31, 1
      %p180 = por %p178, %p179
      %p182 = scmp.ne.s32.totalorder %s167, %s181
      %p183 = scmp.eq.s32.totalorder %s31, 0
      %p184 = por %p182, %p183
      %s186 = sadd.s32 %s185, 1
      %p189 = scmp.eq.s32.totalorder %s25, 1
      %p190 = scmp.ne.s32.totalorder %s185, %s187
      %p191 = scmp.eq.s32.totalorder %s25, 0
      %p192 = por %p190, %p191
      %p193 = scmp.ne.s32.totalorder %s185, %s187
      %p194 = scmp.eq.s32.totalorder %s30, 1
      %p195 = por %p193, %p194
      %p196 = scmp.ne.s32.totalorder %s187, %s188
      %p197 = scmp.eq.s32.totalorder %s30, 0
      %p198 = por %p196, %p197
      %p199 = scmp.ne.s32.totalorder %s187, %s188
      %p200 = scmp.eq.s32.totalorder %s31, 1
      %p201 = por %p199, %p200
      %p203 = scmp.ne.s32.totalorder %s188, %s202
      %p204 = scmp.eq.s32.totalorder %s31, 0
      %p205 = por %p203, %p204
      %s207 = sadd.s32 %s206, 1
      %p210 = scmp.eq.s32.totalorder %s25, 1
      %p211 = scmp.ne.s32.totalorder %s206, %s208
      %p212 = scmp.eq.s32.totalorder %s25, 0
      %p213 = por %p211, %p212
      %p214 = scmp.ne.s32.totalorder %s206, %s208
      %p215 = scmp.eq.s32.totalorder %s30, 1
      %p216 = por %p214, %p215
      %p217 = scmp.ne.s32.totalorder %s208, %s209
      %p218 = scmp.eq.s32.totalorder %s30, 0
      %p219 = por %p217, %p218
      %p220 = scmp.ne.s32.totalorder %s208, %s209
      %p221 = scmp.eq.s32.totalorder %s31, 1
      %p222 = por %p220, %p221
      %p224 = scmp.ne.s32.totalorder %s209, %s223
      %p225 = scmp.eq.s32.totalorder %s31, 0
      %p226 = por %p224, %p225
      %s228 = sadd.s32 %s227, 1
      %p231 = scmp.eq.s32.totalorder %s25, 1
      %p232 = scmp.ne.s32.totalorder %s227, %s229
      %p233 = scmp.eq.s32.totalorder %s25, 0
      %p234 = por %p232, %p233
      %p235 = scmp.ne.s32.totalorder %s227, %s229
      %p236 = scmp.eq.s32.totalorder %s30, 1
      %p237 = por %p235, %p236
      %p238 = scmp.ne.s32.totalorder %s229, %s230
      %p239 = scmp.eq.s32.totalorder %s30, 0
      %p240 = por %p238, %p239
      %p241 = scmp.ne.s32.totalorder %s229, %s230
      %p242 = scmp.eq.s32.totalorder %s31, 1
      %p243 = por %p241, %p242
      %p245 = scmp.ne.s32.totalorder %s230, %s244
      %p246 = scmp.eq.s32.totalorder %s31, 0
      %p247 = por %p245, %p246
      %s249 = sadd.s32 %s248, 1
      %p252 = scmp.eq.s32.totalorder %s25, 1
      %p253 = scmp.ne.s32.totalorder %s248, %s250
      %p254 = scmp.eq.s32.totalorder %s25, 0
      %p255 = por %p253, %p254
      %p256 = scmp.ne.s32.totalorder %s248, %s250
      %p257 = scmp.eq.s32.totalorder %s30, 1
      %p258 = por %p256, %p257
      %p259 = scmp.ne.s32.totalorder %s250, %s251
      %p260 = scmp.eq.s32.totalorder %s30, 0
      %p261 = por %p259, %p260
      %p262 = scmp.ne.s32.totalorder %s250, %s251
      %p263 = scmp.eq.s32.totalorder %s31, 1
      %p264 = por %p262, %p263
      %p266 = scmp.ne.s32.totalorder %s251, %s265
      %p267 = scmp.eq.s32.totalorder %s31, 0
      %p268 = por %p266, %p267
      %s269 = ssub.s32 %s25, %s32
      %p270 = scmp.eq.s32.totalorder %s269, 0
      %s272 = sadd.s32 %s271, 1
      %s273 = scalar_select %p270, %s271, %s272
      %p276 = pneg %p270
      %p277 = scmp.eq.s32.totalorder %s25, 1
      %p278 = por %p276, %p277
      %p279 = scmp.ne.s32.totalorder %s271, %s274
      %p280 = scmp.eq.s32.totalorder %s25, 0
      %p281 = por %p279, %p280
      %p282 = scmp.ne.s32.totalorder %s271, %s274
      %p283 = scmp.eq.s32.totalorder %s30, 1
      %p284 = por %p282, %p283
      %p285 = scmp.ne.s32.totalorder %s274, %s275
      %p286 = scmp.eq.s32.totalorder %s30, 0
      %p287 = por %p285, %p286
      %p288 = scmp.ne.s32.totalorder %s274, %s275
      %p289 = scmp.eq.s32.totalorder %s31, 1
      %p290 = por %p288, %p289
      %p292 = scmp.ne.s32.totalorder %s275, %s291
      %p293 = scmp.eq.s32.totalorder %s31, 0
      %p294 = por %p292, %p293
      %p295 = scmp.le.s32.totalorder 1, %s25
      %p296 = scmp.lt.s32.totalorder %s25, 3
      %p297 = pnand %p295, %p296
      %p298 = pneg %p297
      // Predicated region
      $region9: #{tpu_custom_call.1} parent=5 // pred_check
        _
      $region10: #{tpu_custom_call.1} parent=5 // pred_check_branch
        %300 = sbr.rel (%p297) target = $region12
      $region11: #{tpu_custom_call.1} parent=5 // pred_region
        %s301 = ssub.s32 %s25, 1
        // Predicated region
        $region13: #{tpu_custom_call.1} parent=11 // pred_check
          %p302 = pneg %p72
        $region14: #{tpu_custom_call.1} parent=11 // pred_check_branch
          %304 = sbr.rel (%p302) target = $region16
        $region15: #{tpu_custom_call.1} parent=11 // pred_region
          %s306 = ssub.s32 2048, 2048
          %307 = vsyncadd [#allocation6], %s306
          %s308 = sshll.u32 [#allocation5], 4
          %s309 = int_to_ptr.vmem [resolvable:$true] %s308
          %314 = dma.hbm_to_vmem [thread:$0]  %s1, 2048, %s309, [#allocation6], 128, 128, 8
        $region16: #{tpu_custom_call.1} parent=11 // pred_fallthru
          _
        // Predicated region
        $region17: #{tpu_custom_call.1} parent=11 // pred_check
          %p315 = pneg %p93
        $region18: #{tpu_custom_call.1} parent=11 // pred_check_branch
          %317 = sbr.rel (%p315) target = $region20
        $region19: #{tpu_custom_call.1} parent=11 // pred_region
          _
        $region20: #{tpu_custom_call.1} parent=11 // pred_fallthru
          _
        // Predicated region
        $region21: #{tpu_custom_call.1} parent=11 // pred_check
          %p318 = pneg %p114
        $region22: #{tpu_custom_call.1} parent=11 // pred_check_branch
          %320 = sbr.rel (%p318) target = $region24
        $region23: #{tpu_custom_call.1} parent=11 // pred_region
          %s322 = ssub.s32 6144, 6144
          %323 = vsyncadd [#allocation6], %s322
          %s324 = sshll.u32 [#allocation7], 4
          %s325 = int_to_ptr.vmem [resolvable:$true] %s324
          %330 = dma.hbm_to_vmem [thread:$0]  %s3, 6144, %s325, [#allocation6], 128, 128, 8
        $region24: #{tpu_custom_call.1} parent=11 // pred_fallthru
          _
        // Predicated region
        $region25: #{tpu_custom_call.1} parent=11 // pred_check
          %p331 = pneg %p135
        $region26: #{tpu_custom_call.1} parent=11 // pred_check_branch
          %333 = sbr.rel (%p331) target = $region28
        $region27: #{tpu_custom_call.1} parent=11 // pred_region
          _
        $region28: #{tpu_custom_call.1} parent=11 // pred_fallthru
          _
        // Predicated region
        $region29: #{tpu_custom_call.1} parent=11 // pred_check
          %p334 = pneg %p156
        $region30: #{tpu_custom_call.1} parent=11 // pred_check_branch
          %336 = sbr.rel (%p334) target = $region32
        $region31: #{tpu_custom_call.1} parent=11 // pred_region
          %s338 = ssub.s32 6144, 6144
          %339 = vsyncadd [#allocation9], %s338
          %s340 = sshll.u32 [#allocation8], 4
          %s341 = int_to_ptr.vmem [resolvable:$true] %s340
          %346 = dma.hbm_to_vmem [thread:$0]  %s5, 6144, %s341, [#allocation9], 128, 128, 8
        $region32: #{tpu_custom_call.1} parent=11 // pred_fallthru
          _
        // Predicated region
        $region33: #{tpu_custom_call.1} parent=11 // pred_check
          %p347 = pneg %p177
        $region34: #{tpu_custom_call.1} parent=11 // pred_check_branch
          %349 = sbr.rel (%p347) target = $region36
        $region35: #{tpu_custom_call.1} parent=11 // pred_region
          _
        $region36: #{tpu_custom_call.1} parent=11 // pred_fallthru
          _
        // Predicated region
        $region37: #{tpu_custom_call.1} parent=11 // pred_check
          %p350 = pneg %p198
        $region38: #{tpu_custom_call.1} parent=11 // pred_check_branch
          %352 = sbr.rel (%p350) target = $region40
        $region39: #{tpu_custom_call.1} parent=11 // pred_region
          _
        $region40: #{tpu_custom_call.1} parent=11 // pred_fallthru
          _
        // Predicated region
        $region41: #{tpu_custom_call.1} parent=11 // pred_check
          %p353 = pneg %p219
        $region42: #{tpu_custom_call.1} parent=11 // pred_check_branch
          %355 = sbr.rel (%p353) target = $region44
        $region43: #{tpu_custom_call.1} parent=11 // pred_region
          _
        $region44: #{tpu_custom_call.1} parent=11 // pred_fallthru
          _
        // Predicated region
        $region45: #{tpu_custom_call.1} parent=11 // pred_check
          %p356 = pneg %p240
        $region46: #{tpu_custom_call.1} parent=11 // pred_check_branch
          %358 = sbr.rel (%p356) target = $region48
        $region47: #{tpu_custom_call.1} parent=11 // pred_region
          %s360 = ssub.s32 2048, 2048
          %361 = vsyncadd [#allocation9], %s360
          %s362 = sshll.u32 [#allocation10], 4
          %s363 = int_to_ptr.vmem [resolvable:$true] %s362
          %368 = dma.hbm_to_vmem [thread:$0]  %s9, 2048, %s363, [#allocation9], 128, 128, 8
        $region48: #{tpu_custom_call.1} parent=11 // pred_fallthru
          _
        // Predicated region
        $region49: #{tpu_custom_call.1} parent=11 // pred_check
          %p369 = pneg %p261
        $region50: #{tpu_custom_call.1} parent=11 // pred_check_branch
          %371 = sbr.rel (%p369) target = $region52
        $region51: #{tpu_custom_call.1} parent=11 // pred_region
          _
        $region52: #{tpu_custom_call.1} parent=11 // pred_fallthru
          _
      $region12: #{tpu_custom_call.1} parent=5 // pred_fallthru
        _
      %p372 = scmp.lt.s32.totalorder %s25, 2
      // Predicated region
      $region53: #{tpu_custom_call.1} parent=5 // pred_check
        %p373 = pneg %p372
      $region54: #{tpu_custom_call.1} parent=5 // pred_check_branch
        %375 = sbr.rel (%p373) target = $region56
      $region55: #{tpu_custom_call.1} parent=5 // pred_region
        // Predicated region
        $region57: #{tpu_custom_call.1} parent=55 // pred_check
          %p376 = pneg %p45
        $region58: #{tpu_custom_call.1} parent=55 // pred_check_branch
          %378 = sbr.rel (%p376) target = $region60
        $region59: #{tpu_custom_call.1} parent=55 // pred_region
          %s379 = sand.u32 %s35, 1
          %s380 = scalar_lea.sflag [#allocation3], %s379
          %s381 = sand.u32 %s35, 1
          %s382 = smul.addr %s381, 8
          %s383 = scalar_lea.vmem [#allocation2], %s382
          %s385 = ssub.s32 128, 128
          %386 = vsyncadd %s380, %s385
          %s387 = smul.addr %s25, 128
          %s388 = scalar_lea.hbm %s0, %s387
          %s390 = sshll.u32 %s383, 4
          %s391 = int_to_ptr.vmem [resolvable:$true] %s390
          %393 = dma.hbm_to_vmem [thread:$0]  %s388, 128, %s391, %s380
        $region60: #{tpu_custom_call.1} parent=55 // pred_fallthru
          _
      $region56: #{tpu_custom_call.1} parent=5 // pred_fallthru
        _
      %p394 = scmp.le.s32.totalorder 1, %s25
      %p395 = scmp.lt.s32.totalorder %s25, 3
      %p396 = pnand %p394, %p395
      %p397 = pneg %p396
      // Predicated region
      $region61: #{tpu_custom_call.1} parent=5 // pred_check
        _
      $region62: #{tpu_custom_call.1} parent=5 // pred_check_branch
        %399 = sbr.rel (%p396) target = $region64
      $region63: #{tpu_custom_call.1} parent=5 // pred_region
        %s400 = ssub.s32 %s25, 1
        %s401 = sand.u32 %s38, 1
        %s402 = scalar_lea.sflag [#allocation3], %s401
        %s403 = sand.u32 %s38, 1
        %s404 = smul.addr %s403, 8
        %s405 = scalar_lea.vmem [#allocation2], %s404
        // Predicated region
        $region65: #{tpu_custom_call.1} parent=63 // pred_check
          %p406 = pneg %p51
        $region66: #{tpu_custom_call.1} parent=63 // pred_check_branch
          %408 = sbr.rel (%p406) target = $region68
        $region67: #{tpu_custom_call.1} parent=63 // pred_region
          %409 = dma.done %s402, 128
        $region68: #{tpu_custom_call.1} parent=63 // pred_fallthru
          _
        // Predicated region
        $region69: #{tpu_custom_call.1} parent=63 // pred_check
          %p410 = pneg %p72
        $region70: #{tpu_custom_call.1} parent=63 // pred_check_branch
          %412 = sbr.rel (%p410) target = $region72
        $region71: #{tpu_custom_call.1} parent=63 // pred_region
          %413 = dma.done [#allocation6], 2048
        $region72: #{tpu_custom_call.1} parent=63 // pred_fallthru
          _
        // Predicated region
        $region73: #{tpu_custom_call.1} parent=63 // pred_check
          %p414 = pneg %p114
        $region74: #{tpu_custom_call.1} parent=63 // pred_check_branch
          %416 = sbr.rel (%p414) target = $region76
        $region75: #{tpu_custom_call.1} parent=63 // pred_region
          %417 = dma.done [#allocation6], 6144
        $region76: #{tpu_custom_call.1} parent=63 // pred_fallthru
          _
        // Predicated region
        $region77: #{tpu_custom_call.1} parent=63 // pred_check
          %p418 = pneg %p156
        $region78: #{tpu_custom_call.1} parent=63 // pred_check_branch
          %420 = sbr.rel (%p418) target = $region80
        $region79: #{tpu_custom_call.1} parent=63 // pred_region
          %421 = dma.done [#allocation9], 6144
        $region80: #{tpu_custom_call.1} parent=63 // pred_fallthru
          _
        // Predicated region
        $region81: #{tpu_custom_call.1} parent=63 // pred_check
          %p422 = pneg %p240
        $region82: #{tpu_custom_call.1} parent=63 // pred_check_branch
          %424 = sbr.rel (%p422) target = $region84
        $region83: #{tpu_custom_call.1} parent=63 // pred_region
          %425 = dma.done [#allocation9], 2048
        $region84: #{tpu_custom_call.1} parent=63 // pred_fallthru
          _
        %s426 = sand.u32 %s38, 1
        %s427 = scalar_lea.sflag [#allocation3], %s426
        %s428 = sand.u32 %s38, 1
        %s429 = smul.addr %s428, 8
        %s430 = scalar_lea.vmem [#allocation2], %s429
        %p431 = pneg %p51
        %p432 = pneg %p48
        %p433 = pneg %p72
        %p434 = pneg %p69
        %p435 = pneg %p93
        %p436 = pneg %p90
        %p437 = pneg %p114
        %p438 = pneg %p111
        %p439 = pneg %p135
        %p440 = pneg %p132
        %p441 = pneg %p156
        %p442 = pneg %p153
        %p443 = pneg %p177
        %p444 = pneg %p174
        %p445 = pneg %p198
        %p446 = pneg %p195
        %p447 = pneg %p219
        %p448 = pneg %p216
        %p449 = pneg %p240
        %p450 = pneg %p237
        %p451 = pneg %p261
        %p452 = pneg %p258
        %p453 = pneg %p287
        %p454 = pneg %p284
        %s455 = sand.u32 %s274, 1
        %s456 = scalar_lea.sflag [#allocation4], %s455
        %s457 = sand.u32 %s274, 1
        %s458 = smul.addr %s457, 8
        %s459 = scalar_lea.vmem [#allocation11], %s458
        %v460 = vld [vmem:[%s405] sm:$0xff]
        %v461 = vld [vmem:[#allocation5] sm:$0xff]
        %v462 = vld [vmem:[#allocation5 + $0x8] sm:$0xff]
        %v463 = vld [vmem:[#allocation5 + $0x10] sm:$0xff]
        %v464 = vld [vmem:[#allocation5 + $0x18] sm:$0xff]
        %v465 = vld [vmem:[#allocation5 + $0x20] sm:$0xff]
        %v466 = vld [vmem:[#allocation5 + $0x28] sm:$0xff]
        %v467 = vld [vmem:[#allocation5 + $0x30] sm:$0xff]
        %v468 = vld [vmem:[#allocation5 + $0x38] sm:$0xff]
        %v469 = vld [vmem:[#allocation5 + $0x40] sm:$0xff]
        %v470 = vld [vmem:[#allocation5 + $0x48] sm:$0xff]
        %v471 = vld [vmem:[#allocation5 + $0x50] sm:$0xff]
        %v472 = vld [vmem:[#allocation5 + $0x58] sm:$0xff]
        %v473 = vld [vmem:[#allocation5 + $0x60] sm:$0xff]
        %v474 = vld [vmem:[#allocation5 + $0x68] sm:$0xff]
        %v475 = vld [vmem:[#allocation5 + $0x70] sm:$0xff]
        %v476 = vld [vmem:[#allocation5 + $0x78] sm:$0xff]
        %v477 = vld [vmem:[%s2] sm:$0x1]
        %v479 = vlaneseq
        %v480 = vshrl.u32 %v479, 7
        %v481 = vsub.s32 0, %v480
        %v482 = vrot.slane %v477, %v481
        %484 = vmatprep.subr.mxu0 0.0
        %485 = vmatpush1.msra.mxu0 %v476
        %486 = vmatprep.subr.mxu0 0.0
        %487 = vmatpush1.msra.mxu0 %v475
        %488 = vmatprep.subr.mxu0 0.0
        %489 = vmatpush1.msra.mxu0 %v474
        %490 = vmatprep.subr.mxu0 0.0
        %491 = vmatpush1.msra.mxu0 %v473
        %492 = vmatprep.subr.mxu0 0.0
        %493 = vmatpush1.msra.mxu0 %v472
        %494 = vmatprep.subr.mxu0 0.0
        %495 = vmatpush1.msra.mxu0 %v471
        %496 = vmatprep.subr.mxu0 0.0
        %497 = vmatpush1.msra.mxu0 %v470
        %498 = vmatprep.subr.mxu0 0.0
        %499 = vmatpush1.msra.mxu0 %v469
        %500 = vmatprep.subr.mxu0 0.0
        %501 = vmatpush1.msra.mxu0 %v468
        %502 = vmatprep.subr.mxu0 0.0
        %503 = vmatpush1.msra.mxu0 %v467
        %504 = vmatprep.subr.mxu0 0.0
        %505 = vmatpush1.msra.mxu0 %v466
        %506 = vmatprep.subr.mxu0 0.0
        %507 = vmatpush1.msra.mxu0 %v465
        %508 = vmatprep.subr.mxu0 0.0
        %509 = vmatpush1.msra.mxu0 %v464
        %510 = vmatprep.subr.mxu0 0.0
        %511 = vmatpush1.msra.mxu0 %v463
        %512 = vmatprep.subr.mxu0 0.0
        %513 = vmatpush1.msra.mxu0 %v462
        %514 = vmatprep.subr.mxu0 0.0
        %515 = vmatpush1.msra.mxu0 %v461
        %516 = vmatprep.subr.mxu0 0.0
        %517 = vmatpush2.msra.mxu0 0.0
        %518 = vmatprep.subr.mxu0 0.0
        %519 = vmatpush2.msra.mxu0 0.0
        %520 = vmatprep.subr.mxu0 0.0
        %521 = vmatpush2.msra.mxu0 0.0
        %522 = vmatprep.subr.mxu0 0.0
        %523 = vmatpush2.msra.mxu0 0.0
        %524 = vmatprep.subr.mxu0 0.0
        %525 = vmatpush2.msra.mxu0 0.0
        %526 = vmatprep.subr.mxu0 0.0
        %527 = vmatpush2.msra.mxu0 0.0
        %528 = vmatprep.subr.mxu0 0.0
        %529 = vmatpush2.msra.mxu0 0.0
        %530 = vmatprep.subr.mxu0 0.0
        %531 = vmatpush2.msra.mxu0 0.0
        %532 = vmatprep.subr.mxu0 0.0
        %533 = vmatpush2.msra.mxu0 0.0
        %534 = vmatprep.subr.mxu0 0.0
        %535 = vmatpush2.msra.mxu0 0.0
        %536 = vmatprep.subr.mxu0 0.0
        %537 = vmatpush2.msra.mxu0 0.0
        %538 = vmatprep.subr.mxu0 0.0
        %539 = vmatpush2.msra.mxu0 0.0
        %540 = vmatprep.subr.mxu0 0.0
        %541 = vmatpush2.msra.mxu0 0.0
        %542 = vmatprep.subr.mxu0 0.0
        %543 = vmatpush2.msra.mxu0 0.0
        %544 = vmatprep.subr.mxu0 0.0
        %545 = vmatpush2.msra.mxu0 0.0
        %546 = vmatprep.subr.mxu0 0.0
        %547 = vmatpush2.msra.mxu0 0.0
        %548 = vmatprep.mubr.f32.mxu0 0.0
        %549 = vmatmul.mubr.f32.gmra.mxu0 %v460
        %v550 = vpop.f32.mrf.mxu0
        %v551 = vadd.f32 %v482, %v550
        %v552 = vpop.f32.mrf.mxu0
        %553 = vdwg.mxu0
        %v554 = vld [vmem:[#allocation7] sm:$0xff]
        %v555 = vld [vmem:[#allocation7 + $0x8] sm:$0xff]
        %v556 = vld [vmem:[#allocation7 + $0x10] sm:$0xff]
        %v557 = vld [vmem:[#allocation7 + $0x18] sm:$0xff]
        %v558 = vld [vmem:[#allocation7 + $0x20] sm:$0xff]
        %v559 = vld [vmem:[#allocation7 + $0x28] sm:$0xff]
        %v560 = vld [vmem:[#allocation7 + $0x30] sm:$0xff]
        %v561 = vld [vmem:[#allocation7 + $0x38] sm:$0xff]
        %v562 = vld [vmem:[#allocation7 + $0x40] sm:$0xff]
        %v563 = vld [vmem:[#allocation7 + $0x48] sm:$0xff]
        %v564 = vld [vmem:[#allocation7 + $0x50] sm:$0xff]
        %v565 = vld [vmem:[#allocation7 + $0x58] sm:$0xff]
        %v566 = vld [vmem:[#allocation7 + $0x60] sm:$0xff]
        %v567 = vld [vmem:[#allocation7 + $0x68] sm:$0xff]
        %v568 = vld [vmem:[#allocation7 + $0x70] sm:$0xff]
        %v569 = vld [vmem:[#allocation7 + $0x78] sm:$0xff]
        %v570 = vld [vmem:[%s4] sm:$0x1]
        %v572 = vlaneseq
        %v573 = vshrl.u32 %v572, 7
        %v574 = vsub.s32 0, %v573
        %v575 = vrot.slane %v570, %v574
        %577 = vmatprep.subr.mxu0 0.0
        %578 = vmatpush1.msra.mxu0 %v569
        %579 = vmatprep.subr.mxu0 0.0
        %580 = vmatpush1.msra.mxu0 %v568
        %581 = vmatprep.subr.mxu0 0.0
        %582 = vmatpush1.msra.mxu0 %v567
        %583 = vmatprep.subr.mxu0 0.0
        %584 = vmatpush1.msra.mxu0 %v566
        %585 = vmatprep.subr.mxu0 0.0
        %586 = vmatpush1.msra.mxu0 %v565
        %587 = vmatprep.subr.mxu0 0.0
        %588 = vmatpush1.msra.mxu0 %v564
        %589 = vmatprep.subr.mxu0 0.0
        %590 = vmatpush1.msra.mxu0 %v563
        %591 = vmatprep.subr.mxu0 0.0
        %592 = vmatpush1.msra.mxu0 %v562
        %593 = vmatprep.subr.mxu0 0.0
        %594 = vmatpush1.msra.mxu0 %v561
        %595 = vmatprep.subr.mxu0 0.0
        %596 = vmatpush1.msra.mxu0 %v560
        %597 = vmatprep.subr.mxu0 0.0
        %598 = vmatpush1.msra.mxu0 %v559
        %599 = vmatprep.subr.mxu0 0.0
        %600 = vmatpush1.msra.mxu0 %v558
        %601 = vmatprep.subr.mxu0 0.0
        %602 = vmatpush1.msra.mxu0 %v557
        %603 = vmatprep.subr.mxu0 0.0
        %604 = vmatpush1.msra.mxu0 %v556
        %605 = vmatprep.subr.mxu0 0.0
        %606 = vmatpush1.msra.mxu0 %v555
        %607 = vmatprep.subr.mxu0 0.0
        %608 = vmatpush1.msra.mxu0 %v554
        %609 = vmatprep.subr.mxu0 0.0
        %610 = vmatpush2.msra.mxu0 0.0
        %611 = vmatprep.subr.mxu0 0.0
        %612 = vmatpush2.msra.mxu0 0.0
        %613 = vmatprep.subr.mxu0 0.0
        %614 = vmatpush2.msra.mxu0 0.0
        %615 = vmatprep.subr.mxu0 0.0
        %616 = vmatpush2.msra.mxu0 0.0
        %617 = vmatprep.subr.mxu0 0.0
        %618 = vmatpush2.msra.mxu0 0.0
        %619 = vmatprep.subr.mxu0 0.0
        %620 = vmatpush2.msra.mxu0 0.0
        %621 = vmatprep.subr.mxu0 0.0
        %622 = vmatpush2.msra.mxu0 0.0
        %623 = vmatprep.subr.mxu0 0.0
        %624 = vmatpush2.msra.mxu0 0.0
        %625 = vmatprep.subr.mxu0 0.0
        %626 = vmatpush2.msra.mxu0 0.0
        %627 = vmatprep.subr.mxu0 0.0
        %628 = vmatpush2.msra.mxu0 0.0
        %629 = vmatprep.subr.mxu0 0.0
        %630 = vmatpush2.msra.mxu0 0.0
        %631 = vmatprep.subr.mxu0 0.0
        %632 = vmatpush2.msra.mxu0 0.0
        %633 = vmatprep.subr.mxu0 0.0
        %634 = vmatpush2.msra.mxu0 0.0
        %635 = vmatprep.subr.mxu0 0.0
        %636 = vmatpush2.msra.mxu0 0.0
        %637 = vmatprep.subr.mxu0 0.0
        %638 = vmatpush2.msra.mxu0 0.0
        %639 = vmatprep.subr.mxu0 0.0
        %640 = vmatpush2.msra.mxu0 0.0
        %641 = vmatprep.mubr.f32.mxu0 0.0
        %642 = vmatmul.mubr.f32.gmra.mxu0 %v551
        %v643 = vpop.f32.mrf.mxu0
        %v644 = vadd.f32 %v575, %v643
        %v645 = vpop.f32.mrf.mxu0
        %646 = vdwg.mxu0
        %v647 = vmax.f32 %v644, 0.0
        %v648 = vld [vmem:[#allocation8] sm:$0xff]
        %v649 = vld [vmem:[#allocation8 + $0x8] sm:$0xff]
        %v650 = vld [vmem:[#allocation8 + $0x10] sm:$0xff]
        %v651 = vld [vmem:[#allocation8 + $0x18] sm:$0xff]
        %v652 = vld [vmem:[#allocation8 + $0x20] sm:$0xff]
        %v653 = vld [vmem:[#allocation8 + $0x28] sm:$0xff]
        %v654 = vld [vmem:[#allocation8 + $0x30] sm:$0xff]
        %v655 = vld [vmem:[#allocation8 + $0x38] sm:$0xff]
        %v656 = vld [vmem:[#allocation8 + $0x40] sm:$0xff]
        %v657 = vld [vmem:[#allocation8 + $0x48] sm:$0xff]
        %v658 = vld [vmem:[#allocation8 + $0x50] sm:$0xff]
        %v659 = vld [vmem:[#allocation8 + $0x58] sm:$0xff]
        %v660 = vld [vmem:[#allocation8 + $0x60] sm:$0xff]
        %v661 = vld [vmem:[#allocation8 + $0x68] sm:$0xff]
        %v662 = vld [vmem:[#allocation8 + $0x70] sm:$0xff]
        %v663 = vld [vmem:[#allocation8 + $0x78] sm:$0xff]
        %v664 = vld [vmem:[%s6] sm:$0x1]
        %v666 = vlaneseq
        %v667 = vshrl.u32 %v666, 7
        %v668 = vsub.s32 0, %v667
        %v669 = vrot.slane %v664, %v668
        %671 = vmatprep.subr.mxu0 0.0
        %672 = vmatpush1.msra.mxu0 %v663
        %673 = vmatprep.subr.mxu0 0.0
        %674 = vmatpush1.msra.mxu0 %v662
        %675 = vmatprep.subr.mxu0 0.0
        %676 = vmatpush1.msra.mxu0 %v661
        %677 = vmatprep.subr.mxu0 0.0
        %678 = vmatpush1.msra.mxu0 %v660
        %679 = vmatprep.subr.mxu0 0.0
        %680 = vmatpush1.msra.mxu0 %v659
        %681 = vmatprep.subr.mxu0 0.0
        %682 = vmatpush1.msra.mxu0 %v658
        %683 = vmatprep.subr.mxu0 0.0
        %684 = vmatpush1.msra.mxu0 %v657
        %685 = vmatprep.subr.mxu0 0.0
        %686 = vmatpush1.msra.mxu0 %v656
        %687 = vmatprep.subr.mxu0 0.0
        %688 = vmatpush1.msra.mxu0 %v655
        %689 = vmatprep.subr.mxu0 0.0
        %690 = vmatpush1.msra.mxu0 %v654
        %691 = vmatprep.subr.mxu0 0.0
        %692 = vmatpush1.msra.mxu0 %v653
        %693 = vmatprep.subr.mxu0 0.0
        %694 = vmatpush1.msra.mxu0 %v652
        %695 = vmatprep.subr.mxu0 0.0
        %696 = vmatpush1.msra.mxu0 %v651
        %697 = vmatprep.subr.mxu0 0.0
        %698 = vmatpush1.msra.mxu0 %v650
        %699 = vmatprep.subr.mxu0 0.0
        %700 = vmatpush1.msra.mxu0 %v649
        %701 = vmatprep.subr.mxu0 0.0
        %702 = vmatpush1.msra.mxu0 %v648
        %703 = vmatprep.subr.mxu0 0.0
        %704 = vmatpush2.msra.mxu0 0.0
        %705 = vmatprep.subr.mxu0 0.0
        %706 = vmatpush2.msra.mxu0 0.0
        %707 = vmatprep.subr.mxu0 0.0
        %708 = vmatpush2.msra.mxu0 0.0
        %709 = vmatprep.subr.mxu0 0.0
        %710 = vmatpush2.msra.mxu0 0.0
        %711 = vmatprep.subr.mxu0 0.0
        %712 = vmatpush2.msra.mxu0 0.0
        %713 = vmatprep.subr.mxu0 0.0
        %714 = vmatpush2.msra.mxu0 0.0
        %715 = vmatprep.subr.mxu0 0.0
        %716 = vmatpush2.msra.mxu0 0.0
        %717 = vmatprep.subr.mxu0 0.0
        %718 = vmatpush2.msra.mxu0 0.0
        %719 = vmatprep.subr.mxu0 0.0
        %720 = vmatpush2.msra.mxu0 0.0
        %721 = vmatprep.subr.mxu0 0.0
        %722 = vmatpush2.msra.mxu0 0.0
        %723 = vmatprep.subr.mxu0 0.0
        %724 = vmatpush2.msra.mxu0 0.0
        %725 = vmatprep.subr.mxu0 0.0
        %726 = vmatpush2.msra.mxu0 0.0
        %727 = vmatprep.subr.mxu0 0.0
        %728 = vmatpush2.msra.mxu0 0.0
        %729 = vmatprep.subr.mxu0 0.0
        %730 = vmatpush2.msra.mxu0 0.0
        %731 = vmatprep.subr.mxu0 0.0
        %732 = vmatpush2.msra.mxu0 0.0
        %733 = vmatprep.subr.mxu0 0.0
        %734 = vmatpush2.msra.mxu0 0.0
        %735 = vmatprep.mubr.f32.mxu0 0.0
        %736 = vmatmul.mubr.f32.gmra.mxu0 %v647
        %v737 = vpop.f32.mrf.mxu0
        %v738 = vadd.f32 %v669, %v737
        %v739 = vpop.f32.mrf.mxu0
        %740 = vdwg.mxu0
        %v741 = vadd.f32 %v551, %v738
        %s742 = scalar_lea.vmem [#allocation7], 128
        %v743 = vld [vmem:[%s742] sm:$0xff]
        %v744 = vld [vmem:[%s742 + $0x8] sm:$0xff]
        %v745 = vld [vmem:[%s742 + $0x10] sm:$0xff]
        %v746 = vld [vmem:[%s742 + $0x18] sm:$0xff]
        %v747 = vld [vmem:[%s742 + $0x20] sm:$0xff]
        %v748 = vld [vmem:[%s742 + $0x28] sm:$0xff]
        %v749 = vld [vmem:[%s742 + $0x30] sm:$0xff]
        %v750 = vld [vmem:[%s742 + $0x38] sm:$0xff]
        %v751 = vld [vmem:[%s742 + $0x40] sm:$0xff]
        %v752 = vld [vmem:[%s742 + $0x48] sm:$0xff]
        %v753 = vld [vmem:[%s742 + $0x50] sm:$0xff]
        %v754 = vld [vmem:[%s742 + $0x58] sm:$0xff]
        %v755 = vld [vmem:[%s742 + $0x60] sm:$0xff]
        %v756 = vld [vmem:[%s742 + $0x68] sm:$0xff]
        %v757 = vld [vmem:[%s742 + $0x70] sm:$0xff]
        %v758 = vld [vmem:[%s742 + $0x78] sm:$0xff]
        %s759 = scalar_lea.vmem %s4, 1
        %v760 = vld [vmem:[%s759] sm:$0x1]
        %v762 = vlaneseq
        %v763 = vshrl.u32 %v762, 7
        %v764 = vsub.s32 0, %v763
        %v765 = vrot.slane %v760, %v764
        %767 = vmatprep.subr.mxu0 0.0
        %768 = vmatpush1.msra.mxu0 %v758
        %769 = vmatprep.subr.mxu0 0.0
        %770 = vmatpush1.msra.mxu0 %v757
        %771 = vmatprep.subr.mxu0 0.0
        %772 = vmatpush1.msra.mxu0 %v756
        %773 = vmatprep.subr.mxu0 0.0
        %774 = vmatpush1.msra.mxu0 %v755
        %775 = vmatprep.subr.mxu0 0.0
        %776 = vmatpush1.msra.mxu0 %v754
        %777 = vmatprep.subr.mxu0 0.0
        %778 = vmatpush1.msra.mxu0 %v753
        %779 = vmatprep.subr.mxu0 0.0
        %780 = vmatpush1.msra.mxu0 %v752
        %781 = vmatprep.subr.mxu0 0.0
        %782 = vmatpush1.msra.mxu0 %v751
        %783 = vmatprep.subr.mxu0 0.0
        %784 = vmatpush1.msra.mxu0 %v750
        %785 = vmatprep.subr.mxu0 0.0
        %786 = vmatpush1.msra.mxu0 %v749
        %787 = vmatprep.subr.mxu0 0.0
        %788 = vmatpush1.msra.mxu0 %v748
        %789 = vmatprep.subr.mxu0 0.0
        %790 = vmatpush1.msra.mxu0 %v747
        %791 = vmatprep.subr.mxu0 0.0
        %792 = vmatpush1.msra.mxu0 %v746
        %793 = vmatprep.subr.mxu0 0.0
        %794 = vmatpush1.msra.mxu0 %v745
        %795 = vmatprep.subr.mxu0 0.0
        %796 = vmatpush1.msra.mxu0 %v744
        %797 = vmatprep.subr.mxu0 0.0
        %798 = vmatpush1.msra.mxu0 %v743
        %799 = vmatprep.subr.mxu0 0.0
        %800 = vmatpush2.msra.mxu0 0.0
        %801 = vmatprep.subr.mxu0 0.0
        %802 = vmatpush2.msra.mxu0 0.0
        %803 = vmatprep.subr.mxu0 0.0
        %804 = vmatpush2.msra.mxu0 0.0
        %805 = vmatprep.subr.mxu0 0.0
        %806 = vmatpush2.msra.mxu0 0.0
        %807 = vmatprep.subr.mxu0 0.0
        %808 = vmatpush2.msra.mxu0 0.0
        %809 = vmatprep.subr.mxu0 0.0
        %810 = vmatpush2.msra.mxu0 0.0
        %811 = vmatprep.subr.mxu0 0.0
        %812 = vmatpush2.msra.mxu0 0.0
        %813 = vmatprep.subr.mxu0 0.0
        %814 = vmatpush2.msra.mxu0 0.0
        %815 = vmatprep.subr.mxu0 0.0
        %816 = vmatpush2.msra.mxu0 0.0
        %817 = vmatprep.subr.mxu0 0.0
        %818 = vmatpush2.msra.mxu0 0.0
        %819 = vmatprep.subr.mxu0 0.0
        %820 = vmatpush2.msra.mxu0 0.0
        %821 = vmatprep.subr.mxu0 0.0
        %822 = vmatpush2.msra.mxu0 0.0
        %823 = vmatprep.subr.mxu0 0.0
        %824 = vmatpush2.msra.mxu0 0.0
        %825 = vmatprep.subr.mxu0 0.0
        %826 = vmatpush2.msra.mxu0 0.0
        %827 = vmatprep.subr.mxu0 0.0
        %828 = vmatpush2.msra.mxu0 0.0
        %829 = vmatprep.subr.mxu0 0.0
        %830 = vmatpush2.msra.mxu0 0.0
        %831 = vmatprep.mubr.f32.mxu0 0.0
        %832 = vmatmul.mubr.f32.gmra.mxu0 %v741
        %v833 = vpop.f32.mrf.mxu0
        %v834 = vadd.f32 %v765, %v833
        %v835 = vpop.f32.mrf.mxu0
        %836 = vdwg.mxu0
        %v837 = vmax.f32 %v834, 0.0
        %s838 = scalar_lea.vmem [#allocation8], 128
        %v839 = vld [vmem:[%s838] sm:$0xff]
        %v840 = vld [vmem:[%s838 + $0x8] sm:$0xff]
        %v841 = vld [vmem:[%s838 + $0x10] sm:$0xff]
        %v842 = vld [vmem:[%s838 + $0x18] sm:$0xff]
        %v843 = vld [vmem:[%s838 + $0x20] sm:$0xff]
        %v844 = vld [vmem:[%s838 + $0x28] sm:$0xff]
        %v845 = vld [vmem:[%s838 + $0x30] sm:$0xff]
        %v846 = vld [vmem:[%s838 + $0x38] sm:$0xff]
        %v847 = vld [vmem:[%s838 + $0x40] sm:$0xff]
        %v848 = vld [vmem:[%s838 + $0x48] sm:$0xff]
        %v849 = vld [vmem:[%s838 + $0x50] sm:$0xff]
        %v850 = vld [vmem:[%s838 + $0x58] sm:$0xff]
        %v851 = vld [vmem:[%s838 + $0x60] sm:$0xff]
        %v852 = vld [vmem:[%s838 + $0x68] sm:$0xff]
        %v853 = vld [vmem:[%s838 + $0x70] sm:$0xff]
        %v854 = vld [vmem:[%s838 + $0x78] sm:$0xff]
        %s855 = scalar_lea.vmem %s6, 1
        %v856 = vld [vmem:[%s855] sm:$0x1]
        %v858 = vlaneseq
        %v859 = vshrl.u32 %v858, 7
        %v860 = vsub.s32 0, %v859
        %v861 = vrot.slane %v856, %v860
        %863 = vmatprep.subr.mxu0 0.0
        %864 = vmatpush1.msra.mxu0 %v854
        %865 = vmatprep.subr.mxu0 0.0
        %866 = vmatpush1.msra.mxu0 %v853
        %867 = vmatprep.subr.mxu0 0.0
        %868 = vmatpush1.msra.mxu0 %v852
        %869 = vmatprep.subr.mxu0 0.0
        %870 = vmatpush1.msra.mxu0 %v851
        %871 = vmatprep.subr.mxu0 0.0
        %872 = vmatpush1.msra.mxu0 %v850
        %873 = vmatprep.subr.mxu0 0.0
        %874 = vmatpush1.msra.mxu0 %v849
        %875 = vmatprep.subr.mxu0 0.0
        %876 = vmatpush1.msra.mxu0 %v848
        %877 = vmatprep.subr.mxu0 0.0
        %878 = vmatpush1.msra.mxu0 %v847
        %879 = vmatprep.subr.mxu0 0.0
        %880 = vmatpush1.msra.mxu0 %v846
        %881 = vmatprep.subr.mxu0 0.0
        %882 = vmatpush1.msra.mxu0 %v845
        %883 = vmatprep.subr.mxu0 0.0
        %884 = vmatpush1.msra.mxu0 %v844
        %885 = vmatprep.subr.mxu0 0.0
        %886 = vmatpush1.msra.mxu0 %v843
        %887 = vmatprep.subr.mxu0 0.0
        %888 = vmatpush1.msra.mxu0 %v842
        %889 = vmatprep.subr.mxu0 0.0
        %890 = vmatpush1.msra.mxu0 %v841
        %891 = vmatprep.subr.mxu0 0.0
        %892 = vmatpush1.msra.mxu0 %v840
        %893 = vmatprep.subr.mxu0 0.0
        %894 = vmatpush1.msra.mxu0 %v839
        %895 = vmatprep.subr.mxu0 0.0
        %896 = vmatpush2.msra.mxu0 0.0
        %897 = vmatprep.subr.mxu0 0.0
        %898 = vmatpush2.msra.mxu0 0.0
        %899 = vmatprep.subr.mxu0 0.0
        %900 = vmatpush2.msra.mxu0 0.0
        %901 = vmatprep.subr.mxu0 0.0
        %902 = vmatpush2.msra.mxu0 0.0
        %903 = vmatprep.subr.mxu0 0.0
        %904 = vmatpush2.msra.mxu0 0.0
        %905 = vmatprep.subr.mxu0 0.0
        %906 = vmatpush2.msra.mxu0 0.0
        %907 = vmatprep.subr.mxu0 0.0
        %908 = vmatpush2.msra.mxu0 0.0
        %909 = vmatprep.subr.mxu0 0.0
        %910 = vmatpush2.msra.mxu0 0.0
        %911 = vmatprep.subr.mxu0 0.0
        %912 = vmatpush2.msra.mxu0 0.0
        %913 = vmatprep.subr.mxu0 0.0
        %914 = vmatpush2.msra.mxu0 0.0
        %915 = vmatprep.subr.mxu0 0.0
        %916 = vmatpush2.msra.mxu0 0.0
        %917 = vmatprep.subr.mxu0 0.0
        %918 = vmatpush2.msra.mxu0 0.0
        %919 = vmatprep.subr.mxu0 0.0
        %920 = vmatpush2.msra.mxu0 0.0
        %921 = vmatprep.subr.mxu0 0.0
        %922 = vmatpush2.msra.mxu0 0.0
        %923 = vmatprep.subr.mxu0 0.0
        %924 = vmatpush2.msra.mxu0 0.0
        %925 = vmatprep.subr.mxu0 0.0
        %926 = vmatpush2.msra.mxu0 0.0
        %927 = vmatprep.mubr.f32.mxu0 0.0
        %928 = vmatmul.mubr.f32.gmra.mxu0 %v837
        %v929 = vpop.f32.mrf.mxu0
        %v930 = vadd.f32 %v861, %v929
        %v931 = vpop.f32.mrf.mxu0
        %932 = vdwg.mxu0
        %v933 = vadd.f32 %v741, %v930
        %s934 = scalar_lea.vmem [#allocation7], 256
        %v935 = vld [vmem:[%s934] sm:$0xff]
        %v936 = vld [vmem:[%s934 + $0x8] sm:$0xff]
        %v937 = vld [vmem:[%s934 + $0x10] sm:$0xff]
        %v938 = vld [vmem:[%s934 + $0x18] sm:$0xff]
        %v939 = vld [vmem:[%s934 + $0x20] sm:$0xff]
        %v940 = vld [vmem:[%s934 + $0x28] sm:$0xff]
        %v941 = vld [vmem:[%s934 + $0x30] sm:$0xff]
        %v942 = vld [vmem:[%s934 + $0x38] sm:$0xff]
        %v943 = vld [vmem:[%s934 + $0x40] sm:$0xff]
        %v944 = vld [vmem:[%s934 + $0x48] sm:$0xff]
        %v945 = vld [vmem:[%s934 + $0x50] sm:$0xff]
        %v946 = vld [vmem:[%s934 + $0x58] sm:$0xff]
        %v947 = vld [vmem:[%s934 + $0x60] sm:$0xff]
        %v948 = vld [vmem:[%s934 + $0x68] sm:$0xff]
        %v949 = vld [vmem:[%s934 + $0x70] sm:$0xff]
        %v950 = vld [vmem:[%s934 + $0x78] sm:$0xff]
        %s951 = scalar_lea.vmem %s4, 2
        %v952 = vld [vmem:[%s951] sm:$0x1]
        %v954 = vlaneseq
        %v955 = vshrl.u32 %v954, 7
        %v956 = vsub.s32 0, %v955
        %v957 = vrot.slane %v952, %v956
        %959 = vmatprep.subr.mxu0 0.0
        %960 = vmatpush1.msra.mxu0 %v950
        %961 = vmatprep.subr.mxu0 0.0
        %962 = vmatpush1.msra.mxu0 %v949
        %963 = vmatprep.subr.mxu0 0.0
        %964 = vmatpush1.msra.mxu0 %v948
        %965 = vmatprep.subr.mxu0 0.0
        %966 = vmatpush1.msra.mxu0 %v947
        %967 = vmatprep.subr.mxu0 0.0
        %968 = vmatpush1.msra.mxu0 %v946
        %969 = vmatprep.subr.mxu0 0.0
        %970 = vmatpush1.msra.mxu0 %v945
        %971 = vmatprep.subr.mxu0 0.0
        %972 = vmatpush1.msra.mxu0 %v944
        %973 = vmatprep.subr.mxu0 0.0
        %974 = vmatpush1.msra.mxu0 %v943
        %975 = vmatprep.subr.mxu0 0.0
        %976 = vmatpush1.msra.mxu0 %v942
        %977 = vmatprep.subr.mxu0 0.0
        %978 = vmatpush1.msra.mxu0 %v941
        %979 = vmatprep.subr.mxu0 0.0
        %980 = vmatpush1.msra.mxu0 %v940
        %981 = vmatprep.subr.mxu0 0.0
        %982 = vmatpush1.msra.mxu0 %v939
        %983 = vmatprep.subr.mxu0 0.0
        %984 = vmatpush1.msra.mxu0 %v938
        %985 = vmatprep.subr.mxu0 0.0
        %986 = vmatpush1.msra.mxu0 %v937
        %987 = vmatprep.subr.mxu0 0.0
        %988 = vmatpush1.msra.mxu0 %v936
        %989 = vmatprep.subr.mxu0 0.0
        %990 = vmatpush1.msra.mxu0 %v935
        %991 = vmatprep.subr.mxu0 0.0
        %992 = vmatpush2.msra.mxu0 0.0
        %993 = vmatprep.subr.mxu0 0.0
        %994 = vmatpush2.msra.mxu0 0.0
        %995 = vmatprep.subr.mxu0 0.0
        %996 = vmatpush2.msra.mxu0 0.0
        %997 = vmatprep.subr.mxu0 0.0
        %998 = vmatpush2.msra.mxu0 0.0
        %999 = vmatprep.subr.mxu0 0.0
        %1000 = vmatpush2.msra.mxu0 0.0
        %1001 = vmatprep.subr.mxu0 0.0
        %1002 = vmatpush2.msra.mxu0 0.0
        %1003 = vmatprep.subr.mxu0 0.0
        %1004 = vmatpush2.msra.mxu0 0.0
        %1005 = vmatprep.subr.mxu0 0.0
        %1006 = vmatpush2.msra.mxu0 0.0
        %1007 = vmatprep.subr.mxu0 0.0
        %1008 = vmatpush2.msra.mxu0 0.0
        %1009 = vmatprep.subr.mxu0 0.0
        %1010 = vmatpush2.msra.mxu0 0.0
        %1011 = vmatprep.subr.mxu0 0.0
        %1012 = vmatpush2.msra.mxu0 0.0
        %1013 = vmatprep.subr.mxu0 0.0
        %1014 = vmatpush2.msra.mxu0 0.0
        %1015 = vmatprep.subr.mxu0 0.0
        %1016 = vmatpush2.msra.mxu0 0.0
        %1017 = vmatprep.subr.mxu0 0.0
        %1018 = vmatpush2.msra.mxu0 0.0
        %1019 = vmatprep.subr.mxu0 0.0
        %1020 = vmatpush2.msra.mxu0 0.0
        %1021 = vmatprep.subr.mxu0 0.0
        %1022 = vmatpush2.msra.mxu0 0.0
        %1023 = vmatprep.mubr.f32.mxu0 0.0
        %1024 = vmatmul.mubr.f32.gmra.mxu0 %v933
        %v1025 = vpop.f32.mrf.mxu0
        %v1026 = vadd.f32 %v957, %v1025
        %v1027 = vpop.f32.mrf.mxu0
        %1028 = vdwg.mxu0
        %v1029 = vmax.f32 %v1026, 0.0
        %s1030 = scalar_lea.vmem [#allocation8], 256
        %v1031 = vld [vmem:[%s1030] sm:$0xff]
        %v1032 = vld [vmem:[%s1030 + $0x8] sm:$0xff]
        %v1033 = vld [vmem:[%s1030 + $0x10] sm:$0xff]
        %v1034 = vld [vmem:[%s1030 + $0x18] sm:$0xff]
        %v1035 = vld [vmem:[%s1030 + $0x20] sm:$0xff]
        %v1036 = vld [vmem:[%s1030 + $0x28] sm:$0xff]
        %v1037 = vld [vmem:[%s1030 + $0x30] sm:$0xff]
        %v1038 = vld [vmem:[%s1030 + $0x38] sm:$0xff]
        %v1039 = vld [vmem:[%s1030 + $0x40] sm:$0xff]
        %v1040 = vld [vmem:[%s1030 + $0x48] sm:$0xff]
        %v1041 = vld [vmem:[%s1030 + $0x50] sm:$0xff]
        %v1042 = vld [vmem:[%s1030 + $0x58] sm:$0xff]
        %v1043 = vld [vmem:[%s1030 + $0x60] sm:$0xff]
        %v1044 = vld [vmem:[%s1030 + $0x68] sm:$0xff]
        %v1045 = vld [vmem:[%s1030 + $0x70] sm:$0xff]
        %v1046 = vld [vmem:[%s1030 + $0x78] sm:$0xff]
        %s1047 = scalar_lea.vmem %s6, 2
        %v1048 = vld [vmem:[%s1047] sm:$0x1]
        %v1050 = vlaneseq
        %v1051 = vshrl.u32 %v1050, 7
        %v1052 = vsub.s32 0, %v1051
        %v1053 = vrot.slane %v1048, %v1052
        %1055 = vmatprep.subr.mxu0 0.0
        %1056 = vmatpush1.msra.mxu0 %v1046
        %1057 = vmatprep.subr.mxu0 0.0
        %1058 = vmatpush1.msra.mxu0 %v1045
        %1059 = vmatprep.subr.mxu0 0.0
        %1060 = vmatpush1.msra.mxu0 %v1044
        %1061 = vmatprep.subr.mxu0 0.0
        %1062 = vmatpush1.msra.mxu0 %v1043
        %1063 = vmatprep.subr.mxu0 0.0
        %1064 = vmatpush1.msra.mxu0 %v1042
        %1065 = vmatprep.subr.mxu0 0.0
        %1066 = vmatpush1.msra.mxu0 %v1041
        %1067 = vmatprep.subr.mxu0 0.0
        %1068 = vmatpush1.msra.mxu0 %v1040
        %1069 = vmatprep.subr.mxu0 0.0
        %1070 = vmatpush1.msra.mxu0 %v1039
        %1071 = vmatprep.subr.mxu0 0.0
        %1072 = vmatpush1.msra.mxu0 %v1038
        %1073 = vmatprep.subr.mxu0 0.0
        %1074 = vmatpush1.msra.mxu0 %v1037
        %1075 = vmatprep.subr.mxu0 0.0
        %1076 = vmatpush1.msra.mxu0 %v1036
        %1077 = vmatprep.subr.mxu0 0.0
        %1078 = vmatpush1.msra.mxu0 %v1035
        %1079 = vmatprep.subr.mxu0 0.0
        %1080 = vmatpush1.msra.mxu0 %v1034
        %1081 = vmatprep.subr.mxu0 0.0
        %1082 = vmatpush1.msra.mxu0 %v1033
        %1083 = vmatprep.subr.mxu0 0.0
        %1084 = vmatpush1.msra.mxu0 %v1032
        %1085 = vmatprep.subr.mxu0 0.0
        %1086 = vmatpush1.msra.mxu0 %v1031
        %1087 = vmatprep.subr.mxu0 0.0
        %1088 = vmatpush2.msra.mxu0 0.0
        %1089 = vmatprep.subr.mxu0 0.0
        %1090 = vmatpush2.msra.mxu0 0.0
        %1091 = vmatprep.subr.mxu0 0.0
        %1092 = vmatpush2.msra.mxu0 0.0
        %1093 = vmatprep.subr.mxu0 0.0
        %1094 = vmatpush2.msra.mxu0 0.0
        %1095 = vmatprep.subr.mxu0 0.0
        %1096 = vmatpush2.msra.mxu0 0.0
        %1097 = vmatprep.subr.mxu0 0.0
        %1098 = vmatpush2.msra.mxu0 0.0
        %1099 = vmatprep.subr.mxu0 0.0
        %1100 = vmatpush2.msra.mxu0 0.0
        %1101 = vmatprep.subr.mxu0 0.0
        %1102 = vmatpush2.msra.mxu0 0.0
        %1103 = vmatprep.subr.mxu0 0.0
        %1104 = vmatpush2.msra.mxu0 0.0
        %1105 = vmatprep.subr.mxu0 0.0
        %1106 = vmatpush2.msra.mxu0 0.0
        %1107 = vmatprep.subr.mxu0 0.0
        %1108 = vmatpush2.msra.mxu0 0.0
        %1109 = vmatprep.subr.mxu0 0.0
        %1110 = vmatpush2.msra.mxu0 0.0
        %1111 = vmatprep.subr.mxu0 0.0
        %1112 = vmatpush2.msra.mxu0 0.0
        %1113 = vmatprep.subr.mxu0 0.0
        %1114 = vmatpush2.msra.mxu0 0.0
        %1115 = vmatprep.subr.mxu0 0.0
        %1116 = vmatpush2.msra.mxu0 0.0
        %1117 = vmatprep.subr.mxu0 0.0
        %1118 = vmatpush2.msra.mxu0 0.0
        %1119 = vmatprep.mubr.f32.mxu0 0.0
        %1120 = vmatmul.mubr.f32.gmra.mxu0 %v1029
        %v1121 = vpop.f32.mrf.mxu0
        %v1122 = vadd.f32 %v1053, %v1121
        %v1123 = vpop.f32.mrf.mxu0
        %1124 = vdwg.mxu0
        %v1125 = vadd.f32 %v933, %v1122
        %v1126 = vld [vmem:[%s7] sm:$0x1]
        %v1128 = vlaneseq
        %v1129 = vshrl.u32 %v1128, 7
        %v1130 = vsub.s32 0, %v1129
        %v1131 = vrot.slane %v1126, %v1130
        %v1133 = vmul.f32 %v1125, %v1131
        %v1134 = vld [vmem:[%s8] sm:$0x1]
        %v1136 = vlaneseq
        %v1137 = vshrl.u32 %v1136, 7
        %v1138 = vsub.s32 0, %v1137
        %v1139 = vrot.slane %v1134, %v1138
        %v1141 = vadd.f32 %v1133, %v1139
        %v1142 = vmax.f32 %v1141, 0.0
        %v1143 = vld [vmem:[#allocation10] sm:$0xff]
        %v1144 = vld [vmem:[#allocation10 + $0x8] sm:$0xff]
        %v1145 = vld [vmem:[#allocation10 + $0x10] sm:$0xff]
        %v1146 = vld [vmem:[#allocation10 + $0x18] sm:$0xff]
        %v1147 = vld [vmem:[#allocation10 + $0x20] sm:$0xff]
        %v1148 = vld [vmem:[#allocation10 + $0x28] sm:$0xff]
        %v1149 = vld [vmem:[#allocation10 + $0x30] sm:$0xff]
        %v1150 = vld [vmem:[#allocation10 + $0x38] sm:$0xff]
        %v1151 = vld [vmem:[#allocation10 + $0x40] sm:$0xff]
        %v1152 = vld [vmem:[#allocation10 + $0x48] sm:$0xff]
        %v1153 = vld [vmem:[#allocation10 + $0x50] sm:$0xff]
        %v1154 = vld [vmem:[#allocation10 + $0x58] sm:$0xff]
        %v1155 = vld [vmem:[#allocation10 + $0x60] sm:$0xff]
        %v1156 = vld [vmem:[#allocation10 + $0x68] sm:$0xff]
        %v1157 = vld [vmem:[#allocation10 + $0x70] sm:$0xff]
        %v1158 = vld [vmem:[#allocation10 + $0x78] sm:$0xff]
        %v1159 = vld [vmem:[%s10] sm:$0x1]
        %v1161 = vlaneseq
        %v1162 = vshrl.u32 %v1161, 7
        %v1163 = vsub.s32 0, %v1162
        %v1164 = vrot.slane %v1159, %v1163
        %1166 = vmatprep.subr.mxu0 0.0
        %1167 = vmatpush1.msra.mxu0 %v1158
        %1168 = vmatprep.subr.mxu0 0.0
        %1169 = vmatpush1.msra.mxu0 %v1157
        %1170 = vmatprep.subr.mxu0 0.0
        %1171 = vmatpush1.msra.mxu0 %v1156
        %1172 = vmatprep.subr.mxu0 0.0
        %1173 = vmatpush1.msra.mxu0 %v1155
        %1174 = vmatprep.subr.mxu0 0.0
        %1175 = vmatpush1.msra.mxu0 %v1154
        %1176 = vmatprep.subr.mxu0 0.0
        %1177 = vmatpush1.msra.mxu0 %v1153
        %1178 = vmatprep.subr.mxu0 0.0
        %1179 = vmatpush1.msra.mxu0 %v1152
        %1180 = vmatprep.subr.mxu0 0.0
        %1181 = vmatpush1.msra.mxu0 %v1151
        %1182 = vmatprep.subr.mxu0 0.0
        %1183 = vmatpush1.msra.mxu0 %v1150
        %1184 = vmatprep.subr.mxu0 0.0
        %1185 = vmatpush1.msra.mxu0 %v1149
        %1186 = vmatprep.subr.mxu0 0.0
        %1187 = vmatpush1.msra.mxu0 %v1148
        %1188 = vmatprep.subr.mxu0 0.0
        %1189 = vmatpush1.msra.mxu0 %v1147
        %1190 = vmatprep.subr.mxu0 0.0
        %1191 = vmatpush1.msra.mxu0 %v1146
        %1192 = vmatprep.subr.mxu0 0.0
        %1193 = vmatpush1.msra.mxu0 %v1145
        %1194 = vmatprep.subr.mxu0 0.0
        %1195 = vmatpush1.msra.mxu0 %v1144
        %1196 = vmatprep.subr.mxu0 0.0
        %1197 = vmatpush1.msra.mxu0 %v1143
        %1198 = vmatprep.subr.mxu0 0.0
        %1199 = vmatpush2.msra.mxu0 0.0
        %1200 = vmatprep.subr.mxu0 0.0
        %1201 = vmatpush2.msra.mxu0 0.0
        %1202 = vmatprep.subr.mxu0 0.0
        %1203 = vmatpush2.msra.mxu0 0.0
        %1204 = vmatprep.subr.mxu0 0.0
        %1205 = vmatpush2.msra.mxu0 0.0
        %1206 = vmatprep.subr.mxu0 0.0
        %1207 = vmatpush2.msra.mxu0 0.0
        %1208 = vmatprep.subr.mxu0 0.0
        %1209 = vmatpush2.msra.mxu0 0.0
        %1210 = vmatprep.subr.mxu0 0.0
        %1211 = vmatpush2.msra.mxu0 0.0
        %1212 = vmatprep.subr.mxu0 0.0
        %1213 = vmatpush2.msra.mxu0 0.0
        %1214 = vmatprep.subr.mxu0 0.0
        %1215 = vmatpush2.msra.mxu0 0.0
        %1216 = vmatprep.subr.mxu0 0.0
        %1217 = vmatpush2.msra.mxu0 0.0
        %1218 = vmatprep.subr.mxu0 0.0
        %1219 = vmatpush2.msra.mxu0 0.0
        %1220 = vmatprep.subr.mxu0 0.0
        %1221 = vmatpush2.msra.mxu0 0.0
        %1222 = vmatprep.subr.mxu0 0.0
        %1223 = vmatpush2.msra.mxu0 0.0
        %1224 = vmatprep.subr.mxu0 0.0
        %1225 = vmatpush2.msra.mxu0 0.0
        %1226 = vmatprep.subr.mxu0 0.0
        %1227 = vmatpush2.msra.mxu0 0.0
        %1228 = vmatprep.subr.mxu0 0.0
        %1229 = vmatpush2.msra.mxu0 0.0
        %1230 = vmatprep.mubr.f32.mxu0 0.0
        %1231 = vmatmul.mubr.f32.gmra.mxu0 %v1142
        %v1232 = vpop.f32.mrf.mxu0
        %v1233 = vadd.f32 %v1164, %v1232
        %v1234 = vpop.f32.mrf.mxu0
        %1235 = vdwg.mxu0
        %1236 = vst [vmem:[%s459] sm:$0xff] %v1233
        %s1237 = sand.u32 %s274, 1
        %s1238 = scalar_lea.sflag [#allocation4], %s1237
        %s1239 = sand.u32 %s274, 1
        %s1240 = smul.addr %s1239, 8
        %s1241 = scalar_lea.vmem [#allocation11], %s1240
        // Predicated region
        $region85: #{tpu_custom_call.1} parent=63 // pred_check
          %p1242 = pneg %p284
        $region86: #{tpu_custom_call.1} parent=63 // pred_check_branch
          %1244 = sbr.rel (%p1242) target = $region88
        $region87: #{tpu_custom_call.1} parent=63 // pred_region
          %s1246 = ssub.s32 128, 128
          %1247 = vsyncadd %s1238, %s1246
          %s1248 = smul.addr %s30, 128
          %s1249 = scalar_lea.hbm %s11, %s1248
          %s1251 = sshll.u32 %s1241, 4
          %s1252 = int_to_ptr.vmem [resolvable:$true] %s1251
          %1254 = dma.vmem_to_hbm [thread:$0]  %s1252, 128, %s1249, %s1238
        $region88: #{tpu_custom_call.1} parent=63 // pred_fallthru
          _
      $region64: #{tpu_custom_call.1} parent=5 // pred_fallthru
        _
      %p1255 = scmp.le.s32.totalorder 2, %s25
      // Predicated region
      $region89: #{tpu_custom_call.1} parent=5 // pred_check
        %p1256 = pneg %p1255
      $region90: #{tpu_custom_call.1} parent=5 // pred_check_branch
        %1258 = sbr.rel (%p1256) target = $region92
      $region91: #{tpu_custom_call.1} parent=5 // pred_region
        %s1259 = ssub.s32 %s25, 2
        // Predicated region
        $region93: #{tpu_custom_call.1} parent=91 // pred_check
          %p1260 = pneg %p290
        $region94: #{tpu_custom_call.1} parent=91 // pred_check_branch
          %1262 = sbr.rel (%p1260) target = $region96
        $region95: #{tpu_custom_call.1} parent=91 // pred_region
          %s1263 = sand.u32 %s275, 1
          %s1264 = scalar_lea.sflag [#allocation4], %s1263
          %s1265 = sand.u32 %s275, 1
          %s1266 = smul.addr %s1265, 8
          %s1267 = scalar_lea.vmem [#allocation11], %s1266
          %1268 = dma.done %s1264, 128
        $region96: #{tpu_custom_call.1} parent=91 // pred_fallthru
          _
      $region92: #{tpu_custom_call.1} parent=5 // pred_fallthru
        _
    $region6: #{tpu_custom_call.1} parent=1 // loop_footer
      %s29 = sadd.s32 1, %s25
    $region7: #{tpu_custom_call.1} parent=1 // loop_footer_branch
      %24 = sbr.rel target = $region3
    $region8: #{tpu_custom_call.1} parent=1 // loop_exit
      _
    %1269 = vsyncpa [#allocation3], 1
    %s1270 = scalar_lea.sflag [#allocation3], 1
    %1271 = vsyncpa %s1270, 1
    %1272 = vsyncpa [#allocation6], 1
    %1273 = vsyncpa [#allocation9], 1
    %1274 = vsyncpa [#allocation4], 1
    %s1275 = scalar_lea.sflag [#allocation4], 1
    %1276 = vsyncpa %s1275, 1

// kernel: tpu_custom_call.1
$region0: #{tpu_custom_call.1}
  #allocation0 [shape = 'u32[]', space=smem, size = 0x4, offset = 0x4, fixed_abs, tag = 'smem constant byte address 0x4 - core index']
  #allocation1 [shape = 'u32[144,128]{1,0:T(1,128)}', space=vmem, size = 0x12000, scoped, tag = 'internal scratch']
  %s0 = inlined_call_operand.hbm [shape: f32[16,128], index: 0, kind: input, shape index: {}]
  %s1 = inlined_call_operand.hbm [shape: f32[128,128], index: 1, kind: input, shape index: {}]
  %s2 = inlined_call_operand.vmem [shape: f32[1,128], index: 2, kind: input, shape index: {}]
  %s3 = inlined_call_operand.hbm [shape: f32[3,128,128], index: 3, kind: input, shape index: {}]
  %s4 = inlined_call_operand.vmem [shape: f32[3,1,128], index: 4, kind: input, shape index: {}]
  %s5 = inlined_call_operand.hbm [shape: f32[3,128,128], index: 5, kind: input, shape index: {}]
  %s6 = inlined_call_operand.vmem [shape: f32[3,1,128], index: 6, kind: input, shape index: {}]
  %s7 = inlined_call_operand.vmem [shape: f32[1,128], index: 7, kind: input, shape index: {}]
  %s8 = inlined_call_operand.vmem [shape: f32[1,128], index: 8, kind: input, shape index: {}]
  %s9 = inlined_call_operand.hbm [shape: f32[128,128], index: 9, kind: input, shape index: {}]
  %s10 = inlined_call_operand.vmem [shape: f32[1,128], index: 10, kind: input, shape index: {}]
  %s11 = inlined_call_operand.hbm [shape: f32[16,128], index: 11, kind: output, shape index: {}]
  %s12 = sld [smem:[#allocation0]]
  $region97: #{tpu_custom_call.1} parent=0
    _
  %s14 = ssub.s32 1, %s12
  %s15 = scalar_select 0, %s14, %s12
  $region1: #{tpu_custom_call.1} parent=0
    #allocation2 [shape = 'u8[8192]{0}', space=vmem, size = 0x2000, scoped, tag = 'input window, operand 0']
    #allocation3 [shape = 's32[2]{0}', space=sflag, size = 0x8, scoped, tag = 'scoped memory for tpu_custom_call.1']
    #allocation4 [shape = 's32[2]{0}', space=sflag, size = 0x8, scoped, tag = 'scoped memory for tpu_custom_call.1']
    #allocation5 [shape = 'u8[65536]{0}', space=vmem, size = 0x10000, scoped, tag = 'input window, operand 1, single buffered']
    #allocation6 [shape = 's32[1]{0}', space=sflag, size = 0x4, scoped, tag = 'scoped memory for tpu_custom_call.1']
    #allocation7 [shape = 'u8[196608]{0}', space=vmem, size = 0x30000, scoped, tag = 'input window, operand 3, single buffered']
    #allocation8 [shape = 'u8[196608]{0}', space=vmem, size = 0x30000, scoped, tag = 'input window, operand 5, single buffered']
    #allocation9 [shape = 's32[1]{0}', space=sflag, size = 0x4, scoped, tag = 'scoped memory for tpu_custom_call.1']
    #allocation10 [shape = 'u8[65536]{0}', space=vmem, size = 0x10000, scoped, tag = 'input window, operand 9, single buffered']
    #allocation11 [shape = 'u8[8192]{0}', space=vmem, size = 0x2000, scoped, tag = 'output window, operand 0']
    %16 = vsyncpa [#allocation3], 0
    %s17 = scalar_lea.sflag [#allocation3], 1
    %18 = vsyncpa %s17, 0
    %19 = vsyncpa [#allocation6], 0
    %20 = vsyncpa [#allocation9], 0
    %21 = vsyncpa [#allocation4], 0
    %s22 = scalar_lea.sflag [#allocation4], 1
    %23 = vsyncpa %s22, 0
    loop: start=0, step=1, limit=4
    $region2: #{tpu_custom_call.1} parent=1 // loop_pre_header
      _
    $region3: #{tpu_custom_call.1} parent=1 // loop_header
      %s25 = sphi 0, %s29
      %p26 = scmp.ge.s32.totalorder %s25, 4
      %s35 = sphi 0, %s37
      %s38 = sphi 0, %s35
      %s39 = sphi 0, %s38
      %s55 = sphi 0, %s39
      %s59 = sphi 0, %s59
      %s61 = sphi 0, %s59
      %s62 = sphi 0, %s61
      %s76 = sphi 0, %s62
      %s80 = sphi 0, %s80
      %s82 = sphi 0, %s80
      %s83 = sphi 0, %s82
      %s97 = sphi 0, %s83
      %s101 = sphi 0, %s101
      %s103 = sphi 0, %s101
      %s104 = sphi 0, %s103
      %s118 = sphi 0, %s104
      %s122 = sphi 0, %s122
      %s124 = sphi 0, %s122
      %s125 = sphi 0, %s124
      %s139 = sphi 0, %s125
      %s143 = sphi 0, %s143
      %s145 = sphi 0, %s143
      %s146 = sphi 0, %s145
      %s160 = sphi 0, %s146
      %s164 = sphi 0, %s164
      %s166 = sphi 0, %s164
      %s167 = sphi 0, %s166
      %s181 = sphi 0, %s167
      %s185 = sphi 0, %s185
      %s187 = sphi 0, %s185
      %s188 = sphi 0, %s187
      %s202 = sphi 0, %s188
      %s206 = sphi 0, %s206
      %s208 = sphi 0, %s206
      %s209 = sphi 0, %s208
      %s223 = sphi 0, %s209
      %s227 = sphi 0, %s227
      %s229 = sphi 0, %s227
      %s230 = sphi 0, %s229
      %s244 = sphi 0, %s230
      %s248 = sphi 0, %s248
      %s250 = sphi 0, %s248
      %s251 = sphi 0, %s250
      %s265 = sphi 0, %s251
      %s271 = sphi 0, %s273
      %s274 = sphi 0, %s271
      %s275 = sphi 0, %s274
      %s291 = sphi 0, %s275
    $region4: #{tpu_custom_call.1} parent=1 // loop_header_branch
      %28 = sbr.rel (%p26) target = $region8
    $region5: #{tpu_custom_call.1} parent=1 // loop_body
      %s30 = ssub.s32 %s25, 1
      %s31 = ssub.s32 %s25, 2
      %s32 = sadd.s32 %s25, 1
      %s33 = ssub.s32 %s25, %s32
      %p34 = scmp.eq.s32.totalorder %s33, 0
      %s36 = sadd.s32 %s35, 1
      %s37 = scalar_select %p34, %s35, %s36
      %p40 = pneg %p34
      %p41 = scmp.eq.s32.totalorder %s25, 1
      %p42 = por %p40, %p41
      %p43 = scmp.ne.s32.totalorder %s35, %s38
      %p44 = scmp.eq.s32.totalorder %s25, 0
      %p45 = por %p43, %p44
      %p46 = scmp.ne.s32.totalorder %s35, %s38
      %p47 = scmp.eq.s32.totalorder %s30, 1
      %p48 = por %p46, %p47
      %p49 = scmp.ne.s32.totalorder %s38, %s39
      %p50 = scmp.eq.s32.totalorder %s30, 0
      %p51 = por %p49, %p50
      %p52 = scmp.ne.s32.totalorder %s38, %s39
      %p53 = scmp.eq.s32.totalorder %s31, 1
      %p54 = por %p52, %p53
      %p56 = scmp.ne.s32.totalorder %s39, %s55
      %p57 = scmp.eq.s32.totalorder %s31, 0
      %p58 = por %p56, %p57
      %s60 = sadd.s32 %s59, 1
      %p63 = scmp.eq.s32.totalorder %s25, 1
      %p64 = scmp.ne.s32.totalorder %s59, %s61
      %p65 = scmp.eq.s32.totalorder %s25, 0
      %p66 = por %p64, %p65
      %p67 = scmp.ne.s32.totalorder %s59, %s61
      %p68 = scmp.eq.s32.totalorder %s30, 1
      %p69 = por %p67, %p68
      %p70 = scmp.ne.s32.totalorder %s61, %s62
      %p71 = scmp.eq.s32.totalorder %s30, 0
      %p72 = por %p70, %p71
      %p73 = scmp.ne.s32.totalorder %s61, %s62
      %p74 = scmp.eq.s32.totalorder %s31, 1
      %p75 = por %p73, %p74
      %p77 = scmp.ne.s32.totalorder %s62, %s76
      %p78 = scmp.eq.s32.totalorder %s31, 0
      %p79 = por %p77, %p78
      %s81 = sadd.s32 %s80, 1
      %p84 = scmp.eq.s32.totalorder %s25, 1
      %p85 = scmp.ne.s32.totalorder %s80, %s82
      %p86 = scmp.eq.s32.totalorder %s25, 0
      %p87 = por %p85, %p86
      %p88 = scmp.ne.s32.totalorder %s80, %s82
      %p89 = scmp.eq.s32.totalorder %s30, 1
      %p90 = por %p88, %p89
      %p91 = scmp.ne.s32.totalorder %s82, %s83
      %p92 = scmp.eq.s32.totalorder %s30, 0
      %p93 = por %p91, %p92
      %p94 = scmp.ne.s32.totalorder %s82, %s83
      %p95 = scmp.eq.s32.totalorder %s31, 1
      %p96 = por %p94, %p95
      %p98 = scmp.ne.s32.totalorder %s83, %s97
      %p99 = scmp.eq.s32.totalorder %s31, 0
      %p100 = por %p98, %p99
      %s102 = sadd.s32 %s101, 1
      %p105 = scmp.eq.s32.totalorder %s25, 1
      %p106 = scmp.ne.s32.totalorder %s101, %s103
      %p107 = scmp.eq.s32.totalorder %s25, 0
      %p108 = por %p106, %p107
      %p109 = scmp.ne.s32.totalorder %s101, %s103
      %p110 = scmp.eq.s32.totalorder %s30, 1
      %p111 = por %p109, %p110
      %p112 = scmp.ne.s32.totalorder %s103, %s104
      %p113 = scmp.eq.s32.totalorder %s30, 0
      %p114 = por %p112, %p113
      %p115 = scmp.ne.s32.totalorder %s103, %s104
      %p116 = scmp.eq.s32.totalorder %s31, 1
      %p117 = por %p115, %p116
      %p119 = scmp.ne.s32.totalorder %s104, %s118
      %p120 = scmp.eq.s32.totalorder %s31, 0
      %p121 = por %p119, %p120
      %s123 = sadd.s32 %s122, 1
      %p126 = scmp.eq.s32.totalorder %s25, 1
      %p127 = scmp.ne.s32.totalorder %s122, %s124
      %p128 = scmp.eq.s32.totalorder %s25, 0
      %p129 = por %p127, %p128
      %p130 = scmp.ne.s32.totalorder %s122, %s124
      %p131 = scmp.eq.s32.totalorder %s30, 1
      %p132 = por %p130, %p131
      %p133 = scmp.ne.s32.totalorder %s124, %s125
      %p134 = scmp.eq.s32.totalorder %s30, 0
      %p135 = por %p133, %p134
      %p136 = scmp.ne.s32.totalorder %s124, %s125
      %p137 = scmp.eq.s32.totalorder %s31, 1
      %p138 = por %p136, %p137
      %p140 = scmp.ne.s32.totalorder %s125, %s139
      %p141 = scmp.eq.s32.totalorder %s31, 0
      %p142 = por %p140, %p141
      %s144 = sadd.s32 %s143, 1
      %p147 = scmp.eq.s32.totalorder %s25, 1
      %p148 = scmp.ne.s32.totalorder %s143, %s145
      %p149 = scmp.eq.s32.totalorder %s25, 0
      %p150 = por %p148, %p149
      %p151 = scmp.ne.s32.totalorder %s143, %s145
      %p152 = scmp.eq.s32.totalorder %s30, 1
      %p153 = por %p151, %p152
      %p154 = scmp.ne.s32.totalorder %s145, %s146
      %p155 = scmp.eq.s32.totalorder %s30, 0
      %p156 = por %p154, %p155
      %p157 = scmp.ne.s32.totalorder %s145, %s146
      %p158 = scmp.eq.s32.totalorder %s31, 1
      %p159 = por %p157, %p158
      %p161 = scmp.ne.s32.totalorder %s146, %s160
      %p162 = scmp.eq.s32.totalorder %s31, 0
      %p163 = por %p161, %p162
      %s165 = sadd.s32 %s164, 1
      %p168 = scmp.eq.s32.totalorder %s25, 1
      %p169 = scmp.ne.s32.totalorder %s164, %s166
      %p170 = scmp.eq.s32.totalorder %s25, 0
      %p171 = por %p169, %p170
      %p172 = scmp.ne.s32.totalorder %s164, %s166
      %p173 = scmp.eq.s32.totalorder %s30, 1
      %p174 = por %p172, %p173
      %p175 = scmp.ne.s32.totalorder %s166, %s167
      %p176 = scmp.eq.s32.totalorder %s30, 0
      %p177 = por %p175, %p176
      %p178 = scmp.ne.s32.totalorder %s166, %s167
      %p179 = scmp.eq.s32.totalorder %s31, 1
      %p180 = por %p178, %p179
      %p182 = scmp.ne.s32.totalorder %s167, %s181
      %p183 = scmp.eq.s32.totalorder %s31, 0
      %p184 = por %p182, %p183
      %s186 = sadd.s32 %s185, 1
      %p189 = scmp.eq.s32.totalorder %s25, 1
      %p190 = scmp.ne.s32.totalorder %s185, %s187
      %p191 = scmp.eq.s32.totalorder %s25, 0
      %p192 = por %p190, %p191
      %p193 = scmp.ne.s32.totalorder %s185, %s187
      %p194 = scmp.eq.s32.totalorder %s30, 1
      %p195 = por %p193, %p194
      %p196 = scmp.ne.s32.totalorder %s187, %s188
      %p197 = scmp.eq.s32.totalorder %s30, 0
      %p198 = por %p196, %p197
      %p199 = scmp.ne.s32.totalorder %s187, %s188
      %p200 = scmp.eq.s32.totalorder %s31, 1
      %p201 = por %p199, %p200
      %p203 = scmp.ne.s32.totalorder %s188, %s202
      %p204 = scmp.eq.s32.totalorder %s31, 0
      %p205 = por %p203, %p204
      %s207 = sadd.s32 %s206, 1
      %p210 = scmp.eq.s32.totalorder %s25, 1
      %p211 = scmp.ne.s32.totalorder %s206, %s208
      %p212 = scmp.eq.s32.totalorder %s25, 0
      %p213 = por %p211, %p212
      %p214 = scmp.ne.s32.totalorder %s206, %s208
      %p215 = scmp.eq.s32.totalorder %s30, 1
      %p216 = por %p214, %p215
      %p217 = scmp.ne.s32.totalorder %s208, %s209
      %p218 = scmp.eq.s32.totalorder %s30, 0
      %p219 = por %p217, %p218
      %p220 = scmp.ne.s32.totalorder %s208, %s209
      %p221 = scmp.eq.s32.totalorder %s31, 1
      %p222 = por %p220, %p221
      %p224 = scmp.ne.s32.totalorder %s209, %s223
      %p225 = scmp.eq.s32.totalorder %s31, 0
      %p226 = por %p224, %p225
      %s228 = sadd.s32 %s227, 1
      %p231 = scmp.eq.s32.totalorder %s25, 1
      %p232 = scmp.ne.s32.totalorder %s227, %s229
      %p233 = scmp.eq.s32.totalorder %s25, 0
      %p234 = por %p232, %p233
      %p235 = scmp.ne.s32.totalorder %s227, %s229
      %p236 = scmp.eq.s32.totalorder %s30, 1
      %p237 = por %p235, %p236
      %p238 = scmp.ne.s32.totalorder %s229, %s230
      %p239 = scmp.eq.s32.totalorder %s30, 0
      %p240 = por %p238, %p239
      %p241 = scmp.ne.s32.totalorder %s229, %s230
      %p242 = scmp.eq.s32.totalorder %s31, 1
      %p243 = por %p241, %p242
      %p245 = scmp.ne.s32.totalorder %s230, %s244
      %p246 = scmp.eq.s32.totalorder %s31, 0
      %p247 = por %p245, %p246
      %s249 = sadd.s32 %s248, 1
      %p252 = scmp.eq.s32.totalorder %s25, 1
      %p253 = scmp.ne.s32.totalorder %s248, %s250
      %p254 = scmp.eq.s32.totalorder %s25, 0
      %p255 = por %p253, %p254
      %p256 = scmp.ne.s32.totalorder %s248, %s250
      %p257 = scmp.eq.s32.totalorder %s30, 1
      %p258 = por %p256, %p257
      %p259 = scmp.ne.s32.totalorder %s250, %s251
      %p260 = scmp.eq.s32.totalorder %s30, 0
      %p261 = por %p259, %p260
      %p262 = scmp.ne.s32.totalorder %s250, %s251
      %p263 = scmp.eq.s32.totalorder %s31, 1
      %p264 = por %p262, %p263
      %p266 = scmp.ne.s32.totalorder %s251, %s265
      %p267 = scmp.eq.s32.totalorder %s31, 0
      %p268 = por %p266, %p267
      %s269 = ssub.s32 %s25, %s32
      %p270 = scmp.eq.s32.totalorder %s269, 0
      %s272 = sadd.s32 %s271, 1
      %s273 = scalar_select %p270, %s271, %s272
      %p276 = pneg %p270
      %p277 = scmp.eq.s32.totalorder %s25, 1
      %p278 = por %p276, %p277
      %p279 = scmp.ne.s32.totalorder %s271, %s274
      %p280 = scmp.eq.s32.totalorder %s25, 0
      %p281 = por %p279, %p280
      %p282 = scmp.ne.s32.totalorder %s271, %s274
      %p283 = scmp.eq.s32.totalorder %s30, 1
      %p284 = por %p282, %p283
      %p285 = scmp.ne.s32.totalorder %s274, %s275
      %p286 = scmp.eq.s32.totalorder %s30, 0
      %p287 = por %p285, %p286
      %p288 = scmp.ne.s32.totalorder %s274, %s275
      %p289 = scmp.eq.s32.totalorder %s31, 1
      %p290 = por %p288, %p289
      %p292 = scmp.ne.s32.totalorder %s275, %s291
      %p293 = scmp.eq.s32.totalorder %s31, 0
      %p294 = por %p292, %p293
      %p295 = scmp.le.s32.totalorder 1, %s25
      %p296 = scmp.lt.s32.totalorder %s25, 3
      %p297 = pnand %p295, %p296
      %p298 = pneg %p297
      // Predicated region
      $region9: #{tpu_custom_call.1} parent=5 // pred_check
        _
      $region10: #{tpu_custom_call.1} parent=5 // pred_check_branch
        %300 = sbr.rel (%p297) target = $region12
      $region11: #{tpu_custom_call.1} parent=5 // pred_region
        %s301 = ssub.s32 %s25, 1
        // Predicated region
        $region13: #{tpu_custom_call.1} parent=11 // pred_check
          %p302 = pneg %p72
        $region14: #{tpu_custom_call.1} parent=11 // pred_check_branch
          %304 = sbr.rel (%p302) target = $region16
        $region15: #{tpu_custom_call.1} parent=11 // pred_region
          %s306 = ssub.s32 2048, 2048
          %307 = vsyncadd [#allocation6], %s306
          %s308 = sshll.u32 [#allocation5], 4
          %s309 = int_to_ptr.vmem [resolvable:$true] %s308
          %314 = dma.hbm_to_vmem [thread:$0]  %s1, 2048, %s309, [#allocation6], 128, 128, 8
        $region16: #{tpu_custom_call.1} parent=11 // pred_fallthru
          _
        // Predicated region
        $region17: #{tpu_custom_call.1} parent=11 // pred_check
          %p315 = pneg %p93
        $region18: #{tpu_custom_call.1} parent=11 // pred_check_branch
          %317 = sbr.rel (%p315) target = $region20
        $region19: #{tpu_custom_call.1} parent=11 // pred_region
          _
        $region20: #{tpu_custom_call.1} parent=11 // pred_fallthru
          _
        // Predicated region
        $region21: #{tpu_custom_call.1} parent=11 // pred_check
          %p318 = pneg %p114
        $region22: #{tpu_custom_call.1} parent=11 // pred_check_branch
          %320 = sbr.rel (%p318) target = $region24
        $region23: #{tpu_custom_call.1} parent=11 // pred_region
          %s322 = ssub.s32 6144, 6144
          %323 = vsyncadd [#allocation6], %s322
          %s324 = sshll.u32 [#allocation7], 4
          %s325 = int_to_ptr.vmem [resolvable:$true] %s324
          %330 = dma.hbm_to_vmem [thread:$0]  %s3, 6144, %s325, [#allocation6], 128, 128, 8
        $region24: #{tpu_custom_call.1} parent=11 // pred_fallthru
          _
        // Predicated region
        $region25: #{tpu_custom_call.1} parent=11 // pred_check
          %p331 = pneg %p135
        $region26: #{tpu_custom_call.1} parent=11 // pred_check_branch
          %333 = sbr.rel (%p331) target = $region28
        $region27: #{tpu_custom_call.1} parent=11 // pred_region
          _
        $region28: #{tpu_custom_call.1} parent=11 // pred_fallthru
          _
        // Predicated region
        $region29: #{tpu_custom_call.1} parent=11 // pred_check
          %p334 = pneg %p156
        $region30: #{tpu_custom_call.1} parent=11 // pred_check_branch
          %336 = sbr.rel (%p334) target = $region32
        $region31: #{tpu_custom_call.1} parent=11 // pred_region
          %s338 = ssub.s32 6144, 6144
          %339 = vsyncadd [#allocation9], %s338
          %s340 = sshll.u32 [#allocation8], 4
          %s341 = int_to_ptr.vmem [resolvable:$true] %s340
          %346 = dma.hbm_to_vmem [thread:$0]  %s5, 6144, %s341, [#allocation9], 128, 128, 8
        $region32: #{tpu_custom_call.1} parent=11 // pred_fallthru
          _
        // Predicated region
        $region33: #{tpu_custom_call.1} parent=11 // pred_check
          %p347 = pneg %p177
        $region34: #{tpu_custom_call.1} parent=11 // pred_check_branch
          %349 = sbr.rel (%p347) target = $region36
        $region35: #{tpu_custom_call.1} parent=11 // pred_region
          _
        $region36: #{tpu_custom_call.1} parent=11 // pred_fallthru
          _
        // Predicated region
        $region37: #{tpu_custom_call.1} parent=11 // pred_check
          %p350 = pneg %p198
        $region38: #{tpu_custom_call.1} parent=11 // pred_check_branch
          %352 = sbr.rel (%p350) target = $region40
        $region39: #{tpu_custom_call.1} parent=11 // pred_region
          _
        $region40: #{tpu_custom_call.1} parent=11 // pred_fallthru
          _
        // Predicated region
        $region41: #{tpu_custom_call.1} parent=11 // pred_check
          %p353 = pneg %p219
        $region42: #{tpu_custom_call.1} parent=11 // pred_check_branch
          %355 = sbr.rel (%p353) target = $region44
        $region43: #{tpu_custom_call.1} parent=11 // pred_region
          _
        $region44: #{tpu_custom_call.1} parent=11 // pred_fallthru
          _
        // Predicated region
        $region45: #{tpu_custom_call.1} parent=11 // pred_check
          %p356 = pneg %p240
        $region46: #{tpu_custom_call.1} parent=11 // pred_check_branch
          %358 = sbr.rel (%p356) target = $region48
        $region47: #{tpu_custom_call.1} parent=11 // pred_region
          %s360 = ssub.s32 2048, 2048
          %361 = vsyncadd [#allocation9], %s360
          %s362 = sshll.u32 [#allocation10], 4
          %s363 = int_to_ptr.vmem [resolvable:$true] %s362
          %368 = dma.hbm_to_vmem [thread:$0]  %s9, 2048, %s363, [#allocation9], 128, 128, 8
        $region48: #{tpu_custom_call.1} parent=11 // pred_fallthru
          _
        // Predicated region
        $region49: #{tpu_custom_call.1} parent=11 // pred_check
          %p369 = pneg %p261
        $region50: #{tpu_custom_call.1} parent=11 // pred_check_branch
          %371 = sbr.rel (%p369) target = $region52
        $region51: #{tpu_custom_call.1} parent=11 // pred_region
          _
        $region52: #{tpu_custom_call.1} parent=11 // pred_fallthru
          _
      $region12: #{tpu_custom_call.1} parent=5 // pred_fallthru
        _
      %p372 = scmp.lt.s32.totalorder %s25, 2
      // Predicated region
      $region53: #{tpu_custom_call.1} parent=5 // pred_check
        %p373 = pneg %p372
      $region54: #{tpu_custom_call.1} parent=5 // pred_check_branch
        %375 = sbr.rel (%p373) target = $region56
      $region55: #{tpu_custom_call.1} parent=5 // pred_region
        // Predicated region
        $region57: #{tpu_custom_call.1} parent=55 // pred_check
          %p376 = pneg %p45
        $region58: #{tpu_custom_call.1} parent=55 // pred_check_branch
          %378 = sbr.rel (%p376) target = $region60
        $region59: #{tpu_custom_call.1} parent=55 // pred_region
          %s379 = sand.u32 %s35, 1
          %s380 = scalar_lea.sflag [#allocation3], %s379
          %s381 = sand.u32 %s35, 1
          %s382 = smul.addr %s381, 8
          %s383 = scalar_lea.vmem [#allocation2], %s382
          %s385 = ssub.s32 128, 128
          %386 = vsyncadd %s380, %s385
          %s387 = smul.addr %s25, 128
          %s388 = scalar_lea.hbm %s0, %s387
          %s390 = sshll.u32 %s383, 4
          %s391 = int_to_ptr.vmem [resolvable:$true] %s390
          %393 = dma.hbm_to_vmem [thread:$0]  %s388, 128, %s391, %s380
        $region60: #{tpu_custom_call.1} parent=55 // pred_fallthru
          _
      $region56: #{tpu_custom_call.1} parent=5 // pred_fallthru
        _
      %p394 = scmp.le.s32.totalorder 1, %s25
      %p395 = scmp.lt.s32.totalorder %s25, 3
      %p396 = pnand %p394, %p395
      %p397 = pneg %p396
      // Predicated region
      $region61: #{tpu_custom_call.1} parent=5 // pred_check
        _
      $region62: #{tpu_custom_call.1} parent=5 // pred_check_branch
        %399 = sbr.rel (%p396) target = $region64
      $region63: #{tpu_custom_call.1} parent=5 // pred_region
        %s400 = ssub.s32 %s25, 1
        %s401 = sand.u32 %s38, 1
        %s402 = scalar_lea.sflag [#allocation3], %s401
        %s403 = sand.u32 %s38, 1
        %s404 = smul.addr %s403, 8
        %s405 = scalar_lea.vmem [#allocation2], %s404
        // Predicated region
        $region65: #{tpu_custom_call.1} parent=63 // pred_check
          %p406 = pneg %p51
        $region66: #{tpu_custom_call.1} parent=63 // pred_check_branch
          %408 = sbr.rel (%p406) target = $region68
        $region67: #{tpu_custom_call.1} parent=63 // pred_region
          %409 = dma.done %s402, 128
        $region68: #{tpu_custom_call.1} parent=63 // pred_fallthru
          _
        // Predicated region
        $region69: #{tpu_custom_call.1} parent=63 // pred_check
          %p410 = pneg %p72
        $region70: #{tpu_custom_call.1} parent=63 // pred_check_branch
          %412 = sbr.rel (%p410) target = $region72
        $region71: #{tpu_custom_call.1} parent=63 // pred_region
          %413 = dma.done [#allocation6], 2048
        $region72: #{tpu_custom_call.1} parent=63 // pred_fallthru
          _
        // Predicated region
        $region73: #{tpu_custom_call.1} parent=63 // pred_check
          %p414 = pneg %p114
        $region74: #{tpu_custom_call.1} parent=63 // pred_check_branch
          %416 = sbr.rel (%p414) target = $region76
        $region75: #{tpu_custom_call.1} parent=63 // pred_region
          %417 = dma.done [#allocation6], 6144
        $region76: #{tpu_custom_call.1} parent=63 // pred_fallthru
          _
        // Predicated region
        $region77: #{tpu_custom_call.1} parent=63 // pred_check
          %p418 = pneg %p156
        $region78: #{tpu_custom_call.1} parent=63 // pred_check_branch
          %420 = sbr.rel (%p418) target = $region80
        $region79: #{tpu_custom_call.1} parent=63 // pred_region
          %421 = dma.done [#allocation9], 6144
        $region80: #{tpu_custom_call.1} parent=63 // pred_fallthru
          _
        // Predicated region
        $region81: #{tpu_custom_call.1} parent=63 // pred_check
          %p422 = pneg %p240
        $region82: #{tpu_custom_call.1} parent=63 // pred_check_branch
          %424 = sbr.rel (%p422) target = $region84
        $region83: #{tpu_custom_call.1} parent=63 // pred_region
          %425 = dma.done [#allocation9], 2048
        $region84: #{tpu_custom_call.1} parent=63 // pred_fallthru
          _
        %s426 = sand.u32 %s38, 1
        %s427 = scalar_lea.sflag [#allocation3], %s426
        %s428 = sand.u32 %s38, 1
        %s429 = smul.addr %s428, 8
        %s430 = scalar_lea.vmem [#allocation2], %s429
        %p431 = pneg %p51
        %p432 = pneg %p48
        %p433 = pneg %p72
        %p434 = pneg %p69
        %p435 = pneg %p93
        %p436 = pneg %p90
        %p437 = pneg %p114
        %p438 = pneg %p111
        %p439 = pneg %p135
        %p440 = pneg %p132
        %p441 = pneg %p156
        %p442 = pneg %p153
        %p443 = pneg %p177
        %p444 = pneg %p174
        %p445 = pneg %p198
        %p446 = pneg %p195
        %p447 = pneg %p219
        %p448 = pneg %p216
        %p449 = pneg %p240
        %p450 = pneg %p237
        %p451 = pneg %p261
        %p452 = pneg %p258
        %p453 = pneg %p287
        %p454 = pneg %p284
        %s455 = sand.u32 %s274, 1
        %s456 = scalar_lea.sflag [#allocation4], %s455
        %s457 = sand.u32 %s274, 1
        %s458 = smul.addr %s457, 8
        %s459 = scalar_lea.vmem [#allocation11], %s458
        %v460 = vld [vmem:[%s405] sm:$0xff]
        %v461 = vld [vmem:[#allocation5] sm:$0xff]
        %v462 = vld [vmem:[#allocation5 + $0x8] sm:$0xff]
        %v463 = vld [vmem:[#allocation5 + $0x10] sm:$0xff]
        %v464 = vld [vmem:[#allocation5 + $0x18] sm:$0xff]
        %v465 = vld [vmem:[#allocation5 + $0x20] sm:$0xff]
        %v466 = vld [vmem:[#allocation5 + $0x28] sm:$0xff]
        %v467 = vld [vmem:[#allocation5 + $0x30] sm:$0xff]
        %v468 = vld [vmem:[#allocation5 + $0x38] sm:$0xff]
        %v469 = vld [vmem:[#allocation5 + $0x40] sm:$0xff]
        %v470 = vld [vmem:[#allocation5 + $0x48] sm:$0xff]
        %v471 = vld [vmem:[#allocation5 + $0x50] sm:$0xff]
        %v472 = vld [vmem:[#allocation5 + $0x58] sm:$0xff]
        %v473 = vld [vmem:[#allocation5 + $0x60] sm:$0xff]
        %v474 = vld [vmem:[#allocation5 + $0x68] sm:$0xff]
        %v475 = vld [vmem:[#allocation5 + $0x70] sm:$0xff]
        %v476 = vld [vmem:[#allocation5 + $0x78] sm:$0xff]
        %v477 = vld [vmem:[%s2] sm:$0x1]
        %v479 = vlaneseq
        %v480 = vshrl.u32 %v479, 7
        %v481 = vsub.s32 0, %v480
        %v482 = vrot.slane %v477, %v481
        %484 = vmatprep.subr.mxu0 0.0
        %485 = vmatpush1.msra.mxu0 %v476
        %486 = vmatprep.subr.mxu0 0.0
        %487 = vmatpush1.msra.mxu0 %v475
        %488 = vmatprep.subr.mxu0 0.0
        %489 = vmatpush1.msra.mxu0 %v474
        %490 = vmatprep.subr.mxu0 0.0
        %491 = vmatpush1.msra.mxu0 %v473
        %492 = vmatprep.subr.mxu0 0.0
        %493 = vmatpush1.msra.mxu0 %v472
        %494 = vmatprep.subr.mxu0 0.0
        %495 = vmatpush1.msra.mxu0 %v471
        %496 = vmatprep.subr.mxu0 0.0
        %497 = vmatpush1.msra.mxu0 %v470
        %498 = vmatprep.subr.mxu0 0.0
        %499 = vmatpush1.msra.mxu0 %v469
        %500 = vmatprep.subr.mxu0 0.0
        %501 = vmatpush1.msra.mxu0 %v468
        %502 = vmatprep.subr.mxu0 0.0
        %503 = vmatpush1.msra.mxu0 %v467
        %504 = vmatprep.subr.mxu0 0.0
        %505 = vmatpush1.msra.mxu0 %v466
        %506 = vmatprep.subr.mxu0 0.0
        %507 = vmatpush1.msra.mxu0 %v465
        %508 = vmatprep.subr.mxu0 0.0
        %509 = vmatpush1.msra.mxu0 %v464
        %510 = vmatprep.subr.mxu0 0.0
        %511 = vmatpush1.msra.mxu0 %v463
        %512 = vmatprep.subr.mxu0 0.0
        %513 = vmatpush1.msra.mxu0 %v462
        %514 = vmatprep.subr.mxu0 0.0
        %515 = vmatpush1.msra.mxu0 %v461
        %516 = vmatprep.subr.mxu0 0.0
        %517 = vmatpush2.msra.mxu0 0.0
        %518 = vmatprep.subr.mxu0 0.0
        %519 = vmatpush2.msra.mxu0 0.0
        %520 = vmatprep.subr.mxu0 0.0
        %521 = vmatpush2.msra.mxu0 0.0
        %522 = vmatprep.subr.mxu0 0.0
        %523 = vmatpush2.msra.mxu0 0.0
        %524 = vmatprep.subr.mxu0 0.0
        %525 = vmatpush2.msra.mxu0 0.0
        %526 = vmatprep.subr.mxu0 0.0
        %527 = vmatpush2.msra.mxu0 0.0
        %528 = vmatprep.subr.mxu0 0.0
        %529 = vmatpush2.msra.mxu0 0.0
        %530 = vmatprep.subr.mxu0 0.0
        %531 = vmatpush2.msra.mxu0 0.0
        %532 = vmatprep.subr.mxu0 0.0
        %533 = vmatpush2.msra.mxu0 0.0
        %534 = vmatprep.subr.mxu0 0.0
        %535 = vmatpush2.msra.mxu0 0.0
        %536 = vmatprep.subr.mxu0 0.0
        %537 = vmatpush2.msra.mxu0 0.0
        %538 = vmatprep.subr.mxu0 0.0
        %539 = vmatpush2.msra.mxu0 0.0
        %540 = vmatprep.subr.mxu0 0.0
        %541 = vmatpush2.msra.mxu0 0.0
        %542 = vmatprep.subr.mxu0 0.0
        %543 = vmatpush2.msra.mxu0 0.0
        %544 = vmatprep.subr.mxu0 0.0
        %545 = vmatpush2.msra.mxu0 0.0
        %546 = vmatprep.subr.mxu0 0.0
        %547 = vmatpush2.msra.mxu0 0.0
        %548 = vmatprep.mubr.f32.mxu0 0.0
        %549 = vmatmul.mubr.f32.gmra.mxu0 %v460
        %v550 = vpop.f32.mrf.mxu0
        %v551 = vadd.f32 %v482, %v550
        %v552 = vpop.f32.mrf.mxu0
        %553 = vdwg.mxu0
        %v554 = vld [vmem:[#allocation7] sm:$0xff]
        %v555 = vld [vmem:[#allocation7 + $0x8] sm:$0xff]
        %v556 = vld [vmem:[#allocation7 + $0x10] sm:$0xff]
        %v557 = vld [vmem:[#allocation7 + $0x18] sm:$0xff]
        %v558 = vld [vmem:[#allocation7 + $0x20] sm:$0xff]
        %v559 = vld [vmem:[#allocation7 + $0x28] sm:$0xff]
        %v560 = vld [vmem:[#allocation7 + $0x30] sm:$0xff]
        %v561 = vld [vmem:[#allocation7 + $0x38] sm:$0xff]
        %v562 = vld [vmem:[#allocation7 + $0x40] sm:$0xff]
        %v563 = vld [vmem:[#allocation7 + $0x48] sm:$0xff]
        %v564 = vld [vmem:[#allocation7 + $0x50] sm:$0xff]
        %v565 = vld [vmem:[#allocation7 + $0x58] sm:$0xff]
        %v566 = vld [vmem:[#allocation7 + $0x60] sm:$0xff]
        %v567 = vld [vmem:[#allocation7 + $0x68] sm:$0xff]
        %v568 = vld [vmem:[#allocation7 + $0x70] sm:$0xff]
        %v569 = vld [vmem:[#allocation7 + $0x78] sm:$0xff]
        %v570 = vld [vmem:[%s4] sm:$0x1]
        %v572 = vlaneseq
        %v573 = vshrl.u32 %v572, 7
        %v574 = vsub.s32 0, %v573
        %v575 = vrot.slane %v570, %v574
        %577 = vmatprep.subr.mxu0 0.0
        %578 = vmatpush1.msra.mxu0 %v569
        %579 = vmatprep.subr.mxu0 0.0
        %580 = vmatpush1.msra.mxu0 %v568
        %581 = vmatprep.subr.mxu0 0.0
        %582 = vmatpush1.msra.mxu0 %v567
        %583 = vmatprep.subr.mxu0 0.0
        %584 = vmatpush1.msra.mxu0 %v566
        %585 = vmatprep.subr.mxu0 0.0
        %586 = vmatpush1.msra.mxu0 %v565
        %587 = vmatprep.subr.mxu0 0.0
        %588 = vmatpush1.msra.mxu0 %v564
        %589 = vmatprep.subr.mxu0 0.0
        %590 = vmatpush1.msra.mxu0 %v563
        %591 = vmatprep.subr.mxu0 0.0
        %592 = vmatpush1.msra.mxu0 %v562
        %593 = vmatprep.subr.mxu0 0.0
        %594 = vmatpush1.msra.mxu0 %v561
        %595 = vmatprep.subr.mxu0 0.0
        %596 = vmatpush1.msra.mxu0 %v560
        %597 = vmatprep.subr.mxu0 0.0
        %598 = vmatpush1.msra.mxu0 %v559
        %599 = vmatprep.subr.mxu0 0.0
        %600 = vmatpush1.msra.mxu0 %v558
        %601 = vmatprep.subr.mxu0 0.0
        %602 = vmatpush1.msra.mxu0 %v557
        %603 = vmatprep.subr.mxu0 0.0
        %604 = vmatpush1.msra.mxu0 %v556
        %605 = vmatprep.subr.mxu0 0.0
        %606 = vmatpush1.msra.mxu0 %v555
        %607 = vmatprep.subr.mxu0 0.0
        %608 = vmatpush1.msra.mxu0 %v554
        %609 = vmatprep.subr.mxu0 0.0
        %610 = vmatpush2.msra.mxu0 0.0
        %611 = vmatprep.subr.mxu0 0.0
        %612 = vmatpush2.msra.mxu0 0.0
        %613 = vmatprep.subr.mxu0 0.0
        %614 = vmatpush2.msra.mxu0 0.0
        %615 = vmatprep.subr.mxu0 0.0
        %616 = vmatpush2.msra.mxu0 0.0
        %617 = vmatprep.subr.mxu0 0.0
        %618 = vmatpush2.msra.mxu0 0.0
        %619 = vmatprep.subr.mxu0 0.0
        %620 = vmatpush2.msra.mxu0 0.0
        %621 = vmatprep.subr.mxu0 0.0
        %622 = vmatpush2.msra.mxu0 0.0
        %623 = vmatprep.subr.mxu0 0.0
        %624 = vmatpush2.msra.mxu0 0.0
        %625 = vmatprep.subr.mxu0 0.0
        %626 = vmatpush2.msra.mxu0 0.0
        %627 = vmatprep.subr.mxu0 0.0
        %628 = vmatpush2.msra.mxu0 0.0
        %629 = vmatprep.subr.mxu0 0.0
        %630 = vmatpush2.msra.mxu0 0.0
        %631 = vmatprep.subr.mxu0 0.0
        %632 = vmatpush2.msra.mxu0 0.0
        %633 = vmatprep.subr.mxu0 0.0
        %634 = vmatpush2.msra.mxu0 0.0
        %635 = vmatprep.subr.mxu0 0.0
        %636 = vmatpush2.msra.mxu0 0.0
        %637 = vmatprep.subr.mxu0 0.0
        %638 = vmatpush2.msra.mxu0 0.0
        %639 = vmatprep.subr.mxu0 0.0
        %640 = vmatpush2.msra.mxu0 0.0
        %641 = vmatprep.mubr.f32.mxu0 0.0
        %642 = vmatmul.mubr.f32.gmra.mxu0 %v551
        %v643 = vpop.f32.mrf.mxu0
        %v644 = vadd.f32 %v575, %v643
        %v645 = vpop.f32.mrf.mxu0
        %646 = vdwg.mxu0
        %v647 = vmax.f32 %v644, 0.0
        %v648 = vld [vmem:[#allocation8] sm:$0xff]
        %v649 = vld [vmem:[#allocation8 + $0x8] sm:$0xff]
        %v650 = vld [vmem:[#allocation8 + $0x10] sm:$0xff]
        %v651 = vld [vmem:[#allocation8 + $0x18] sm:$0xff]
        %v652 = vld [vmem:[#allocation8 + $0x20] sm:$0xff]
        %v653 = vld [vmem:[#allocation8 + $0x28] sm:$0xff]
        %v654 = vld [vmem:[#allocation8 + $0x30] sm:$0xff]
        %v655 = vld [vmem:[#allocation8 + $0x38] sm:$0xff]
        %v656 = vld [vmem:[#allocation8 + $0x40] sm:$0xff]
        %v657 = vld [vmem:[#allocation8 + $0x48] sm:$0xff]
        %v658 = vld [vmem:[#allocation8 + $0x50] sm:$0xff]
        %v659 = vld [vmem:[#allocation8 + $0x58] sm:$0xff]
        %v660 = vld [vmem:[#allocation8 + $0x60] sm:$0xff]
        %v661 = vld [vmem:[#allocation8 + $0x68] sm:$0xff]
        %v662 = vld [vmem:[#allocation8 + $0x70] sm:$0xff]
        %v663 = vld [vmem:[#allocation8 + $0x78] sm:$0xff]
        %v664 = vld [vmem:[%s6] sm:$0x1]
        %v666 = vlaneseq
        %v667 = vshrl.u32 %v666, 7
        %v668 = vsub.s32 0, %v667
        %v669 = vrot.slane %v664, %v668
        %671 = vmatprep.subr.mxu0 0.0
        %672 = vmatpush1.msra.mxu0 %v663
        %673 = vmatprep.subr.mxu0 0.0
        %674 = vmatpush1.msra.mxu0 %v662
        %675 = vmatprep.subr.mxu0 0.0
        %676 = vmatpush1.msra.mxu0 %v661
        %677 = vmatprep.subr.mxu0 0.0
        %678 = vmatpush1.msra.mxu0 %v660
        %679 = vmatprep.subr.mxu0 0.0
        %680 = vmatpush1.msra.mxu0 %v659
        %681 = vmatprep.subr.mxu0 0.0
        %682 = vmatpush1.msra.mxu0 %v658
        %683 = vmatprep.subr.mxu0 0.0
        %684 = vmatpush1.msra.mxu0 %v657
        %685 = vmatprep.subr.mxu0 0.0
        %686 = vmatpush1.msra.mxu0 %v656
        %687 = vmatprep.subr.mxu0 0.0
        %688 = vmatpush1.msra.mxu0 %v655
        %689 = vmatprep.subr.mxu0 0.0
        %690 = vmatpush1.msra.mxu0 %v654
        %691 = vmatprep.subr.mxu0 0.0
        %692 = vmatpush1.msra.mxu0 %v653
        %693 = vmatprep.subr.mxu0 0.0
        %694 = vmatpush1.msra.mxu0 %v652
        %695 = vmatprep.subr.mxu0 0.0
        %696 = vmatpush1.msra.mxu0 %v651
        %697 = vmatprep.subr.mxu0 0.0
        %698 = vmatpush1.msra.mxu0 %v650
        %699 = vmatprep.subr.mxu0 0.0
        %700 = vmatpush1.msra.mxu0 %v649
        %701 = vmatprep.subr.mxu0 0.0
        %702 = vmatpush1.msra.mxu0 %v648
        %703 = vmatprep.subr.mxu0 0.0
        %704 = vmatpush2.msra.mxu0 0.0
        %705 = vmatprep.subr.mxu0 0.0
        %706 = vmatpush2.msra.mxu0 0.0
        %707 = vmatprep.subr.mxu0 0.0
        %708 = vmatpush2.msra.mxu0 0.0
        %709 = vmatprep.subr.mxu0 0.0
        %710 = vmatpush2.msra.mxu0 0.0
        %711 = vmatprep.subr.mxu0 0.0
        %712 = vmatpush2.msra.mxu0 0.0
        %713 = vmatprep.subr.mxu0 0.0
        %714 = vmatpush2.msra.mxu0 0.0
        %715 = vmatprep.subr.mxu0 0.0
        %716 = vmatpush2.msra.mxu0 0.0
        %717 = vmatprep.subr.mxu0 0.0
        %718 = vmatpush2.msra.mxu0 0.0
        %719 = vmatprep.subr.mxu0 0.0
        %720 = vmatpush2.msra.mxu0 0.0
        %721 = vmatprep.subr.mxu0 0.0
        %722 = vmatpush2.msra.mxu0 0.0
        %723 = vmatprep.subr.mxu0 0.0
        %724 = vmatpush2.msra.mxu0 0.0
        %725 = vmatprep.subr.mxu0 0.0
        %726 = vmatpush2.msra.mxu0 0.0
        %727 = vmatprep.subr.mxu0 0.0
        %728 = vmatpush2.msra.mxu0 0.0
        %729 = vmatprep.subr.mxu0 0.0
        %730 = vmatpush2.msra.mxu0 0.0
        %731 = vmatprep.subr.mxu0 0.0
        %732 = vmatpush2.msra.mxu0 0.0
        %733 = vmatprep.subr.mxu0 0.0
        %734 = vmatpush2.msra.mxu0 0.0
        %735 = vmatprep.mubr.f32.mxu0 0.0
        %736 = vmatmul.mubr.f32.gmra.mxu0 %v647
        %v737 = vpop.f32.mrf.mxu0
        %v738 = vadd.f32 %v669, %v737
        %v739 = vpop.f32.mrf.mxu0
        %740 = vdwg.mxu0
        %v741 = vadd.f32 %v551, %v738
        %s742 = scalar_lea.vmem [#allocation7], 128
        %v743 = vld [vmem:[%s742] sm:$0xff]
        %v744 = vld [vmem:[%s742 + $0x8] sm:$0xff]
        %v745 = vld [vmem:[%s742 + $0x10] sm:$0xff]
        %v746 = vld [vmem:[%s742 + $0x18] sm:$0xff]
        %v747 = vld [vmem:[%s742 + $0x20] sm:$0xff]
        %v748 = vld [vmem:[%s742 + $0x28] sm:$0xff]
        %v749 = vld [vmem:[%s742 + $0x30] sm:$0xff]
        %v750 = vld [vmem:[%s742 + $0x38] sm:$0xff]
        %v751 = vld [vmem:[%s742 + $0x40] sm:$0xff]
        %v752 = vld [vmem:[%s742 + $0x48] sm:$0xff]
        %v753 = vld [vmem:[%s742 + $0x50] sm:$0xff]
        %v754 = vld [vmem:[%s742 + $0x58] sm:$0xff]
        %v755 = vld [vmem:[%s742 + $0x60] sm:$0xff]
        %v756 = vld [vmem:[%s742 + $0x68] sm:$0xff]
        %v757 = vld [vmem:[%s742 + $0x70] sm:$0xff]
        %v758 = vld [vmem:[%s742 + $0x78] sm:$0xff]
        %s759 = scalar_lea.vmem %s4, 1
        %v760 = vld [vmem:[%s759] sm:$0x1]
        %v762 = vlaneseq
        %v763 = vshrl.u32 %v762, 7
        %v764 = vsub.s32 0, %v763
        %v765 = vrot.slane %v760, %v764
        %767 = vmatprep.subr.mxu0 0.0
        %768 = vmatpush1.msra.mxu0 %v758
        %769 = vmatprep.subr.mxu0 0.0
        %770 = vmatpush1.msra.mxu0 %v757
        %771 = vmatprep.subr.mxu0 0.0
        %772 = vmatpush1.msra.mxu0 %v756
        %773 = vmatprep.subr.mxu0 0.0
        %774 = vmatpush1.msra.mxu0 %v755
        %775 = vmatprep.subr.mxu0 0.0
        %776 = vmatpush1.msra.mxu0 %v754
        %777 = vmatprep.subr.mxu0 0.0
        %778 = vmatpush1.msra.mxu0 %v753
        %779 = vmatprep.subr.mxu0 0.0
        %780 = vmatpush1.msra.mxu0 %v752
        %781 = vmatprep.subr.mxu0 0.0
        %782 = vmatpush1.msra.mxu0 %v751
        %783 = vmatprep.subr.mxu0 0.0
        %784 = vmatpush1.msra.mxu0 %v750
        %785 = vmatprep.subr.mxu0 0.0
        %786 = vmatpush1.msra.mxu0 %v749
        %787 = vmatprep.subr.mxu0 0.0
        %788 = vmatpush1.msra.mxu0 %v748
        %789 = vmatprep.subr.mxu0 0.0
        %790 = vmatpush1.msra.mxu0 %v747
        %791 = vmatprep.subr.mxu0 0.0
        %792 = vmatpush1.msra.mxu0 %v746
        %793 = vmatprep.subr.mxu0 0.0
        %794 = vmatpush1.msra.mxu0 %v745
        %795 = vmatprep.subr.mxu0 0.0
        %796 = vmatpush1.msra.mxu0 %v744
        %797 = vmatprep.subr.mxu0 0.0
        %798 = vmatpush1.msra.mxu0 %v743
        %799 = vmatprep.subr.mxu0 0.0
        %800 = vmatpush2.msra.mxu0 0.0
        %801 = vmatprep.subr.mxu0 0.0
        %802 = vmatpush2.msra.mxu0 0.0
        %803 = vmatprep.subr.mxu0 0.0
        %804 = vmatpush2.msra.mxu0 0.0
        %805 = vmatprep.subr.mxu0 0.0
        %806 = vmatpush2.msra.mxu0 0.0
        %807 = vmatprep.subr.mxu0 0.0
        %808 = vmatpush2.msra.mxu0 0.0
        %809 = vmatprep.subr.mxu0 0.0
        %810 = vmatpush2.msra.mxu0 0.0
        %811 = vmatprep.subr.mxu0 0.0
        %812 = vmatpush2.msra.mxu0 0.0
        %813 = vmatprep.subr.mxu0 0.0
        %814 = vmatpush2.msra.mxu0 0.0
        %815 = vmatprep.subr.mxu0 0.0
        %816 = vmatpush2.msra.mxu0 0.0
        %817 = vmatprep.subr.mxu0 0.0
        %818 = vmatpush2.msra.mxu0 0.0
        %819 = vmatprep.subr.mxu0 0.0
        %820 = vmatpush2.msra.mxu0 0.0
        %821 = vmatprep.subr.mxu0 0.0
        %822 = vmatpush2.msra.mxu0 0.0
        %823 = vmatprep.subr.mxu0 0.0
        %824 = vmatpush2.msra.mxu0 0.0
        %825 = vmatprep.subr.mxu0 0.0
        %826 = vmatpush2.msra.mxu0 0.0
        %827 = vmatprep.subr.mxu0 0.0
        %828 = vmatpush2.msra.mxu0 0.0
        %829 = vmatprep.subr.mxu0 0.0
        %830 = vmatpush2.msra.mxu0 0.0
        %831 = vmatprep.mubr.f32.mxu0 0.0
        %832 = vmatmul.mubr.f32.gmra.mxu0 %v741
        %v833 = vpop.f32.mrf.mxu0
        %v834 = vadd.f32 %v765, %v833
        %v835 = vpop.f32.mrf.mxu0
        %836 = vdwg.mxu0
        %v837 = vmax.f32 %v834, 0.0
        %s838 = scalar_lea.vmem [#allocation8], 128
        %v839 = vld [vmem:[%s838] sm:$0xff]
        %v840 = vld [vmem:[%s838 + $0x8] sm:$0xff]
        %v841 = vld [vmem:[%s838 + $0x10] sm:$0xff]
        %v842 = vld [vmem:[%s838 + $0x18] sm:$0xff]
        %v843 = vld [vmem:[%s838 + $0x20] sm:$0xff]
        %v844 = vld [vmem:[%s838 + $0x28] sm:$0xff]
        %v845 = vld [vmem:[%s838 + $0x30] sm:$0xff]
        %v846 = vld [vmem:[%s838 + $0x38] sm:$0xff]
        %v847 = vld [vmem:[%s838 + $0x40] sm:$0xff]
        %v848 = vld [vmem:[%s838 + $0x48] sm:$0xff]
        %v849 = vld [vmem:[%s838 + $0x50] sm:$0xff]
        %v850 = vld [vmem:[%s838 + $0x58] sm:$0xff]
        %v851 = vld [vmem:[%s838 + $0x60] sm:$0xff]
        %v852 = vld [vmem:[%s838 + $0x68] sm:$0xff]
        %v853 = vld [vmem:[%s838 + $0x70] sm:$0xff]
        %v854 = vld [vmem:[%s838 + $0x78] sm:$0xff]
        %s855 = scalar_lea.vmem %s6, 1
        %v856 = vld [vmem:[%s855] sm:$0x1]
        %v858 = vlaneseq
        %v859 = vshrl.u32 %v858, 7
        %v860 = vsub.s32 0, %v859
        %v861 = vrot.slane %v856, %v860
        %863 = vmatprep.subr.mxu0 0.0
        %864 = vmatpush1.msra.mxu0 %v854
        %865 = vmatprep.subr.mxu0 0.0
        %866 = vmatpush1.msra.mxu0 %v853
        %867 = vmatprep.subr.mxu0 0.0
        %868 = vmatpush1.msra.mxu0 %v852
        %869 = vmatprep.subr.mxu0 0.0
        %870 = vmatpush1.msra.mxu0 %v851
        %871 = vmatprep.subr.mxu0 0.0
        %872 = vmatpush1.msra.mxu0 %v850
        %873 = vmatprep.subr.mxu0 0.0
        %874 = vmatpush1.msra.mxu0 %v849
        %875 = vmatprep.subr.mxu0 0.0
        %876 = vmatpush1.msra.mxu0 %v848
        %877 = vmatprep.subr.mxu0 0.0
        %878 = vmatpush1.msra.mxu0 %v847
        %879 = vmatprep.subr.mxu0 0.0
        %880 = vmatpush1.msra.mxu0 %v846
        %881 = vmatprep.subr.mxu0 0.0
        %882 = vmatpush1.msra.mxu0 %v845
        %883 = vmatprep.subr.mxu0 0.0
        %884 = vmatpush1.msra.mxu0 %v844
        %885 = vmatprep.subr.mxu0 0.0
        %886 = vmatpush1.msra.mxu0 %v843
        %887 = vmatprep.subr.mxu0 0.0
        %888 = vmatpush1.msra.mxu0 %v842
        %889 = vmatprep.subr.mxu0 0.0
        %890 = vmatpush1.msra.mxu0 %v841
        %891 = vmatprep.subr.mxu0 0.0
        %892 = vmatpush1.msra.mxu0 %v840
        %893 = vmatprep.subr.mxu0 0.0
        %894 = vmatpush1.msra.mxu0 %v839
        %895 = vmatprep.subr.mxu0 0.0
        %896 = vmatpush2.msra.mxu0 0.0
        %897 = vmatprep.subr.mxu0 0.0
        %898 = vmatpush2.msra.mxu0 0.0
        %899 = vmatprep.subr.mxu0 0.0
        %900 = vmatpush2.msra.mxu0 0.0
        %901 = vmatprep.subr.mxu0 0.0
        %902 = vmatpush2.msra.mxu0 0.0
        %903 = vmatprep.subr.mxu0 0.0
        %904 = vmatpush2.msra.mxu0 0.0
        %905 = vmatprep.subr.mxu0 0.0
        %906 = vmatpush2.msra.mxu0 0.0
        %907 = vmatprep.subr.mxu0 0.0
        %908 = vmatpush2.msra.mxu0 0.0
        %909 = vmatprep.subr.mxu0 0.0
        %910 = vmatpush2.msra.mxu0 0.0
        %911 = vmatprep.subr.mxu0 0.0
        %912 = vmatpush2.msra.mxu0 0.0
        %913 = vmatprep.subr.mxu0 0.0
        %914 = vmatpush2.msra.mxu0 0.0
        %915 = vmatprep.subr.mxu0 0.0
        %916 = vmatpush2.msra.mxu0 0.0
        %917 = vmatprep.subr.mxu0 0.0
        %918 = vmatpush2.msra.mxu0 0.0
        %919 = vmatprep.subr.mxu0 0.0
        %920 = vmatpush2.msra.mxu0 0.0
        %921 = vmatprep.subr.mxu0 0.0
        %922 = vmatpush2.msra.mxu0 0.0
        %923 = vmatprep.subr.mxu0 0.0
        %924 = vmatpush2.msra.mxu0 0.0
        %925 = vmatprep.subr.mxu0 0.0
        %926 = vmatpush2.msra.mxu0 0.0
        %927 = vmatprep.mubr.f32.mxu0 0.0
        %928 = vmatmul.mubr.f32.gmra.mxu0 %v837
        %v929 = vpop.f32.mrf.mxu0
        %v930 = vadd.f32 %v861, %v929
        %v931 = vpop.f32.mrf.mxu0
        %932 = vdwg.mxu0
        %v933 = vadd.f32 %v741, %v930
        %s934 = scalar_lea.vmem [#allocation7], 256
        %v935 = vld [vmem:[%s934] sm:$0xff]
        %v936 = vld [vmem:[%s934 + $0x8] sm:$0xff]
        %v937 = vld [vmem:[%s934 + $0x10] sm:$0xff]
        %v938 = vld [vmem:[%s934 + $0x18] sm:$0xff]
        %v939 = vld [vmem:[%s934 + $0x20] sm:$0xff]
        %v940 = vld [vmem:[%s934 + $0x28] sm:$0xff]
        %v941 = vld [vmem:[%s934 + $0x30] sm:$0xff]
        %v942 = vld [vmem:[%s934 + $0x38] sm:$0xff]
        %v943 = vld [vmem:[%s934 + $0x40] sm:$0xff]
        %v944 = vld [vmem:[%s934 + $0x48] sm:$0xff]
        %v945 = vld [vmem:[%s934 + $0x50] sm:$0xff]
        %v946 = vld [vmem:[%s934 + $0x58] sm:$0xff]
        %v947 = vld [vmem:[%s934 + $0x60] sm:$0xff]
        %v948 = vld [vmem:[%s934 + $0x68] sm:$0xff]
        %v949 = vld [vmem:[%s934 + $0x70] sm:$0xff]
        %v950 = vld [vmem:[%s934 + $0x78] sm:$0xff]
        %s951 = scalar_lea.vmem %s4, 2
        %v952 = vld [vmem:[%s951] sm:$0x1]
        %v954 = vlaneseq
        %v955 = vshrl.u32 %v954, 7
        %v956 = vsub.s32 0, %v955
        %v957 = vrot.slane %v952, %v956
        %959 = vmatprep.subr.mxu0 0.0
        %960 = vmatpush1.msra.mxu0 %v950
        %961 = vmatprep.subr.mxu0 0.0
        %962 = vmatpush1.msra.mxu0 %v949
        %963 = vmatprep.subr.mxu0 0.0
        %964 = vmatpush1.msra.mxu0 %v948
        %965 = vmatprep.subr.mxu0 0.0
        %966 = vmatpush1.msra.mxu0 %v947
        %967 = vmatprep.subr.mxu0 0.0
        %968 = vmatpush1.msra.mxu0 %v946
        %969 = vmatprep.subr.mxu0 0.0
        %970 = vmatpush1.msra.mxu0 %v945
        %971 = vmatprep.subr.mxu0 0.0
        %972 = vmatpush1.msra.mxu0 %v944
        %973 = vmatprep.subr.mxu0 0.0
        %974 = vmatpush1.msra.mxu0 %v943
        %975 = vmatprep.subr.mxu0 0.0
        %976 = vmatpush1.msra.mxu0 %v942
        %977 = vmatprep.subr.mxu0 0.0
        %978 = vmatpush1.msra.mxu0 %v941
        %979 = vmatprep.subr.mxu0 0.0
        %980 = vmatpush1.msra.mxu0 %v940
        %981 = vmatprep.subr.mxu0 0.0
        %982 = vmatpush1.msra.mxu0 %v939
        %983 = vmatprep.subr.mxu0 0.0
        %984 = vmatpush1.msra.mxu0 %v938
        %985 = vmatprep.subr.mxu0 0.0
        %986 = vmatpush1.msra.mxu0 %v937
        %987 = vmatprep.subr.mxu0 0.0
        %988 = vmatpush1.msra.mxu0 %v936
        %989 = vmatprep.subr.mxu0 0.0
        %990 = vmatpush1.msra.mxu0 %v935
        %991 = vmatprep.subr.mxu0 0.0
        %992 = vmatpush2.msra.mxu0 0.0
        %993 = vmatprep.subr.mxu0 0.0
        %994 = vmatpush2.msra.mxu0 0.0
        %995 = vmatprep.subr.mxu0 0.0
        %996 = vmatpush2.msra.mxu0 0.0
        %997 = vmatprep.subr.mxu0 0.0
        %998 = vmatpush2.msra.mxu0 0.0
        %999 = vmatprep.subr.mxu0 0.0
        %1000 = vmatpush2.msra.mxu0 0.0
        %1001 = vmatprep.subr.mxu0 0.0
        %1002 = vmatpush2.msra.mxu0 0.0
        %1003 = vmatprep.subr.mxu0 0.0
        %1004 = vmatpush2.msra.mxu0 0.0
        %1005 = vmatprep.subr.mxu0 0.0
        %1006 = vmatpush2.msra.mxu0 0.0
        %1007 = vmatprep.subr.mxu0 0.0
        %1008 = vmatpush2.msra.mxu0 0.0
        %1009 = vmatprep.subr.mxu0 0.0
        %1010 = vmatpush2.msra.mxu0 0.0
        %1011 = vmatprep.subr.mxu0 0.0
        %1012 = vmatpush2.msra.mxu0 0.0
        %1013 = vmatprep.subr.mxu0 0.0
        %1014 = vmatpush2.msra.mxu0 0.0
        %1015 = vmatprep.subr.mxu0 0.0
        %1016 = vmatpush2.msra.mxu0 0.0
        %1017 = vmatprep.subr.mxu0 0.0
        %1018 = vmatpush2.msra.mxu0 0.0
        %1019 = vmatprep.subr.mxu0 0.0
        %1020 = vmatpush2.msra.mxu0 0.0
        %1021 = vmatprep.subr.mxu0 0.0
        %1022 = vmatpush2.msra.mxu0 0.0
        %1023 = vmatprep.mubr.f32.mxu0 0.0
        %1024 = vmatmul.mubr.f32.gmra.mxu0 %v933
        %v1025 = vpop.f32.mrf.mxu0
        %v1026 = vadd.f32 %v957, %v1025
        %v1027 = vpop.f32.mrf.mxu0
        %1028 = vdwg.mxu0
        %v1029 = vmax.f32 %v1026, 0.0
        %s1030 = scalar_lea.vmem [#allocation8], 256
        %v1031 = vld [vmem:[%s1030] sm:$0xff]
        %v1032 = vld [vmem:[%s1030 + $0x8] sm:$0xff]
        %v1033 = vld [vmem:[%s1030 + $0x10] sm:$0xff]
        %v1034 = vld [vmem:[%s1030 + $0x18] sm:$0xff]
        %v1035 = vld [vmem:[%s1030 + $0x20] sm:$0xff]
        %v1036 = vld [vmem:[%s1030 + $0x28] sm:$0xff]
        %v1037 = vld [vmem:[%s1030 + $0x30] sm:$0xff]
        %v1038 = vld [vmem:[%s1030 + $0x38] sm:$0xff]
        %v1039 = vld [vmem:[%s1030 + $0x40] sm:$0xff]
        %v1040 = vld [vmem:[%s1030 + $0x48] sm:$0xff]
        %v1041 = vld [vmem:[%s1030 + $0x50] sm:$0xff]
        %v1042 = vld [vmem:[%s1030 + $0x58] sm:$0xff]
        %v1043 = vld [vmem:[%s1030 + $0x60] sm:$0xff]
        %v1044 = vld [vmem:[%s1030 + $0x68] sm:$0xff]
        %v1045 = vld [vmem:[%s1030 + $0x70] sm:$0xff]
        %v1046 = vld [vmem:[%s1030 + $0x78] sm:$0xff]
        %s1047 = scalar_lea.vmem %s6, 2
        %v1048 = vld [vmem:[%s1047] sm:$0x1]
        %v1050 = vlaneseq
        %v1051 = vshrl.u32 %v1050, 7
        %v1052 = vsub.s32 0, %v1051
        %v1053 = vrot.slane %v1048, %v1052
        %1055 = vmatprep.subr.mxu0 0.0
        %1056 = vmatpush1.msra.mxu0 %v1046
        %1057 = vmatprep.subr.mxu0 0.0
        %1058 = vmatpush1.msra.mxu0 %v1045
        %1059 = vmatprep.subr.mxu0 0.0
        %1060 = vmatpush1.msra.mxu0 %v1044
        %1061 = vmatprep.subr.mxu0 0.0
        %1062 = vmatpush1.msra.mxu0 %v1043
        %1063 = vmatprep.subr.mxu0 0.0
        %1064 = vmatpush1.msra.mxu0 %v1042
        %1065 = vmatprep.subr.mxu0 0.0
        %1066 = vmatpush1.msra.mxu0 %v1041
        %1067 = vmatprep.subr.mxu0 0.0
        %1068 = vmatpush1.msra.mxu0 %v1040
        %1069 = vmatprep.subr.mxu0 0.0
        %1070 = vmatpush1.msra.mxu0 %v1039
        %1071 = vmatprep.subr.mxu0 0.0
        %1072 = vmatpush1.msra.mxu0 %v1038
        %1073 = vmatprep.subr.mxu0 0.0
        %1074 = vmatpush1.msra.mxu0 %v1037
        %1075 = vmatprep.subr.mxu0 0.0
        %1076 = vmatpush1.msra.mxu0 %v1036
        %1077 = vmatprep.subr.mxu0 0.0
        %1078 = vmatpush1.msra.mxu0 %v1035
        %1079 = vmatprep.subr.mxu0 0.0
        %1080 = vmatpush1.msra.mxu0 %v1034
        %1081 = vmatprep.subr.mxu0 0.0
        %1082 = vmatpush1.msra.mxu0 %v1033
        %1083 = vmatprep.subr.mxu0 0.0
        %1084 = vmatpush1.msra.mxu0 %v1032
        %1085 = vmatprep.subr.mxu0 0.0
        %1086 = vmatpush1.msra.mxu0 %v1031
        %1087 = vmatprep.subr.mxu0 0.0
        %1088 = vmatpush2.msra.mxu0 0.0
        %1089 = vmatprep.subr.mxu0 0.0
        %1090 = vmatpush2.msra.mxu0 0.0
        %1091 = vmatprep.subr.mxu0 0.0
        %1092 = vmatpush2.msra.mxu0 0.0
        %1093 = vmatprep.subr.mxu0 0.0
        %1094 = vmatpush2.msra.mxu0 0.0
        %1095 = vmatprep.subr.mxu0 0.0
        %1096 = vmatpush2.msra.mxu0 0.0
        %1097 = vmatprep.subr.mxu0 0.0
        %1098 = vmatpush2.msra.mxu0 0.0
        %1099 = vmatprep.subr.mxu0 0.0
        %1100 = vmatpush2.msra.mxu0 0.0
        %1101 = vmatprep.subr.mxu0 0.0
        %1102 = vmatpush2.msra.mxu0 0.0
        %1103 = vmatprep.subr.mxu0 0.0
        %1104 = vmatpush2.msra.mxu0 0.0
        %1105 = vmatprep.subr.mxu0 0.0
        %1106 = vmatpush2.msra.mxu0 0.0
        %1107 = vmatprep.subr.mxu0 0.0
        %1108 = vmatpush2.msra.mxu0 0.0
        %1109 = vmatprep.subr.mxu0 0.0
        %1110 = vmatpush2.msra.mxu0 0.0
        %1111 = vmatprep.subr.mxu0 0.0
        %1112 = vmatpush2.msra.mxu0 0.0
        %1113 = vmatprep.subr.mxu0 0.0
        %1114 = vmatpush2.msra.mxu0 0.0
        %1115 = vmatprep.subr.mxu0 0.0
        %1116 = vmatpush2.msra.mxu0 0.0
        %1117 = vmatprep.subr.mxu0 0.0
        %1118 = vmatpush2.msra.mxu0 0.0
        %1119 = vmatprep.mubr.f32.mxu0 0.0
        %1120 = vmatmul.mubr.f32.gmra.mxu0 %v1029
        %v1121 = vpop.f32.mrf.mxu0
        %v1122 = vadd.f32 %v1053, %v1121
        %v1123 = vpop.f32.mrf.mxu0
        %1124 = vdwg.mxu0
        %v1125 = vadd.f32 %v933, %v1122
        %v1126 = vld [vmem:[%s7] sm:$0x1]
        %v1128 = vlaneseq
        %v1129 = vshrl.u32 %v1128, 7
        %v1130 = vsub.s32 0, %v1129
        %v1131 = vrot.slane %v1126, %v1130
        %v1133 = vmul.f32 %v1125, %v1131
        %v1134 = vld [vmem:[%s8] sm:$0x1]
        %v1136 = vlaneseq
        %v1137 = vshrl.u32 %v1136, 7
        %v1138 = vsub.s32 0, %v1137
        %v1139 = vrot.slane %v1134, %v1138
        %v1141 = vadd.f32 %v1133, %v1139
        %v1142 = vmax.f32 %v1141, 0.0
        %v1143 = vld [vmem:[#allocation10] sm:$0xff]
        %v1144 = vld [vmem:[#allocation10 + $0x8] sm:$0xff]
        %v1145 = vld [vmem:[#allocation10 + $0x10] sm:$0xff]
        %v1146 = vld [vmem:[#allocation10 + $0x18] sm:$0xff]
        %v1147 = vld [vmem:[#allocation10 + $0x20] sm:$0xff]
        %v1148 = vld [vmem:[#allocation10 + $0x28] sm:$0xff]
        %v1149 = vld [vmem:[#allocation10 + $0x30] sm:$0xff]
        %v1150 = vld [vmem:[#allocation10 + $0x38] sm:$0xff]
        %v1151 = vld [vmem:[#allocation10 + $0x40] sm:$0xff]
        %v1152 = vld [vmem:[#allocation10 + $0x48] sm:$0xff]
        %v1153 = vld [vmem:[#allocation10 + $0x50] sm:$0xff]
        %v1154 = vld [vmem:[#allocation10 + $0x58] sm:$0xff]
        %v1155 = vld [vmem:[#allocation10 + $0x60] sm:$0xff]
        %v1156 = vld [vmem:[#allocation10 + $0x68] sm:$0xff]
        %v1157 = vld [vmem:[#allocation10 + $0x70] sm:$0xff]
        %v1158 = vld [vmem:[#allocation10 + $0x78] sm:$0xff]
        %v1159 = vld [vmem:[%s10] sm:$0x1]
        %v1161 = vlaneseq
        %v1162 = vshrl.u32 %v1161, 7
        %v1163 = vsub.s32 0, %v1162
        %v1164 = vrot.slane %v1159, %v1163
        %1166 = vmatprep.subr.mxu0 0.0
        %1167 = vmatpush1.msra.mxu0 %v1158
        %1168 = vmatprep.subr.mxu0 0.0
        %1169 = vmatpush1.msra.mxu0 %v1157
        %1170 = vmatprep.subr.mxu0 0.0
        %1171 = vmatpush1.msra.mxu0 %v1156
        %1172 = vmatprep.subr.mxu0 0.0
        %1173 = vmatpush1.msra.mxu0 %v1155
        %1174 = vmatprep.subr.mxu0 0.0
        %1175 = vmatpush1.msra.mxu0 %v1154
        %1176 = vmatprep.subr.mxu0 0.0
        %1177 = vmatpush1.msra.mxu0 %v1153
        %1178 = vmatprep.subr.mxu0 0.0
        %1179 = vmatpush1.msra.mxu0 %v1152
        %1180 = vmatprep.subr.mxu0 0.0
        %1181 = vmatpush1.msra.mxu0 %v1151
        %1182 = vmatprep.subr.mxu0 0.0
        %1183 = vmatpush1.msra.mxu0 %v1150
        %1184 = vmatprep.subr.mxu0 0.0
        %1185 = vmatpush1.msra.mxu0 %v1149
        %1186 = vmatprep.subr.mxu0 0.0
        %1187 = vmatpush1.msra.mxu0 %v1148
        %1188 = vmatprep.subr.mxu0 0.0
        %1189 = vmatpush1.msra.mxu0 %v1147
        %1190 = vmatprep.subr.mxu0 0.0
        %1191 = vmatpush1.msra.mxu0 %v1146
        %1192 = vmatprep.subr.mxu0 0.0
        %1193 = vmatpush1.msra.mxu0 %v1145
        %1194 = vmatprep.subr.mxu0 0.0
        %1195 = vmatpush1.msra.mxu0 %v1144
        %1196 = vmatprep.subr.mxu0 0.0
        %1197 = vmatpush1.msra.mxu0 %v1143
        %1198 = vmatprep.subr.mxu0 0.0
        %1199 = vmatpush2.msra.mxu0 0.0
        %1200 = vmatprep.subr.mxu0 0.0
        %1201 = vmatpush2.msra.mxu0 0.0
        %1202 = vmatprep.subr.mxu0 0.0
        %1203 = vmatpush2.msra.mxu0 0.0
        %1204 = vmatprep.subr.mxu0 0.0
        %1205 = vmatpush2.msra.mxu0 0.0
        %1206 = vmatprep.subr.mxu0 0.0
        %1207 = vmatpush2.msra.mxu0 0.0
        %1208 = vmatprep.subr.mxu0 0.0
        %1209 = vmatpush2.msra.mxu0 0.0
        %1210 = vmatprep.subr.mxu0 0.0
        %1211 = vmatpush2.msra.mxu0 0.0
        %1212 = vmatprep.subr.mxu0 0.0
        %1213 = vmatpush2.msra.mxu0 0.0
        %1214 = vmatprep.subr.mxu0 0.0
        %1215 = vmatpush2.msra.mxu0 0.0
        %1216 = vmatprep.subr.mxu0 0.0
        %1217 = vmatpush2.msra.mxu0 0.0
        %1218 = vmatprep.subr.mxu0 0.0
        %1219 = vmatpush2.msra.mxu0 0.0
        %1220 = vmatprep.subr.mxu0 0.0
        %1221 = vmatpush2.msra.mxu0 0.0
        %1222 = vmatprep.subr.mxu0 0.0
        %1223 = vmatpush2.msra.mxu0 0.0
        %1224 = vmatprep.subr.mxu0 0.0
        %1225 = vmatpush2.msra.mxu0 0.0
        %1226 = vmatprep.subr.mxu0 0.0
        %1227 = vmatpush2.msra.mxu0 0.0
        %1228 = vmatprep.subr.mxu0 0.0
        %1229 = vmatpush2.msra.mxu0 0.0
        %1230 = vmatprep.mubr.f32.mxu0 0.0
        %1231 = vmatmul.mubr.f32.gmra.mxu0 %v1142
        %v1232 = vpop.f32.mrf.mxu0
        %v1233 = vadd.f32 %v1164, %v1232
        %v1234 = vpop.f32.mrf.mxu0
        %1235 = vdwg.mxu0
        %1236 = vst [vmem:[%s459] sm:$0xff] %v1233
        %s1237 = sand.u32 %s274, 1
        %s1238 = scalar_lea.sflag [#allocation4], %s1237
        %s1239 = sand.u32 %s274, 1
        %s1240 = smul.addr %s1239, 8
        %s1241 = scalar_lea.vmem [#allocation11], %s1240
        // Predicated region
        $region85: #{tpu_custom_call.1} parent=63 // pred_check
          %p1242 = pneg %p284
        $region86: #{tpu_custom_call.1} parent=63 // pred_check_branch
          %1244 = sbr.rel (%p1242) target = $region88
        $region87: #{tpu_custom_call.1} parent=63 // pred_region
          %s1246 = ssub.s32 128, 128
          %1247 = vsyncadd %s1238, %s1246
          %s1248 = smul.addr %s30, 128
          %s1249 = scalar_lea.hbm %s11, %s1248
          %s1251 = sshll.u32 %s1241, 4
          %s1252 = int_to_ptr.vmem [resolvable:$true] %s1251
          %1254 = dma.vmem_to_hbm [thread:$0]  %s1252, 128, %s1249, %s1238
        $region88: #{tpu_custom_call.1} parent=63 // pred_fallthru
          _
      $region64: #{tpu_custom_call.1} parent=5 // pred_fallthru
        _
      %p1255 = scmp.le.s32.totalorder 2, %s25
      // Predicated region
      $region89: #{tpu_custom_call.1} parent=5 // pred_check
        %p1256 = pneg %p1255
      $region90: #{tpu_custom_call.1} parent=5 // pred_check_branch
        %1258 = sbr.rel (%p1256) target = $region92
      $region91: #{tpu_custom_call.1} parent=5 // pred_region
        %s1259 = ssub.s32 %s25, 2
        // Predicated region
        $region93: #{tpu_custom_call.1} parent=91 // pred_check
          %p1260 = pneg %p290
        $region94: #{tpu_custom_call.1} parent=91 // pred_check_branch
          %1262 = sbr.rel (%p1260) target = $region96
        $region95: #{tpu_custom_call.1} parent=91 // pred_region
          %s1263 = sand.u32 %s275, 1
          %s1264 = scalar_lea.sflag [#allocation4], %s1263
          %s1265 = sand.u32 %s275, 1
          %s1266 = smul.addr %s1265, 8
          %s1267 = scalar_lea.vmem [#allocation11], %s1266
          %1268 = dma.done %s1264, 128
        $region96: #{tpu_custom_call.1} parent=91 // pred_fallthru
          _
      $region92: #{tpu_custom_call.1} parent=5 // pred_fallthru
        _
    $region6: #{tpu_custom_call.1} parent=1 // loop_footer
      %s29 = sadd.s32 1, %s25
    $region7: #{tpu_custom_call.1} parent=1 // loop_footer_branch
      %24 = sbr.rel target = $region3
    $region8: #{tpu_custom_call.1} parent=1 // loop_exit
      _
    %1269 = vsyncpa [#allocation3], 1
    %s1270 = scalar_lea.sflag [#allocation3], 1
    %1271 = vsyncpa %s1270, 1
    %1272 = vsyncpa [#allocation6], 1
    %1273 = vsyncpa [#allocation9], 1
    %1274 = vsyncpa [#allocation4], 1
    %s1275 = scalar_lea.sflag [#allocation4], 1
    %1276 = vsyncpa %s1275, 1

</llo_original>
